<compile_context>
chip_gen: v6e
topology: v6e:2x2x1
jax: 0.10.0
libtpu: 0.0.40
codegen_flags: <defaults>
</compile_context>

<pallas_src>
import jax
import jax.numpy as jnp
from jax import lax
from jax.experimental import pallas as pl
from jax.experimental.pallas import tpu as pltpu

EPS = 1e-5


def _bn_kernel(x_ref, g_ref, b_ref, o_ref):
    # x_ref / o_ref: (N, TC, HW) block.  g_ref / b_ref: full (C_pad, 1), resident.
    tile = x_ref.shape[1]
    off = pl.multiple_of(pl.program_id(0) * tile, 8)

    x = x_ref[...].astype(jnp.float32)
    inv_l = 1.0 / (x.shape[0] * x.shape[2])

    # Two-pass, per-channel batch statistics (biased variance = training mode).
    mean = jnp.sum(x, axis=(0, 2), keepdims=True) * inv_l        # (1, TC, 1)
    d = x - mean
    var = jnp.sum(d * d, axis=(0, 2), keepdims=True) * inv_l     # (1, TC, 1)
    inv = lax.rsqrt(var + EPS)

    g = g_ref[pl.ds(off, tile), :].reshape(1, tile, 1)
    b = b_ref[pl.ds(off, tile), :].reshape(1, tile, 1)
    o_ref[...] = (d * (g * inv) + b).astype(o_ref.dtype)


def _round_up(v, m):
    return ((v + m - 1) // m) * m


def batchnorm2d_pallas(x_nchw, gamma, beta, *, target_grid=4):
    N, C, H, W = x_nchw.shape
    HW = H * W
    dtype = x_nchw.dtype
    itemsize = jnp.dtype(dtype).itemsize

    # Free reshape (no transpose) for any N; reduction runs over axes (0, 2).
    x = x_nchw.reshape(N, C, HW)

    # Sublane granularity: 8 rows for 4-byte dtypes, 16 for 2-byte dtypes.
    sublane = 8 if itemsize >= 4 else 16

    # Channel tile: ragged grid (cdiv) so no divisibility of C is required and no
    # x padding is materialized; grid of 4 keeps v7x's two TensorCores balanced
    # and the DMA/compute pipeline full on v5e/v6e.
    tile = max(sublane, _round_up(pl.cdiv(C, target_grid), sublane))
    # Keep double-buffered in+out blocks comfortably inside scoped VMEM.
    lane_hw = _round_up(HW, 128)
    while tile > sublane and 4 * N * tile * lane_hw * itemsize > 8 * 2**20:
        tile = max(sublane, _round_up(pl.cdiv(tile, 2), sublane))
    grid = pl.cdiv(C, tile)
    c_pad = tile * grid

    # gamma / beta: padded to c_pad (tiny) and kept VMEM-resident (single DMA,
    # constant index_map) instead of a per-step sublane-strided slice.
    g = jnp.pad(gamma.astype(jnp.float32), (0, c_pad - C)).reshape(c_pad, 1)
    b = jnp.pad(beta.astype(jnp.float32), (0, c_pad - C)).reshape(c_pad, 1)

    cost = pl.CostEstimate(
        flops=5 * N * C * HW,
        transcendentals=C,
        bytes_accessed=2 * N * C * HW * itemsize + 2 * c_pad * 4,
    )

    y = pl.pallas_call(
        _bn_kernel,
        out_shape=jax.ShapeDtypeStruct((N, C, HW), dtype),
        grid_spec=pltpu.PrefetchScalarGridSpec(
            num_scalar_prefetch=0,
            grid=(grid,),
            in_specs=[
                pl.BlockSpec((N, tile, HW), lambda i: (0, i, 0)),
                pl.BlockSpec((c_pad, 1), lambda i: (0, 0)),
                pl.BlockSpec((c_pad, 1), lambda i: (0, 0)),
            ],
            out_specs=pl.BlockSpec((N, tile, HW), lambda i: (0, i, 0)),
        ),
        compiler_params=pltpu.CompilerParams(
            dimension_semantics=("parallel",),
        ),
        cost_estimate=cost,
    )(x, g, b)

    return y.reshape(N, C, H, W)


def batchnorm2d_ref(x_nchw, gamma, beta):
    x = x_nchw.astype(jnp.float32)
    mean = jnp.mean(x, axis=(0, 2, 3), keepdims=True)
    var = jnp.mean((x - mean) ** 2, axis=(0, 2, 3), keepdims=True)
    y = (x - mean) * jax.lax.rsqrt(var + EPS)
    return (y * gamma.reshape(1, -1, 1, 1) + beta.reshape(1, -1, 1, 1)).astype(
        x_nchw.dtype
    )


if __name__ == "__main__":
    key = jax.random.PRNGKey(0)
    kx, kg, kb = jax.random.split(key, 3)

    N, C, H, W = 1, 2904, 14, 14  # matches x317 = randn([1, 2904, 14, 14])
    x = jax.random.normal(kx, (N, C, H, W), dtype=jnp.float32)

    # Affine parameters (PyTorch default init is weight=1 / bias=0; perturb them
    # slightly to actually exercise the affine path).
    gamma = 1.0 + 0.1 * jax.random.normal(kg, (C,), dtype=jnp.float32)
    beta = 0.1 * jax.random.normal(kb, (C,), dtype=jnp.float32)

    y = jax.block_until_ready(batchnorm2d_pallas(x, gamma, beta))
    y_ref = batchnorm2d_ref(x, gamma, beta)

    assert y.shape == (N, C, H, W)
    assert jnp.max(jnp.abs(y - y_ref)) < 1e-4

    print("KERNEL_OK")
</pallas_src>

<mosaic_0001>
module attributes {stable_mosaic.version = 11 : i64} {
  func.func @_bn_kernel(%arg0: i32, %arg1: memref<1x728x196xf32, #tpu.memory_space<vmem>>, %arg2: memref<2912x1xf32, #tpu.memory_space<vmem>>, %arg3: memref<2912x1xf32, #tpu.memory_space<vmem>>, %arg4: memref<1x728x196xf32, #tpu.memory_space<vmem>>) attributes {dimension_semantics = [#tpu.dimension_semantics<parallel>], iteration_bounds = array<i64: 4>, scalar_prefetch = 0 : i64, scratch_operands = 0 : i64, tpu.core_type = #tpu.core_type<tc>, window_params = [{transform_indices = @transform_0, window_bounds = array<i64: 1, 728, 196>}, {pipeline_mode = #tpu.pipeline_mode<synchronous>, transform_indices = @transform_1, window_bounds = array<i64: 2912, 1>}, {pipeline_mode = #tpu.pipeline_mode<synchronous>, transform_indices = @transform_2, window_bounds = array<i64: 2912, 1>}, {transform_indices = @transform_3, window_bounds = array<i64: 1, 728, 196>}]} {
    %c728_i32 = arith.constant 728 : i32
    %0 = arith.muli %arg0, %c728_i32 : i32
    %1 = tpu.assume_multiple %0, 8 : i32
    %c0 = arith.constant 0 : index
    %c0_0 = arith.constant 0 : index
    %c0_1 = arith.constant 0 : index
    %2 = vector.load %arg1[%c0, %c0_0, %c0_1] : memref<1x728x196xf32, #tpu.memory_space<vmem>>, vector<1x728x196xf32>
    %cst = arith.constant dense<0.000000e+00> : vector<728xf32>
    %3 = vector.multi_reduction <add>, %2, %cst [0, 2] : vector<1x728x196xf32> to vector<728xf32>
    %4 = vector.shape_cast %3 : vector<728xf32> to vector<1x728x1xf32>
    %cst_2 = arith.constant 0.00510204071 : f32
    %5 = vector.broadcast %cst_2 : f32 to vector<1x728x1xf32>
    %6 = arith.mulf %4, %5 : vector<1x728x1xf32>
    %7 = vector.broadcast %6 : vector<1x728x1xf32> to vector<1x728x196xf32>
    %8 = arith.subf %2, %7 : vector<1x728x196xf32>
    %9 = arith.mulf %8, %8 : vector<1x728x196xf32>
    %cst_3 = arith.constant dense<0.000000e+00> : vector<728xf32>
    %10 = vector.multi_reduction <add>, %9, %cst_3 [0, 2] : vector<1x728x196xf32> to vector<728xf32>
    %11 = vector.shape_cast %10 : vector<728xf32> to vector<1x728x1xf32>
    %cst_4 = arith.constant 0.00510204071 : f32
    %12 = vector.broadcast %cst_4 : f32 to vector<1x728x1xf32>
    %13 = arith.mulf %11, %12 : vector<1x728x1xf32>
    %cst_5 = arith.constant 9.99999974E-6 : f32
    %14 = vector.broadcast %cst_5 : f32 to vector<1x728x1xf32>
    %15 = arith.addf %13, %14 : vector<1x728x1xf32>
    %16 = math.rsqrt %15 : vector<1x728x1xf32>
    %17 = arith.index_cast %1 : i32 to index
    %c0_6 = arith.constant 0 : index
    %18 = vector.load %arg2[%17, %c0_6] : memref<2912x1xf32, #tpu.memory_space<vmem>>, vector<728x1xf32>
    %19 = vector.shape_cast %18 : vector<728x1xf32> to vector<1x728x1xf32>
    %20 = arith.index_cast %1 : i32 to index
    %c0_7 = arith.constant 0 : index
    %21 = vector.load %arg3[%20, %c0_7] : memref<2912x1xf32, #tpu.memory_space<vmem>>, vector<728x1xf32>
    %22 = vector.shape_cast %21 : vector<728x1xf32> to vector<1x728x1xf32>
    %23 = arith.mulf %19, %16 : vector<1x728x1xf32>
    %24 = vector.broadcast %23 : vector<1x728x1xf32> to vector<1x728x196xf32>
    %25 = arith.mulf %8, %24 : vector<1x728x196xf32>
    %26 = vector.broadcast %22 : vector<1x728x1xf32> to vector<1x728x196xf32>
    %27 = arith.addf %25, %26 : vector<1x728x196xf32>
    %c0_8 = arith.constant 0 : index
    %c0_9 = arith.constant 0 : index
    %c0_10 = arith.constant 0 : index
    %28 = vector.load %arg4[%c0_8, %c0_9, %c0_10] : memref<1x728x196xf32, #tpu.memory_space<vmem>>, vector<1x728x196xf32>
    tpu.vector_store %arg4[%c0_8, %c0_9, %c0_10], %27 {strides = array<i32>} : memref<1x728x196xf32, #tpu.memory_space<vmem>>, vector<1x728x196xf32>,
    return
  }
  func.func @transform_0(%arg0: i32) -> (i32, i32, i32) {
    %c0_i32 = arith.constant 0 : i32
    %c0_i32_0 = arith.constant 0 : i32
    %c0_i32_1 = arith.constant 0 : i32
    return %c0_i32, %arg0, %c0_i32_0 : i32, i32, i32
  }
  func.func @transform_1(%arg0: i32) -> (i32, i32) {
    %c0_i32 = arith.constant 0 : i32
    %c0_i32_0 = arith.constant 0 : i32
    %c0_i32_1 = arith.constant 0 : i32
    return %c0_i32, %c0_i32_0 : i32, i32
  }
  func.func @transform_2(%arg0: i32) -> (i32, i32) {
    %c0_i32 = arith.constant 0 : i32
    %c0_i32_0 = arith.constant 0 : i32
    %c0_i32_1 = arith.constant 0 : i32
    return %c0_i32, %c0_i32_0 : i32, i32
  }
  func.func @transform_3(%arg0: i32) -> (i32, i32, i32) {
    %c0_i32 = arith.constant 0 : i32
    %c0_i32_0 = arith.constant 0 : i32
    %c0_i32_1 = arith.constant 0 : i32
    return %c0_i32, %arg0, %c0_i32_0 : i32, i32, i32
  }
}

</mosaic_0001>

<llo_original>
// kernel: tpu_custom_call.1
$region0: #{tpu_custom_call.1}
  #allocation0 [shape = 'u32[]', space=smem, size = 0x4, offset = 0x4, fixed_abs, tag = 'smem constant byte address 0x4 - core index']
  #allocation1 [shape = 'u32[144,128]{1,0:T(1,128)}', space=vmem, size = 0x12000, scoped, tag = 'internal scratch']
  %s0 = inlined_call_operand.vmem [shape: f32[1,2904,196], index: 0, kind: input, shape index: {}]
  %s1 = inlined_call_operand.vmem [shape: f32[2912,1], index: 1, kind: input, shape index: {}]
  %s2 = inlined_call_operand.vmem [shape: f32[2912,1], index: 2, kind: input, shape index: {}]
  %s3 = inlined_call_operand.vmem [shape: f32[1,2904,196], index: 3, kind: output, shape index: {}]
  %s4 = sld [smem:[#allocation0]]
  $region71: #{tpu_custom_call.1} parent=0
    _
  %s6 = ssub.s32 1, %s4
  %s7 = scalar_select 0, %s6, %s4
  $region1: #{tpu_custom_call.1} parent=0
    #allocation2 [shape = 'u8[1490944]{0}', space=vmem, size = 0x16c000, scoped, tag = 'output window, operand 0']
    loop: start=0, step=1, limit=6
    $region2: #{tpu_custom_call.1} parent=1 // loop_pre_header
      _
    $region3: #{tpu_custom_call.1} parent=1 // loop_header
      %s9 = sphi 0, %s13
      %p10 = scmp.ge.s32.totalorder %s9, 6
      %s19 = sphi 0, %s21
      %s22 = sphi 0, %s19
      %s23 = sphi 0, %s22
      %s39 = sphi 0, %s23
      %s43 = sphi 0, %s43
      %s45 = sphi 0, %s43
      %s46 = sphi 0, %s45
      %s60 = sphi 0, %s46
      %s64 = sphi 0, %s64
      %s66 = sphi 0, %s64
      %s67 = sphi 0, %s66
      %s81 = sphi 0, %s67
      %s87 = sphi 0, %s89
      %s90 = sphi 0, %s87
      %s91 = sphi 0, %s90
      %s107 = sphi 0, %s91
    $region4: #{tpu_custom_call.1} parent=1 // loop_header_branch
      %12 = sbr.rel (%p10) target = $region8
    $region5: #{tpu_custom_call.1} parent=1 // loop_body
      %s14 = ssub.s32 %s9, 1
      %s15 = ssub.s32 %s9, 2
      %s16 = sadd.s32 %s9, 1
      %s17 = ssub.s32 %s9, %s16
      %p18 = scmp.eq.s32.totalorder %s17, 0
      %s20 = sadd.s32 %s19, 1
      %s21 = scalar_select %p18, %s19, %s20
      %p24 = pneg %p18
      %p25 = scmp.eq.s32.totalorder %s9, 3
      %p26 = por %p24, %p25
      %p27 = scmp.ne.s32.totalorder %s19, %s22
      %p28 = scmp.eq.s32.totalorder %s9, 0
      %p29 = por %p27, %p28
      %p30 = scmp.ne.s32.totalorder %s19, %s22
      %p31 = scmp.eq.s32.totalorder %s14, 3
      %p32 = por %p30, %p31
      %p33 = scmp.ne.s32.totalorder %s22, %s23
      %p34 = scmp.eq.s32.totalorder %s14, 0
      %p35 = por %p33, %p34
      %p36 = scmp.ne.s32.totalorder %s22, %s23
      %p37 = scmp.eq.s32.totalorder %s15, 3
      %p38 = por %p36, %p37
      %p40 = scmp.ne.s32.totalorder %s23, %s39
      %p41 = scmp.eq.s32.totalorder %s15, 0
      %p42 = por %p40, %p41
      %s44 = sadd.s32 %s43, 1
      %p47 = scmp.eq.s32.totalorder %s9, 3
      %p48 = scmp.ne.s32.totalorder %s43, %s45
      %p49 = scmp.eq.s32.totalorder %s9, 0
      %p50 = por %p48, %p49
      %p51 = scmp.ne.s32.totalorder %s43, %s45
      %p52 = scmp.eq.s32.totalorder %s14, 3
      %p53 = por %p51, %p52
      %p54 = scmp.ne.s32.totalorder %s45, %s46
      %p55 = scmp.eq.s32.totalorder %s14, 0
      %p56 = por %p54, %p55
      %p57 = scmp.ne.s32.totalorder %s45, %s46
      %p58 = scmp.eq.s32.totalorder %s15, 3
      %p59 = por %p57, %p58
      %p61 = scmp.ne.s32.totalorder %s46, %s60
      %p62 = scmp.eq.s32.totalorder %s15, 0
      %p63 = por %p61, %p62
      %s65 = sadd.s32 %s64, 1
      %p68 = scmp.eq.s32.totalorder %s9, 3
      %p69 = scmp.ne.s32.totalorder %s64, %s66
      %p70 = scmp.eq.s32.totalorder %s9, 0
      %p71 = por %p69, %p70
      %p72 = scmp.ne.s32.totalorder %s64, %s66
      %p73 = scmp.eq.s32.totalorder %s14, 3
      %p74 = por %p72, %p73
      %p75 = scmp.ne.s32.totalorder %s66, %s67
      %p76 = scmp.eq.s32.totalorder %s14, 0
      %p77 = por %p75, %p76
      %p78 = scmp.ne.s32.totalorder %s66, %s67
      %p79 = scmp.eq.s32.totalorder %s15, 3
      %p80 = por %p78, %p79
      %p82 = scmp.ne.s32.totalorder %s67, %s81
      %p83 = scmp.eq.s32.totalorder %s15, 0
      %p84 = por %p82, %p83
      %s85 = ssub.s32 %s9, %s16
      %p86 = scmp.eq.s32.totalorder %s85, 0
      %s88 = sadd.s32 %s87, 1
      %s89 = scalar_select %p86, %s87, %s88
      %p92 = pneg %p86
      %p93 = scmp.eq.s32.totalorder %s9, 3
      %p94 = por %p92, %p93
      %p95 = scmp.ne.s32.totalorder %s87, %s90
      %p96 = scmp.eq.s32.totalorder %s9, 0
      %p97 = por %p95, %p96
      %p98 = scmp.ne.s32.totalorder %s87, %s90
      %p99 = scmp.eq.s32.totalorder %s14, 3
      %p100 = por %p98, %p99
      %p101 = scmp.ne.s32.totalorder %s90, %s91
      %p102 = scmp.eq.s32.totalorder %s14, 0
      %p103 = por %p101, %p102
      %p104 = scmp.ne.s32.totalorder %s90, %s91
      %p105 = scmp.eq.s32.totalorder %s15, 3
      %p106 = por %p104, %p105
      %p108 = scmp.ne.s32.totalorder %s91, %s107
      %p109 = scmp.eq.s32.totalorder %s15, 0
      %p110 = por %p108, %p109
      %p111 = scmp.le.s32.totalorder 1, %s9
      %p112 = scmp.lt.s32.totalorder %s9, 5
      %p113 = pnand %p111, %p112
      %p114 = pneg %p113
      // Predicated region
      $region9: #{tpu_custom_call.1} parent=5 // pred_check
        _
      $region10: #{tpu_custom_call.1} parent=5 // pred_check_branch
        %116 = sbr.rel (%p113) target = $region12
      $region11: #{tpu_custom_call.1} parent=5 // pred_region
        %s117 = ssub.s32 %s9, 1
        // Predicated region
        $region13: #{tpu_custom_call.1} parent=11 // pred_check
          %p118 = pneg %p56
        $region14: #{tpu_custom_call.1} parent=11 // pred_check_branch
          %120 = sbr.rel (%p118) target = $region16
        $region15: #{tpu_custom_call.1} parent=11 // pred_region
          _
        $region16: #{tpu_custom_call.1} parent=11 // pred_fallthru
          _
        // Predicated region
        $region17: #{tpu_custom_call.1} parent=11 // pred_check
          %p121 = pneg %p77
        $region18: #{tpu_custom_call.1} parent=11 // pred_check_branch
          %123 = sbr.rel (%p121) target = $region20
        $region19: #{tpu_custom_call.1} parent=11 // pred_region
          _
        $region20: #{tpu_custom_call.1} parent=11 // pred_fallthru
          _
      $region12: #{tpu_custom_call.1} parent=5 // pred_fallthru
        _
      %p124 = scmp.lt.s32.totalorder %s9, 4
      // Predicated region
      $region21: #{tpu_custom_call.1} parent=5 // pred_check
        %p125 = pneg %p124
      $region22: #{tpu_custom_call.1} parent=5 // pred_check_branch
        %127 = sbr.rel (%p125) target = $region24
      $region23: #{tpu_custom_call.1} parent=5 // pred_region
        // Predicated region
        $region25: #{tpu_custom_call.1} parent=23 // pred_check
          %p128 = pneg %p29
        $region26: #{tpu_custom_call.1} parent=23 // pred_check_branch
          %130 = sbr.rel (%p128) target = $region28
        $region27: #{tpu_custom_call.1} parent=23 // pred_region
          %s131 = smul.u32 91, %s9
          %s132 = ssub.s32 363, %s131
          %p133 = scmp.lt.s32.totalorder %s132, 91
          %s134 = scalar_select %p133, %s132, 91
          %s135 = smul.u32 128, %s134
          %s136 = smul.u32 %s135, 2
          %p137 = scmp.lt.s32.totalorder %s131, 362
          %s138 = scalar_select %p137, %s131, 362
          %s139 = smul.addr %s138, 2
          %s140 = smul.addr %s139, 8
          %s141 = scalar_lea.vmem %s0, %s140
          %s142 = smul.u32 91, %s9
          %s143 = ssub.s32 363, %s142
          %p144 = scmp.lt.s32.totalorder %s143, 91
          %s145 = scalar_select %p144, %s143, 91
          %s146 = smul.u32 128, %s145
          %s147 = smul.u32 %s146, 2
        $region28: #{tpu_custom_call.1} parent=23 // pred_fallthru
          _
      $region24: #{tpu_custom_call.1} parent=5 // pred_fallthru
        _
      %p148 = scmp.le.s32.totalorder 1, %s9
      %p149 = scmp.lt.s32.totalorder %s9, 5
      %p150 = pnand %p148, %p149
      %p151 = pneg %p150
      // Predicated region
      $region29: #{tpu_custom_call.1} parent=5 // pred_check
        _
      $region30: #{tpu_custom_call.1} parent=5 // pred_check_branch
        %153 = sbr.rel (%p150) target = $region32
      $region31: #{tpu_custom_call.1} parent=5 // pred_region
        %s154 = ssub.s32 %s9, 1
        %s155 = smul.u32 91, %s14
        %s156 = ssub.s32 363, %s155
        %p157 = scmp.lt.s32.totalorder %s156, 91
        %s158 = scalar_select %p157, %s156, 91
        %s159 = smul.u32 128, %s158
        %s160 = smul.u32 %s159, 2
        %p161 = scmp.lt.s32.totalorder %s155, 362
        %s162 = scalar_select %p161, %s155, 362
        %s163 = smul.addr %s162, 2
        %s164 = smul.addr %s163, 8
        %s165 = scalar_lea.vmem %s0, %s164
        %p166 = pneg %p35
        %p167 = pneg %p32
        %p168 = pneg %p56
        %p169 = pneg %p53
        %p170 = pneg %p77
        %p171 = pneg %p74
        %p172 = pneg %p103
        %p173 = pneg %p100
        %s174 = sand.u32 %s90, 1
        %s175 = sand.u32 %s90, 1
        %s176 = smul.addr %s175, 1456
        %s177 = scalar_lea.vmem [#allocation2], %s176
        %s178 = smul.u32 91, %s14
        %s179 = ssub.s32 363, %s178
        %p180 = scmp.lt.s32.totalorder %s179, 91
        %s181 = scalar_select %p180, %s179, 91
        %s182 = smul.u32 128, %s181
        %s183 = smul.u32 %s182, 2
        %p184 = scmp.lt.s32.totalorder %s178, 362
        %s185 = scalar_select %p184, %s178, 362
        %s186 = smul.addr %s185, 2
        %s187 = smul.addr %s186, 8
        %s188 = scalar_lea.vmem %s0, %s187
        %s189 = smul.u32 91, %s14
        %s190 = ssub.s32 363, %s189
        %p191 = scmp.lt.s32.totalorder %s190, 91
        %s192 = scalar_select %p191, %s190, 91
        %s193 = smul.u32 128, %s192
        %s194 = smul.u32 %s193, 2
        %s195 = smul.u32 91, %s14
        %s196 = ssub.s32 363, %s195
        %p197 = scmp.lt.s32.totalorder %s196, 91
        %s198 = scalar_select %p197, %s196, 91
        %s199 = smul.u32 128, %s198
        %s200 = smul.u32 %s199, 2
        %s201 = smul.u32 %s14, 728
        %v202 = vld [vmem:[%s188] sm:$0xff]
        %v203 = vld [vmem:[%s188 + $0x8] sm:$0xff]
        %v204 = vld [vmem:[%s188 + $0x10] sm:$0xff]
        %v205 = vld [vmem:[%s188 + $0x18] sm:$0xff]
        %v206 = vld [vmem:[%s188 + $0x20] sm:$0xff]
        %v207 = vld [vmem:[%s188 + $0x28] sm:$0xff]
        %v208 = vld [vmem:[%s188 + $0x30] sm:$0xff]
        %v209 = vld [vmem:[%s188 + $0x38] sm:$0xff]
        %v210 = vld [vmem:[%s188 + $0x40] sm:$0xff]
        %v211 = vld [vmem:[%s188 + $0x48] sm:$0xff]
        %v212 = vld [vmem:[%s188 + $0x50] sm:$0xff]
        %v213 = vld [vmem:[%s188 + $0x58] sm:$0xff]
        %v214 = vld [vmem:[%s188 + $0x60] sm:$0xff]
        %v215 = vld [vmem:[%s188 + $0x68] sm:$0xff]
        %v216 = vld [vmem:[%s188 + $0x70] sm:$0xff]
        %v217 = vld [vmem:[%s188 + $0x78] sm:$0xff]
        %v218 = vld [vmem:[%s188 + $0x80] sm:$0xff]
        %v219 = vld [vmem:[%s188 + $0x88] sm:$0xff]
        %v220 = vld [vmem:[%s188 + $0x90] sm:$0xff]
        %v221 = vld [vmem:[%s188 + $0x98] sm:$0xff]
        %v222 = vld [vmem:[%s188 + $0xa0] sm:$0xff]
        %v223 = vld [vmem:[%s188 + $0xa8] sm:$0xff]
        %v224 = vld [vmem:[%s188 + $0xb0] sm:$0xff]
        %v225 = vld [vmem:[%s188 + $0xb8] sm:$0xff]
        %v226 = vld [vmem:[%s188 + $0xc0] sm:$0xff]
        %v227 = vld [vmem:[%s188 + $0xc8] sm:$0xff]
        %v228 = vld [vmem:[%s188 + $0xd0] sm:$0xff]
        %v229 = vld [vmem:[%s188 + $0xd8] sm:$0xff]
        %v230 = vld [vmem:[%s188 + $0xe0] sm:$0xff]
        %v231 = vld [vmem:[%s188 + $0xe8] sm:$0xff]
        %v232 = vld [vmem:[%s188 + $0xf0] sm:$0xff]
        %v233 = vld [vmem:[%s188 + $0xf8] sm:$0xff]
        %v234 = vld [vmem:[%s188 + $0x100] sm:$0xff]
        %v235 = vld [vmem:[%s188 + $0x108] sm:$0xff]
        %v236 = vld [vmem:[%s188 + $0x110] sm:$0xff]
        %v237 = vld [vmem:[%s188 + $0x118] sm:$0xff]
        %v238 = vld [vmem:[%s188 + $0x120] sm:$0xff]
        %v239 = vld [vmem:[%s188 + $0x128] sm:$0xff]
        %v240 = vld [vmem:[%s188 + $0x130] sm:$0xff]
        %v241 = vld [vmem:[%s188 + $0x138] sm:$0xff]
        %v242 = vld [vmem:[%s188 + $0x140] sm:$0xff]
        %v243 = vld [vmem:[%s188 + $0x148] sm:$0xff]
        %v244 = vld [vmem:[%s188 + $0x150] sm:$0xff]
        %v245 = vld [vmem:[%s188 + $0x158] sm:$0xff]
        %v246 = vld [vmem:[%s188 + $0x160] sm:$0xff]
        %v247 = vld [vmem:[%s188 + $0x168] sm:$0xff]
        %v248 = vld [vmem:[%s188 + $0x170] sm:$0xff]
        %v249 = vld [vmem:[%s188 + $0x178] sm:$0xff]
        %v250 = vld [vmem:[%s188 + $0x180] sm:$0xff]
        %v251 = vld [vmem:[%s188 + $0x188] sm:$0xff]
        %v252 = vld [vmem:[%s188 + $0x190] sm:$0xff]
        %v253 = vld [vmem:[%s188 + $0x198] sm:$0xff]
        %v254 = vld [vmem:[%s188 + $0x1a0] sm:$0xff]
        %v255 = vld [vmem:[%s188 + $0x1a8] sm:$0xff]
        %v256 = vld [vmem:[%s188 + $0x1b0] sm:$0xff]
        %v257 = vld [vmem:[%s188 + $0x1b8] sm:$0xff]
        %v258 = vld [vmem:[%s188 + $0x1c0] sm:$0xff]
        %v259 = vld [vmem:[%s188 + $0x1c8] sm:$0xff]
        %v260 = vld [vmem:[%s188 + $0x1d0] sm:$0xff]
        %v261 = vld [vmem:[%s188 + $0x1d8] sm:$0xff]
        %v262 = vld [vmem:[%s188 + $0x1e0] sm:$0xff]
        %v263 = vld [vmem:[%s188 + $0x1e8] sm:$0xff]
        %v264 = vld [vmem:[%s188 + $0x1f0] sm:$0xff]
        %v265 = vld [vmem:[%s188 + $0x1f8] sm:$0xff]
        %v266 = vld [vmem:[%s188 + $0x200] sm:$0xff]
        %v267 = vld [vmem:[%s188 + $0x208] sm:$0xff]
        %v268 = vld [vmem:[%s188 + $0x210] sm:$0xff]
        %v269 = vld [vmem:[%s188 + $0x218] sm:$0xff]
        %v270 = vld [vmem:[%s188 + $0x220] sm:$0xff]
        %v271 = vld [vmem:[%s188 + $0x228] sm:$0xff]
        %v272 = vld [vmem:[%s188 + $0x230] sm:$0xff]
        %v273 = vld [vmem:[%s188 + $0x238] sm:$0xff]
        %v274 = vld [vmem:[%s188 + $0x240] sm:$0xff]
        %v275 = vld [vmem:[%s188 + $0x248] sm:$0xff]
        %v276 = vld [vmem:[%s188 + $0x250] sm:$0xff]
        %v277 = vld [vmem:[%s188 + $0x258] sm:$0xff]
        %v278 = vld [vmem:[%s188 + $0x260] sm:$0xff]
        %v279 = vld [vmem:[%s188 + $0x268] sm:$0xff]
        %v280 = vld [vmem:[%s188 + $0x270] sm:$0xff]
        %v281 = vld [vmem:[%s188 + $0x278] sm:$0xff]
        %v282 = vld [vmem:[%s188 + $0x280] sm:$0xff]
        %v283 = vld [vmem:[%s188 + $0x288] sm:$0xff]
        %v284 = vld [vmem:[%s188 + $0x290] sm:$0xff]
        %v285 = vld [vmem:[%s188 + $0x298] sm:$0xff]
        %v286 = vld [vmem:[%s188 + $0x2a0] sm:$0xff]
        %v287 = vld [vmem:[%s188 + $0x2a8] sm:$0xff]
        %v288 = vld [vmem:[%s188 + $0x2b0] sm:$0xff]
        %v289 = vld [vmem:[%s188 + $0x2b8] sm:$0xff]
        %v290 = vld [vmem:[%s188 + $0x2c0] sm:$0xff]
        %v291 = vld [vmem:[%s188 + $0x2c8] sm:$0xff]
        %v292 = vld [vmem:[%s188 + $0x2d0] sm:$0xff]
        %v293 = vld [vmem:[%s188 + $0x2d8] sm:$0xff]
        %v294 = vld [vmem:[%s188 + $0x2e0] sm:$0xff]
        %v295 = vld [vmem:[%s188 + $0x2e8] sm:$0xff]
        %v296 = vld [vmem:[%s188 + $0x2f0] sm:$0xff]
        %v297 = vld [vmem:[%s188 + $0x2f8] sm:$0xff]
        %v298 = vld [vmem:[%s188 + $0x300] sm:$0xff]
        %v299 = vld [vmem:[%s188 + $0x308] sm:$0xff]
        %v300 = vld [vmem:[%s188 + $0x310] sm:$0xff]
        %v301 = vld [vmem:[%s188 + $0x318] sm:$0xff]
        %v302 = vld [vmem:[%s188 + $0x320] sm:$0xff]
        %v303 = vld [vmem:[%s188 + $0x328] sm:$0xff]
        %v304 = vld [vmem:[%s188 + $0x330] sm:$0xff]
        %v305 = vld [vmem:[%s188 + $0x338] sm:$0xff]
        %v306 = vld [vmem:[%s188 + $0x340] sm:$0xff]
        %v307 = vld [vmem:[%s188 + $0x348] sm:$0xff]
        %v308 = vld [vmem:[%s188 + $0x350] sm:$0xff]
        %v309 = vld [vmem:[%s188 + $0x358] sm:$0xff]
        %v310 = vld [vmem:[%s188 + $0x360] sm:$0xff]
        %v311 = vld [vmem:[%s188 + $0x368] sm:$0xff]
        %v312 = vld [vmem:[%s188 + $0x370] sm:$0xff]
        %v313 = vld [vmem:[%s188 + $0x378] sm:$0xff]
        %v314 = vld [vmem:[%s188 + $0x380] sm:$0xff]
        %v315 = vld [vmem:[%s188 + $0x388] sm:$0xff]
        %v316 = vld [vmem:[%s188 + $0x390] sm:$0xff]
        %v317 = vld [vmem:[%s188 + $0x398] sm:$0xff]
        %v318 = vld [vmem:[%s188 + $0x3a0] sm:$0xff]
        %v319 = vld [vmem:[%s188 + $0x3a8] sm:$0xff]
        %v320 = vld [vmem:[%s188 + $0x3b0] sm:$0xff]
        %v321 = vld [vmem:[%s188 + $0x3b8] sm:$0xff]
        %v322 = vld [vmem:[%s188 + $0x3c0] sm:$0xff]
        %v323 = vld [vmem:[%s188 + $0x3c8] sm:$0xff]
        %v324 = vld [vmem:[%s188 + $0x3d0] sm:$0xff]
        %v325 = vld [vmem:[%s188 + $0x3d8] sm:$0xff]
        %v326 = vld [vmem:[%s188 + $0x3e0] sm:$0xff]
        %v327 = vld [vmem:[%s188 + $0x3e8] sm:$0xff]
        %v328 = vld [vmem:[%s188 + $0x3f0] sm:$0xff]
        %v329 = vld [vmem:[%s188 + $0x3f8] sm:$0xff]
        %v330 = vld [vmem:[%s188 + $0x400] sm:$0xff]
        %v331 = vld [vmem:[%s188 + $0x408] sm:$0xff]
        %v332 = vld [vmem:[%s188 + $0x410] sm:$0xff]
        %v333 = vld [vmem:[%s188 + $0x418] sm:$0xff]
        %v334 = vld [vmem:[%s188 + $0x420] sm:$0xff]
        %v335 = vld [vmem:[%s188 + $0x428] sm:$0xff]
        %v336 = vld [vmem:[%s188 + $0x430] sm:$0xff]
        %v337 = vld [vmem:[%s188 + $0x438] sm:$0xff]
        %v338 = vld [vmem:[%s188 + $0x440] sm:$0xff]
        %v339 = vld [vmem:[%s188 + $0x448] sm:$0xff]
        %v340 = vld [vmem:[%s188 + $0x450] sm:$0xff]
        %v341 = vld [vmem:[%s188 + $0x458] sm:$0xff]
        %v342 = vld [vmem:[%s188 + $0x460] sm:$0xff]
        %v343 = vld [vmem:[%s188 + $0x468] sm:$0xff]
        %v344 = vld [vmem:[%s188 + $0x470] sm:$0xff]
        %v345 = vld [vmem:[%s188 + $0x478] sm:$0xff]
        %v346 = vld [vmem:[%s188 + $0x480] sm:$0xff]
        %v347 = vld [vmem:[%s188 + $0x488] sm:$0xff]
        %v348 = vld [vmem:[%s188 + $0x490] sm:$0xff]
        %v349 = vld [vmem:[%s188 + $0x498] sm:$0xff]
        %v350 = vld [vmem:[%s188 + $0x4a0] sm:$0xff]
        %v351 = vld [vmem:[%s188 + $0x4a8] sm:$0xff]
        %v352 = vld [vmem:[%s188 + $0x4b0] sm:$0xff]
        %v353 = vld [vmem:[%s188 + $0x4b8] sm:$0xff]
        %v354 = vld [vmem:[%s188 + $0x4c0] sm:$0xff]
        %v355 = vld [vmem:[%s188 + $0x4c8] sm:$0xff]
        %v356 = vld [vmem:[%s188 + $0x4d0] sm:$0xff]
        %v357 = vld [vmem:[%s188 + $0x4d8] sm:$0xff]
        %v358 = vld [vmem:[%s188 + $0x4e0] sm:$0xff]
        %v359 = vld [vmem:[%s188 + $0x4e8] sm:$0xff]
        %v360 = vld [vmem:[%s188 + $0x4f0] sm:$0xff]
        %v361 = vld [vmem:[%s188 + $0x4f8] sm:$0xff]
        %v362 = vld [vmem:[%s188 + $0x500] sm:$0xff]
        %v363 = vld [vmem:[%s188 + $0x508] sm:$0xff]
        %v364 = vld [vmem:[%s188 + $0x510] sm:$0xff]
        %v365 = vld [vmem:[%s188 + $0x518] sm:$0xff]
        %v366 = vld [vmem:[%s188 + $0x520] sm:$0xff]
        %v367 = vld [vmem:[%s188 + $0x528] sm:$0xff]
        %v368 = vld [vmem:[%s188 + $0x530] sm:$0xff]
        %v369 = vld [vmem:[%s188 + $0x538] sm:$0xff]
        %v370 = vld [vmem:[%s188 + $0x540] sm:$0xff]
        %v371 = vld [vmem:[%s188 + $0x548] sm:$0xff]
        %v372 = vld [vmem:[%s188 + $0x550] sm:$0xff]
        %v373 = vld [vmem:[%s188 + $0x558] sm:$0xff]
        %v374 = vld [vmem:[%s188 + $0x560] sm:$0xff]
        %v375 = vld [vmem:[%s188 + $0x568] sm:$0xff]
        %v376 = vld [vmem:[%s188 + $0x570] sm:$0xff]
        %v377 = vld [vmem:[%s188 + $0x578] sm:$0xff]
        %v378 = vld [vmem:[%s188 + $0x580] sm:$0xff]
        %v379 = vld [vmem:[%s188 + $0x588] sm:$0xff]
        %v380 = vld [vmem:[%s188 + $0x590] sm:$0xff]
        %v381 = vld [vmem:[%s188 + $0x598] sm:$0xff]
        %v382 = vld [vmem:[%s188 + $0x5a0] sm:$0xff]
        %v383 = vld [vmem:[%s188 + $0x5a8] sm:$0xff]
        %vm384 = vcmask 556032
        %v385 = vsel %vm384, %v203, 0.0
        %v386 = vadd.f32 %v202, %v385
        %387 = vadd.xlane.f32.xlu0 %v386
        %v388 = vpop.xlane.xlu0 %387
        %v389 = vsel %vm384, %v205, 0.0
        %v390 = vadd.f32 %v204, %v389
        %391 = vadd.xlane.f32.xlu0 %v390
        %v392 = vpop.xlane.xlu0 %391
        %v393 = vsel %vm384, %v207, 0.0
        %v394 = vadd.f32 %v206, %v393
        %395 = vadd.xlane.f32.xlu0 %v394
        %v396 = vpop.xlane.xlu0 %395
        %v397 = vsel %vm384, %v209, 0.0
        %v398 = vadd.f32 %v208, %v397
        %399 = vadd.xlane.f32.xlu0 %v398
        %v400 = vpop.xlane.xlu0 %399
        %v401 = vsel %vm384, %v211, 0.0
        %v402 = vadd.f32 %v210, %v401
        %403 = vadd.xlane.f32.xlu0 %v402
        %v404 = vpop.xlane.xlu0 %403
        %v405 = vsel %vm384, %v213, 0.0
        %v406 = vadd.f32 %v212, %v405
        %407 = vadd.xlane.f32.xlu0 %v406
        %v408 = vpop.xlane.xlu0 %407
        %v409 = vsel %vm384, %v215, 0.0
        %v410 = vadd.f32 %v214, %v409
        %411 = vadd.xlane.f32.xlu0 %v410
        %v412 = vpop.xlane.xlu0 %411
        %v413 = vsel %vm384, %v217, 0.0
        %v414 = vadd.f32 %v216, %v413
        %415 = vadd.xlane.f32.xlu0 %v414
        %v416 = vpop.xlane.xlu0 %415
        %v417 = vsel %vm384, %v219, 0.0
        %v418 = vadd.f32 %v218, %v417
        %419 = vadd.xlane.f32.xlu0 %v418
        %v420 = vpop.xlane.xlu0 %419
        %v421 = vsel %vm384, %v221, 0.0
        %v422 = vadd.f32 %v220, %v421
        %423 = vadd.xlane.f32.xlu0 %v422
        %v424 = vpop.xlane.xlu0 %423
        %v425 = vsel %vm384, %v223, 0.0
        %v426 = vadd.f32 %v222, %v425
        %427 = vadd.xlane.f32.xlu0 %v426
        %v428 = vpop.xlane.xlu0 %427
        %v429 = vsel %vm384, %v225, 0.0
        %v430 = vadd.f32 %v224, %v429
        %431 = vadd.xlane.f32.xlu0 %v430
        %v432 = vpop.xlane.xlu0 %431
        %v433 = vsel %vm384, %v227, 0.0
        %v434 = vadd.f32 %v226, %v433
        %435 = vadd.xlane.f32.xlu0 %v434
        %v436 = vpop.xlane.xlu0 %435
        %v437 = vsel %vm384, %v229, 0.0
        %v438 = vadd.f32 %v228, %v437
        %439 = vadd.xlane.f32.xlu0 %v438
        %v440 = vpop.xlane.xlu0 %439
        %v441 = vsel %vm384, %v231, 0.0
        %v442 = vadd.f32 %v230, %v441
        %443 = vadd.xlane.f32.xlu0 %v442
        %v444 = vpop.xlane.xlu0 %443
        %v445 = vsel %vm384, %v233, 0.0
        %v446 = vadd.f32 %v232, %v445
        %447 = vadd.xlane.f32.xlu0 %v446
        %v448 = vpop.xlane.xlu0 %447
        %v449 = vsel %vm384, %v235, 0.0
        %v450 = vadd.f32 %v234, %v449
        %451 = vadd.xlane.f32.xlu0 %v450
        %v452 = vpop.xlane.xlu0 %451
        %v453 = vsel %vm384, %v237, 0.0
        %v454 = vadd.f32 %v236, %v453
        %455 = vadd.xlane.f32.xlu0 %v454
        %v456 = vpop.xlane.xlu0 %455
        %v457 = vsel %vm384, %v239, 0.0
        %v458 = vadd.f32 %v238, %v457
        %459 = vadd.xlane.f32.xlu0 %v458
        %v460 = vpop.xlane.xlu0 %459
        %v461 = vsel %vm384, %v241, 0.0
        %v462 = vadd.f32 %v240, %v461
        %463 = vadd.xlane.f32.xlu0 %v462
        %v464 = vpop.xlane.xlu0 %463
        %v465 = vsel %vm384, %v243, 0.0
        %v466 = vadd.f32 %v242, %v465
        %467 = vadd.xlane.f32.xlu0 %v466
        %v468 = vpop.xlane.xlu0 %467
        %v469 = vsel %vm384, %v245, 0.0
        %v470 = vadd.f32 %v244, %v469
        %471 = vadd.xlane.f32.xlu0 %v470
        %v472 = vpop.xlane.xlu0 %471
        %v473 = vsel %vm384, %v247, 0.0
        %v474 = vadd.f32 %v246, %v473
        %475 = vadd.xlane.f32.xlu0 %v474
        %v476 = vpop.xlane.xlu0 %475
        %v477 = vsel %vm384, %v249, 0.0
        %v478 = vadd.f32 %v248, %v477
        %479 = vadd.xlane.f32.xlu0 %v478
        %v480 = vpop.xlane.xlu0 %479
        %v481 = vsel %vm384, %v251, 0.0
        %v482 = vadd.f32 %v250, %v481
        %483 = vadd.xlane.f32.xlu0 %v482
        %v484 = vpop.xlane.xlu0 %483
        %v485 = vsel %vm384, %v253, 0.0
        %v486 = vadd.f32 %v252, %v485
        %487 = vadd.xlane.f32.xlu0 %v486
        %v488 = vpop.xlane.xlu0 %487
        %v489 = vsel %vm384, %v255, 0.0
        %v490 = vadd.f32 %v254, %v489
        %491 = vadd.xlane.f32.xlu0 %v490
        %v492 = vpop.xlane.xlu0 %491
        %v493 = vsel %vm384, %v257, 0.0
        %v494 = vadd.f32 %v256, %v493
        %495 = vadd.xlane.f32.xlu0 %v494
        %v496 = vpop.xlane.xlu0 %495
        %v497 = vsel %vm384, %v259, 0.0
        %v498 = vadd.f32 %v258, %v497
        %499 = vadd.xlane.f32.xlu0 %v498
        %v500 = vpop.xlane.xlu0 %499
        %v501 = vsel %vm384, %v261, 0.0
        %v502 = vadd.f32 %v260, %v501
        %503 = vadd.xlane.f32.xlu0 %v502
        %v504 = vpop.xlane.xlu0 %503
        %v505 = vsel %vm384, %v263, 0.0
        %v506 = vadd.f32 %v262, %v505
        %507 = vadd.xlane.f32.xlu0 %v506
        %v508 = vpop.xlane.xlu0 %507
        %v509 = vsel %vm384, %v265, 0.0
        %v510 = vadd.f32 %v264, %v509
        %511 = vadd.xlane.f32.xlu0 %v510
        %v512 = vpop.xlane.xlu0 %511
        %v513 = vsel %vm384, %v267, 0.0
        %v514 = vadd.f32 %v266, %v513
        %515 = vadd.xlane.f32.xlu0 %v514
        %v516 = vpop.xlane.xlu0 %515
        %v517 = vsel %vm384, %v269, 0.0
        %v518 = vadd.f32 %v268, %v517
        %519 = vadd.xlane.f32.xlu0 %v518
        %v520 = vpop.xlane.xlu0 %519
        %v521 = vsel %vm384, %v271, 0.0
        %v522 = vadd.f32 %v270, %v521
        %523 = vadd.xlane.f32.xlu0 %v522
        %v524 = vpop.xlane.xlu0 %523
        %v525 = vsel %vm384, %v273, 0.0
        %v526 = vadd.f32 %v272, %v525
        %527 = vadd.xlane.f32.xlu0 %v526
        %v528 = vpop.xlane.xlu0 %527
        %v529 = vsel %vm384, %v275, 0.0
        %v530 = vadd.f32 %v274, %v529
        %531 = vadd.xlane.f32.xlu0 %v530
        %v532 = vpop.xlane.xlu0 %531
        %v533 = vsel %vm384, %v277, 0.0
        %v534 = vadd.f32 %v276, %v533
        %535 = vadd.xlane.f32.xlu0 %v534
        %v536 = vpop.xlane.xlu0 %535
        %v537 = vsel %vm384, %v279, 0.0
        %v538 = vadd.f32 %v278, %v537
        %539 = vadd.xlane.f32.xlu0 %v538
        %v540 = vpop.xlane.xlu0 %539
        %v541 = vsel %vm384, %v281, 0.0
        %v542 = vadd.f32 %v280, %v541
        %543 = vadd.xlane.f32.xlu0 %v542
        %v544 = vpop.xlane.xlu0 %543
        %v545 = vsel %vm384, %v283, 0.0
        %v546 = vadd.f32 %v282, %v545
        %547 = vadd.xlane.f32.xlu0 %v546
        %v548 = vpop.xlane.xlu0 %547
        %v549 = vsel %vm384, %v285, 0.0
        %v550 = vadd.f32 %v284, %v549
        %551 = vadd.xlane.f32.xlu0 %v550
        %v552 = vpop.xlane.xlu0 %551
        %v553 = vsel %vm384, %v287, 0.0
        %v554 = vadd.f32 %v286, %v553
        %555 = vadd.xlane.f32.xlu0 %v554
        %v556 = vpop.xlane.xlu0 %555
        %v557 = vsel %vm384, %v289, 0.0
        %v558 = vadd.f32 %v288, %v557
        %559 = vadd.xlane.f32.xlu0 %v558
        %v560 = vpop.xlane.xlu0 %559
        %v561 = vsel %vm384, %v291, 0.0
        %v562 = vadd.f32 %v290, %v561
        %563 = vadd.xlane.f32.xlu0 %v562
        %v564 = vpop.xlane.xlu0 %563
        %v565 = vsel %vm384, %v293, 0.0
        %v566 = vadd.f32 %v292, %v565
        %567 = vadd.xlane.f32.xlu0 %v566
        %v568 = vpop.xlane.xlu0 %567
        %v569 = vsel %vm384, %v295, 0.0
        %v570 = vadd.f32 %v294, %v569
        %571 = vadd.xlane.f32.xlu0 %v570
        %v572 = vpop.xlane.xlu0 %571
        %v573 = vsel %vm384, %v297, 0.0
        %v574 = vadd.f32 %v296, %v573
        %575 = vadd.xlane.f32.xlu0 %v574
        %v576 = vpop.xlane.xlu0 %575
        %v577 = vsel %vm384, %v299, 0.0
        %v578 = vadd.f32 %v298, %v577
        %579 = vadd.xlane.f32.xlu0 %v578
        %v580 = vpop.xlane.xlu0 %579
        %v581 = vsel %vm384, %v301, 0.0
        %v582 = vadd.f32 %v300, %v581
        %583 = vadd.xlane.f32.xlu0 %v582
        %v584 = vpop.xlane.xlu0 %583
        %v585 = vsel %vm384, %v303, 0.0
        %v586 = vadd.f32 %v302, %v585
        %587 = vadd.xlane.f32.xlu0 %v586
        %v588 = vpop.xlane.xlu0 %587
        %v589 = vsel %vm384, %v305, 0.0
        %v590 = vadd.f32 %v304, %v589
        %591 = vadd.xlane.f32.xlu0 %v590
        %v592 = vpop.xlane.xlu0 %591
        %v593 = vsel %vm384, %v307, 0.0
        %v594 = vadd.f32 %v306, %v593
        %595 = vadd.xlane.f32.xlu0 %v594
        %v596 = vpop.xlane.xlu0 %595
        %v597 = vsel %vm384, %v309, 0.0
        %v598 = vadd.f32 %v308, %v597
        %599 = vadd.xlane.f32.xlu0 %v598
        %v600 = vpop.xlane.xlu0 %599
        %v601 = vsel %vm384, %v311, 0.0
        %v602 = vadd.f32 %v310, %v601
        %603 = vadd.xlane.f32.xlu0 %v602
        %v604 = vpop.xlane.xlu0 %603
        %v605 = vsel %vm384, %v313, 0.0
        %v606 = vadd.f32 %v312, %v605
        %607 = vadd.xlane.f32.xlu0 %v606
        %v608 = vpop.xlane.xlu0 %607
        %v609 = vsel %vm384, %v315, 0.0
        %v610 = vadd.f32 %v314, %v609
        %611 = vadd.xlane.f32.xlu0 %v610
        %v612 = vpop.xlane.xlu0 %611
        %v613 = vsel %vm384, %v317, 0.0
        %v614 = vadd.f32 %v316, %v613
        %615 = vadd.xlane.f32.xlu0 %v614
        %v616 = vpop.xlane.xlu0 %615
        %v617 = vsel %vm384, %v319, 0.0
        %v618 = vadd.f32 %v318, %v617
        %619 = vadd.xlane.f32.xlu0 %v618
        %v620 = vpop.xlane.xlu0 %619
        %v621 = vsel %vm384, %v321, 0.0
        %v622 = vadd.f32 %v320, %v621
        %623 = vadd.xlane.f32.xlu0 %v622
        %v624 = vpop.xlane.xlu0 %623
        %v625 = vsel %vm384, %v323, 0.0
        %v626 = vadd.f32 %v322, %v625
        %627 = vadd.xlane.f32.xlu0 %v626
        %v628 = vpop.xlane.xlu0 %627
        %v629 = vsel %vm384, %v325, 0.0
        %v630 = vadd.f32 %v324, %v629
        %631 = vadd.xlane.f32.xlu0 %v630
        %v632 = vpop.xlane.xlu0 %631
        %v633 = vsel %vm384, %v327, 0.0
        %v634 = vadd.f32 %v326, %v633
        %635 = vadd.xlane.f32.xlu0 %v634
        %v636 = vpop.xlane.xlu0 %635
        %v637 = vsel %vm384, %v329, 0.0
        %v638 = vadd.f32 %v328, %v637
        %639 = vadd.xlane.f32.xlu0 %v638
        %v640 = vpop.xlane.xlu0 %639
        %v641 = vsel %vm384, %v331, 0.0
        %v642 = vadd.f32 %v330, %v641
        %643 = vadd.xlane.f32.xlu0 %v642
        %v644 = vpop.xlane.xlu0 %643
        %v645 = vsel %vm384, %v333, 0.0
        %v646 = vadd.f32 %v332, %v645
        %647 = vadd.xlane.f32.xlu0 %v646
        %v648 = vpop.xlane.xlu0 %647
        %v649 = vsel %vm384, %v335, 0.0
        %v650 = vadd.f32 %v334, %v649
        %651 = vadd.xlane.f32.xlu0 %v650
        %v652 = vpop.xlane.xlu0 %651
        %v653 = vsel %vm384, %v337, 0.0
        %v654 = vadd.f32 %v336, %v653
        %655 = vadd.xlane.f32.xlu0 %v654
        %v656 = vpop.xlane.xlu0 %655
        %v657 = vsel %vm384, %v339, 0.0
        %v658 = vadd.f32 %v338, %v657
        %659 = vadd.xlane.f32.xlu0 %v658
        %v660 = vpop.xlane.xlu0 %659
        %v661 = vsel %vm384, %v341, 0.0
        %v662 = vadd.f32 %v340, %v661
        %663 = vadd.xlane.f32.xlu0 %v662
        %v664 = vpop.xlane.xlu0 %663
        %v665 = vsel %vm384, %v343, 0.0
        %v666 = vadd.f32 %v342, %v665
        %667 = vadd.xlane.f32.xlu0 %v666
        %v668 = vpop.xlane.xlu0 %667
        %v669 = vsel %vm384, %v345, 0.0
        %v670 = vadd.f32 %v344, %v669
        %671 = vadd.xlane.f32.xlu0 %v670
        %v672 = vpop.xlane.xlu0 %671
        %v673 = vsel %vm384, %v347, 0.0
        %v674 = vadd.f32 %v346, %v673
        %675 = vadd.xlane.f32.xlu0 %v674
        %v676 = vpop.xlane.xlu0 %675
        %v677 = vsel %vm384, %v349, 0.0
        %v678 = vadd.f32 %v348, %v677
        %679 = vadd.xlane.f32.xlu0 %v678
        %v680 = vpop.xlane.xlu0 %679
        %v681 = vsel %vm384, %v351, 0.0
        %v682 = vadd.f32 %v350, %v681
        %683 = vadd.xlane.f32.xlu0 %v682
        %v684 = vpop.xlane.xlu0 %683
        %v685 = vsel %vm384, %v353, 0.0
        %v686 = vadd.f32 %v352, %v685
        %687 = vadd.xlane.f32.xlu0 %v686
        %v688 = vpop.xlane.xlu0 %687
        %v689 = vsel %vm384, %v355, 0.0
        %v690 = vadd.f32 %v354, %v689
        %691 = vadd.xlane.f32.xlu0 %v690
        %v692 = vpop.xlane.xlu0 %691
        %v693 = vsel %vm384, %v357, 0.0
        %v694 = vadd.f32 %v356, %v693
        %695 = vadd.xlane.f32.xlu0 %v694
        %v696 = vpop.xlane.xlu0 %695
        %v697 = vsel %vm384, %v359, 0.0
        %v698 = vadd.f32 %v358, %v697
        %699 = vadd.xlane.f32.xlu0 %v698
        %v700 = vpop.xlane.xlu0 %699
        %v701 = vsel %vm384, %v361, 0.0
        %v702 = vadd.f32 %v360, %v701
        %703 = vadd.xlane.f32.xlu0 %v702
        %v704 = vpop.xlane.xlu0 %703
        %v705 = vsel %vm384, %v363, 0.0
        %v706 = vadd.f32 %v362, %v705
        %707 = vadd.xlane.f32.xlu0 %v706
        %v708 = vpop.xlane.xlu0 %707
        %v709 = vsel %vm384, %v365, 0.0
        %v710 = vadd.f32 %v364, %v709
        %711 = vadd.xlane.f32.xlu0 %v710
        %v712 = vpop.xlane.xlu0 %711
        %v713 = vsel %vm384, %v367, 0.0
        %v714 = vadd.f32 %v366, %v713
        %715 = vadd.xlane.f32.xlu0 %v714
        %v716 = vpop.xlane.xlu0 %715
        %v717 = vsel %vm384, %v369, 0.0
        %v718 = vadd.f32 %v368, %v717
        %719 = vadd.xlane.f32.xlu0 %v718
        %v720 = vpop.xlane.xlu0 %719
        %v721 = vsel %vm384, %v371, 0.0
        %v722 = vadd.f32 %v370, %v721
        %723 = vadd.xlane.f32.xlu0 %v722
        %v724 = vpop.xlane.xlu0 %723
        %v725 = vsel %vm384, %v373, 0.0
        %v726 = vadd.f32 %v372, %v725
        %727 = vadd.xlane.f32.xlu0 %v726
        %v728 = vpop.xlane.xlu0 %727
        %v729 = vsel %vm384, %v375, 0.0
        %v730 = vadd.f32 %v374, %v729
        %731 = vadd.xlane.f32.xlu0 %v730
        %v732 = vpop.xlane.xlu0 %731
        %v733 = vsel %vm384, %v377, 0.0
        %v734 = vadd.f32 %v376, %v733
        %735 = vadd.xlane.f32.xlu0 %v734
        %v736 = vpop.xlane.xlu0 %735
        %v737 = vsel %vm384, %v379, 0.0
        %v738 = vadd.f32 %v378, %v737
        %739 = vadd.xlane.f32.xlu0 %v738
        %v740 = vpop.xlane.xlu0 %739
        %v741 = vsel %vm384, %v381, 0.0
        %v742 = vadd.f32 %v380, %v741
        %743 = vadd.xlane.f32.xlu0 %v742
        %v744 = vpop.xlane.xlu0 %743
        %v745 = vsel %vm384, %v383, 0.0
        %v746 = vadd.f32 %v382, %v745
        %747 = vadd.xlane.f32.xlu0 %v746
        %v748 = vpop.xlane.xlu0 %747
        %v749 = vmul.f32 %v388, 0.0051020407
        %v750 = vmul.f32 %v392, 0.0051020407
        %v751 = vmul.f32 %v396, 0.0051020407
        %v752 = vmul.f32 %v400, 0.0051020407
        %v753 = vmul.f32 %v404, 0.0051020407
        %v754 = vmul.f32 %v408, 0.0051020407
        %v755 = vmul.f32 %v412, 0.0051020407
        %v756 = vmul.f32 %v416, 0.0051020407
        %v757 = vmul.f32 %v420, 0.0051020407
        %v758 = vmul.f32 %v424, 0.0051020407
        %v759 = vmul.f32 %v428, 0.0051020407
        %v760 = vmul.f32 %v432, 0.0051020407
        %v761 = vmul.f32 %v436, 0.0051020407
        %v762 = vmul.f32 %v440, 0.0051020407
        %v763 = vmul.f32 %v444, 0.0051020407
        %v764 = vmul.f32 %v448, 0.0051020407
        %v765 = vmul.f32 %v452, 0.0051020407
        %v766 = vmul.f32 %v456, 0.0051020407
        %v767 = vmul.f32 %v460, 0.0051020407
        %v768 = vmul.f32 %v464, 0.0051020407
        %v769 = vmul.f32 %v468, 0.0051020407
        %v770 = vmul.f32 %v472, 0.0051020407
        %v771 = vmul.f32 %v476, 0.0051020407
        %v772 = vmul.f32 %v480, 0.0051020407
        %v773 = vmul.f32 %v484, 0.0051020407
        %v774 = vmul.f32 %v488, 0.0051020407
        %v775 = vmul.f32 %v492, 0.0051020407
        %v776 = vmul.f32 %v496, 0.0051020407
        %v777 = vmul.f32 %v500, 0.0051020407
        %v778 = vmul.f32 %v504, 0.0051020407
        %v779 = vmul.f32 %v508, 0.0051020407
        %v780 = vmul.f32 %v512, 0.0051020407
        %v781 = vmul.f32 %v516, 0.0051020407
        %v782 = vmul.f32 %v520, 0.0051020407
        %v783 = vmul.f32 %v524, 0.0051020407
        %v784 = vmul.f32 %v528, 0.0051020407
        %v785 = vmul.f32 %v532, 0.0051020407
        %v786 = vmul.f32 %v536, 0.0051020407
        %v787 = vmul.f32 %v540, 0.0051020407
        %v788 = vmul.f32 %v544, 0.0051020407
        %v789 = vmul.f32 %v548, 0.0051020407
        %v790 = vmul.f32 %v552, 0.0051020407
        %v791 = vmul.f32 %v556, 0.0051020407
        %v792 = vmul.f32 %v560, 0.0051020407
        %v793 = vmul.f32 %v564, 0.0051020407
        %v794 = vmul.f32 %v568, 0.0051020407
        %v795 = vmul.f32 %v572, 0.0051020407
        %v796 = vmul.f32 %v576, 0.0051020407
        %v797 = vmul.f32 %v580, 0.0051020407
        %v798 = vmul.f32 %v584, 0.0051020407
        %v799 = vmul.f32 %v588, 0.0051020407
        %v800 = vmul.f32 %v592, 0.0051020407
        %v801 = vmul.f32 %v596, 0.0051020407
        %v802 = vmul.f32 %v600, 0.0051020407
        %v803 = vmul.f32 %v604, 0.0051020407
        %v804 = vmul.f32 %v608, 0.0051020407
        %v805 = vmul.f32 %v612, 0.0051020407
        %v806 = vmul.f32 %v616, 0.0051020407
        %v807 = vmul.f32 %v620, 0.0051020407
        %v808 = vmul.f32 %v624, 0.0051020407
        %v809 = vmul.f32 %v628, 0.0051020407
        %v810 = vmul.f32 %v632, 0.0051020407
        %v811 = vmul.f32 %v636, 0.0051020407
        %v812 = vmul.f32 %v640, 0.0051020407
        %v813 = vmul.f32 %v644, 0.0051020407
        %v814 = vmul.f32 %v648, 0.0051020407
        %v815 = vmul.f32 %v652, 0.0051020407
        %v816 = vmul.f32 %v656, 0.0051020407
        %v817 = vmul.f32 %v660, 0.0051020407
        %v818 = vmul.f32 %v664, 0.0051020407
        %v819 = vmul.f32 %v668, 0.0051020407
        %v820 = vmul.f32 %v672, 0.0051020407
        %v821 = vmul.f32 %v676, 0.0051020407
        %v822 = vmul.f32 %v680, 0.0051020407
        %v823 = vmul.f32 %v684, 0.0051020407
        %v824 = vmul.f32 %v688, 0.0051020407
        %v825 = vmul.f32 %v692, 0.0051020407
        %v826 = vmul.f32 %v696, 0.0051020407
        %v827 = vmul.f32 %v700, 0.0051020407
        %v828 = vmul.f32 %v704, 0.0051020407
        %v829 = vmul.f32 %v708, 0.0051020407
        %v830 = vmul.f32 %v712, 0.0051020407
        %v831 = vmul.f32 %v716, 0.0051020407
        %v832 = vmul.f32 %v720, 0.0051020407
        %v833 = vmul.f32 %v724, 0.0051020407
        %v834 = vmul.f32 %v728, 0.0051020407
        %v835 = vmul.f32 %v732, 0.0051020407
        %v836 = vmul.f32 %v736, 0.0051020407
        %v837 = vmul.f32 %v740, 0.0051020407
        %v838 = vmul.f32 %v744, 0.0051020407
        %v839 = vmul.f32 %v748, 0.0051020407
        %v840 = vsub.f32 %v202, %v749
        %v841 = vsub.f32 %v203, %v749
        %v842 = vsub.f32 %v204, %v750
        %v843 = vsub.f32 %v205, %v750
        %v844 = vsub.f32 %v206, %v751
        %v845 = vsub.f32 %v207, %v751
        %v846 = vsub.f32 %v208, %v752
        %v847 = vsub.f32 %v209, %v752
        %v848 = vsub.f32 %v210, %v753
        %v849 = vsub.f32 %v211, %v753
        %v850 = vsub.f32 %v212, %v754
        %v851 = vsub.f32 %v213, %v754
        %v852 = vsub.f32 %v214, %v755
        %v853 = vsub.f32 %v215, %v755
        %v854 = vsub.f32 %v216, %v756
        %v855 = vsub.f32 %v217, %v756
        %v856 = vsub.f32 %v218, %v757
        %v857 = vsub.f32 %v219, %v757
        %v858 = vsub.f32 %v220, %v758
        %v859 = vsub.f32 %v221, %v758
        %v860 = vsub.f32 %v222, %v759
        %v861 = vsub.f32 %v223, %v759
        %v862 = vsub.f32 %v224, %v760
        %v863 = vsub.f32 %v225, %v760
        %v864 = vsub.f32 %v226, %v761
        %v865 = vsub.f32 %v227, %v761
        %v866 = vsub.f32 %v228, %v762
        %v867 = vsub.f32 %v229, %v762
        %v868 = vsub.f32 %v230, %v763
        %v869 = vsub.f32 %v231, %v763
        %v870 = vsub.f32 %v232, %v764
        %v871 = vsub.f32 %v233, %v764
        %v872 = vsub.f32 %v234, %v765
        %v873 = vsub.f32 %v235, %v765
        %v874 = vsub.f32 %v236, %v766
        %v875 = vsub.f32 %v237, %v766
        %v876 = vsub.f32 %v238, %v767
        %v877 = vsub.f32 %v239, %v767
        %v878 = vsub.f32 %v240, %v768
        %v879 = vsub.f32 %v241, %v768
        %v880 = vsub.f32 %v242, %v769
        %v881 = vsub.f32 %v243, %v769
        %v882 = vsub.f32 %v244, %v770
        %v883 = vsub.f32 %v245, %v770
        %v884 = vsub.f32 %v246, %v771
        %v885 = vsub.f32 %v247, %v771
        %v886 = vsub.f32 %v248, %v772
        %v887 = vsub.f32 %v249, %v772
        %v888 = vsub.f32 %v250, %v773
        %v889 = vsub.f32 %v251, %v773
        %v890 = vsub.f32 %v252, %v774
        %v891 = vsub.f32 %v253, %v774
        %v892 = vsub.f32 %v254, %v775
        %v893 = vsub.f32 %v255, %v775
        %v894 = vsub.f32 %v256, %v776
        %v895 = vsub.f32 %v257, %v776
        %v896 = vsub.f32 %v258, %v777
        %v897 = vsub.f32 %v259, %v777
        %v898 = vsub.f32 %v260, %v778
        %v899 = vsub.f32 %v261, %v778
        %v900 = vsub.f32 %v262, %v779
        %v901 = vsub.f32 %v263, %v779
        %v902 = vsub.f32 %v264, %v780
        %v903 = vsub.f32 %v265, %v780
        %v904 = vsub.f32 %v266, %v781
        %v905 = vsub.f32 %v267, %v781
        %v906 = vsub.f32 %v268, %v782
        %v907 = vsub.f32 %v269, %v782
        %v908 = vsub.f32 %v270, %v783
        %v909 = vsub.f32 %v271, %v783
        %v910 = vsub.f32 %v272, %v784
        %v911 = vsub.f32 %v273, %v784
        %v912 = vsub.f32 %v274, %v785
        %v913 = vsub.f32 %v275, %v785
        %v914 = vsub.f32 %v276, %v786
        %v915 = vsub.f32 %v277, %v786
        %v916 = vsub.f32 %v278, %v787
        %v917 = vsub.f32 %v279, %v787
        %v918 = vsub.f32 %v280, %v788
        %v919 = vsub.f32 %v281, %v788
        %v920 = vsub.f32 %v282, %v789
        %v921 = vsub.f32 %v283, %v789
        %v922 = vsub.f32 %v284, %v790
        %v923 = vsub.f32 %v285, %v790
        %v924 = vsub.f32 %v286, %v791
        %v925 = vsub.f32 %v287, %v791
        %v926 = vsub.f32 %v288, %v792
        %v927 = vsub.f32 %v289, %v792
        %v928 = vsub.f32 %v290, %v793
        %v929 = vsub.f32 %v291, %v793
        %v930 = vsub.f32 %v292, %v794
        %v931 = vsub.f32 %v293, %v794
        %v932 = vsub.f32 %v294, %v795
        %v933 = vsub.f32 %v295, %v795
        %v934 = vsub.f32 %v296, %v796
        %v935 = vsub.f32 %v297, %v796
        %v936 = vsub.f32 %v298, %v797
        %v937 = vsub.f32 %v299, %v797
        %v938 = vsub.f32 %v300, %v798
        %v939 = vsub.f32 %v301, %v798
        %v940 = vsub.f32 %v302, %v799
        %v941 = vsub.f32 %v303, %v799
        %v942 = vsub.f32 %v304, %v800
        %v943 = vsub.f32 %v305, %v800
        %v944 = vsub.f32 %v306, %v801
        %v945 = vsub.f32 %v307, %v801
        %v946 = vsub.f32 %v308, %v802
        %v947 = vsub.f32 %v309, %v802
        %v948 = vsub.f32 %v310, %v803
        %v949 = vsub.f32 %v311, %v803
        %v950 = vsub.f32 %v312, %v804
        %v951 = vsub.f32 %v313, %v804
        %v952 = vsub.f32 %v314, %v805
        %v953 = vsub.f32 %v315, %v805
        %v954 = vsub.f32 %v316, %v806
        %v955 = vsub.f32 %v317, %v806
        %v956 = vsub.f32 %v318, %v807
        %v957 = vsub.f32 %v319, %v807
        %v958 = vsub.f32 %v320, %v808
        %v959 = vsub.f32 %v321, %v808
        %v960 = vsub.f32 %v322, %v809
        %v961 = vsub.f32 %v323, %v809
        %v962 = vsub.f32 %v324, %v810
        %v963 = vsub.f32 %v325, %v810
        %v964 = vsub.f32 %v326, %v811
        %v965 = vsub.f32 %v327, %v811
        %v966 = vsub.f32 %v328, %v812
        %v967 = vsub.f32 %v329, %v812
        %v968 = vsub.f32 %v330, %v813
        %v969 = vsub.f32 %v331, %v813
        %v970 = vsub.f32 %v332, %v814
        %v971 = vsub.f32 %v333, %v814
        %v972 = vsub.f32 %v334, %v815
        %v973 = vsub.f32 %v335, %v815
        %v974 = vsub.f32 %v336, %v816
        %v975 = vsub.f32 %v337, %v816
        %v976 = vsub.f32 %v338, %v817
        %v977 = vsub.f32 %v339, %v817
        %v978 = vsub.f32 %v340, %v818
        %v979 = vsub.f32 %v341, %v818
        %v980 = vsub.f32 %v342, %v819
        %v981 = vsub.f32 %v343, %v819
        %v982 = vsub.f32 %v344, %v820
        %v983 = vsub.f32 %v345, %v820
        %v984 = vsub.f32 %v346, %v821
        %v985 = vsub.f32 %v347, %v821
        %v986 = vsub.f32 %v348, %v822
        %v987 = vsub.f32 %v349, %v822
        %v988 = vsub.f32 %v350, %v823
        %v989 = vsub.f32 %v351, %v823
        %v990 = vsub.f32 %v352, %v824
        %v991 = vsub.f32 %v353, %v824
        %v992 = vsub.f32 %v354, %v825
        %v993 = vsub.f32 %v355, %v825
        %v994 = vsub.f32 %v356, %v826
        %v995 = vsub.f32 %v357, %v826
        %v996 = vsub.f32 %v358, %v827
        %v997 = vsub.f32 %v359, %v827
        %v998 = vsub.f32 %v360, %v828
        %v999 = vsub.f32 %v361, %v828
        %v1000 = vsub.f32 %v362, %v829
        %v1001 = vsub.f32 %v363, %v829
        %v1002 = vsub.f32 %v364, %v830
        %v1003 = vsub.f32 %v365, %v830
        %v1004 = vsub.f32 %v366, %v831
        %v1005 = vsub.f32 %v367, %v831
        %v1006 = vsub.f32 %v368, %v832
        %v1007 = vsub.f32 %v369, %v832
        %v1008 = vsub.f32 %v370, %v833
        %v1009 = vsub.f32 %v371, %v833
        %v1010 = vsub.f32 %v372, %v834
        %v1011 = vsub.f32 %v373, %v834
        %v1012 = vsub.f32 %v374, %v835
        %v1013 = vsub.f32 %v375, %v835
        %v1014 = vsub.f32 %v376, %v836
        %v1015 = vsub.f32 %v377, %v836
        %v1016 = vsub.f32 %v378, %v837
        %v1017 = vsub.f32 %v379, %v837
        %v1018 = vsub.f32 %v380, %v838
        %v1019 = vsub.f32 %v381, %v838
        %v1020 = vsub.f32 %v382, %v839
        %v1021 = vsub.f32 %v383, %v839
        %v1022 = vmul.f32 %v840, %v840
        %v1023 = vmul.f32 %v841, %v841
        %v1024 = vmul.f32 %v842, %v842
        %v1025 = vmul.f32 %v843, %v843
        %v1026 = vmul.f32 %v844, %v844
        %v1027 = vmul.f32 %v845, %v845
        %v1028 = vmul.f32 %v846, %v846
        %v1029 = vmul.f32 %v847, %v847
        %v1030 = vmul.f32 %v848, %v848
        %v1031 = vmul.f32 %v849, %v849
        %v1032 = vmul.f32 %v850, %v850
        %v1033 = vmul.f32 %v851, %v851
        %v1034 = vmul.f32 %v852, %v852
        %v1035 = vmul.f32 %v853, %v853
        %v1036 = vmul.f32 %v854, %v854
        %v1037 = vmul.f32 %v855, %v855
        %v1038 = vmul.f32 %v856, %v856
        %v1039 = vmul.f32 %v857, %v857
        %v1040 = vmul.f32 %v858, %v858
        %v1041 = vmul.f32 %v859, %v859
        %v1042 = vmul.f32 %v860, %v860
        %v1043 = vmul.f32 %v861, %v861
        %v1044 = vmul.f32 %v862, %v862
        %v1045 = vmul.f32 %v863, %v863
        %v1046 = vmul.f32 %v864, %v864
        %v1047 = vmul.f32 %v865, %v865
        %v1048 = vmul.f32 %v866, %v866
        %v1049 = vmul.f32 %v867, %v867
        %v1050 = vmul.f32 %v868, %v868
        %v1051 = vmul.f32 %v869, %v869
        %v1052 = vmul.f32 %v870, %v870
        %v1053 = vmul.f32 %v871, %v871
        %v1054 = vmul.f32 %v872, %v872
        %v1055 = vmul.f32 %v873, %v873
        %v1056 = vmul.f32 %v874, %v874
        %v1057 = vmul.f32 %v875, %v875
        %v1058 = vmul.f32 %v876, %v876
        %v1059 = vmul.f32 %v877, %v877
        %v1060 = vmul.f32 %v878, %v878
        %v1061 = vmul.f32 %v879, %v879
        %v1062 = vmul.f32 %v880, %v880
        %v1063 = vmul.f32 %v881, %v881
        %v1064 = vmul.f32 %v882, %v882
        %v1065 = vmul.f32 %v883, %v883
        %v1066 = vmul.f32 %v884, %v884
        %v1067 = vmul.f32 %v885, %v885
        %v1068 = vmul.f32 %v886, %v886
        %v1069 = vmul.f32 %v887, %v887
        %v1070 = vmul.f32 %v888, %v888
        %v1071 = vmul.f32 %v889, %v889
        %v1072 = vmul.f32 %v890, %v890
        %v1073 = vmul.f32 %v891, %v891
        %v1074 = vmul.f32 %v892, %v892
        %v1075 = vmul.f32 %v893, %v893
        %v1076 = vmul.f32 %v894, %v894
        %v1077 = vmul.f32 %v895, %v895
        %v1078 = vmul.f32 %v896, %v896
        %v1079 = vmul.f32 %v897, %v897
        %v1080 = vmul.f32 %v898, %v898
        %v1081 = vmul.f32 %v899, %v899
        %v1082 = vmul.f32 %v900, %v900
        %v1083 = vmul.f32 %v901, %v901
        %v1084 = vmul.f32 %v902, %v902
        %v1085 = vmul.f32 %v903, %v903
        %v1086 = vmul.f32 %v904, %v904
        %v1087 = vmul.f32 %v905, %v905
        %v1088 = vmul.f32 %v906, %v906
        %v1089 = vmul.f32 %v907, %v907
        %v1090 = vmul.f32 %v908, %v908
        %v1091 = vmul.f32 %v909, %v909
        %v1092 = vmul.f32 %v910, %v910
        %v1093 = vmul.f32 %v911, %v911
        %v1094 = vmul.f32 %v912, %v912
        %v1095 = vmul.f32 %v913, %v913
        %v1096 = vmul.f32 %v914, %v914
        %v1097 = vmul.f32 %v915, %v915
        %v1098 = vmul.f32 %v916, %v916
        %v1099 = vmul.f32 %v917, %v917
        %v1100 = vmul.f32 %v918, %v918
        %v1101 = vmul.f32 %v919, %v919
        %v1102 = vmul.f32 %v920, %v920
        %v1103 = vmul.f32 %v921, %v921
        %v1104 = vmul.f32 %v922, %v922
        %v1105 = vmul.f32 %v923, %v923
        %v1106 = vmul.f32 %v924, %v924
        %v1107 = vmul.f32 %v925, %v925
        %v1108 = vmul.f32 %v926, %v926
        %v1109 = vmul.f32 %v927, %v927
        %v1110 = vmul.f32 %v928, %v928
        %v1111 = vmul.f32 %v929, %v929
        %v1112 = vmul.f32 %v930, %v930
        %v1113 = vmul.f32 %v931, %v931
        %v1114 = vmul.f32 %v932, %v932
        %v1115 = vmul.f32 %v933, %v933
        %v1116 = vmul.f32 %v934, %v934
        %v1117 = vmul.f32 %v935, %v935
        %v1118 = vmul.f32 %v936, %v936
        %v1119 = vmul.f32 %v937, %v937
        %v1120 = vmul.f32 %v938, %v938
        %v1121 = vmul.f32 %v939, %v939
        %v1122 = vmul.f32 %v940, %v940
        %v1123 = vmul.f32 %v941, %v941
        %v1124 = vmul.f32 %v942, %v942
        %v1125 = vmul.f32 %v943, %v943
        %v1126 = vmul.f32 %v944, %v944
        %v1127 = vmul.f32 %v945, %v945
        %v1128 = vmul.f32 %v946, %v946
        %v1129 = vmul.f32 %v947, %v947
        %v1130 = vmul.f32 %v948, %v948
        %v1131 = vmul.f32 %v949, %v949
        %v1132 = vmul.f32 %v950, %v950
        %v1133 = vmul.f32 %v951, %v951
        %v1134 = vmul.f32 %v952, %v952
        %v1135 = vmul.f32 %v953, %v953
        %v1136 = vmul.f32 %v954, %v954
        %v1137 = vmul.f32 %v955, %v955
        %v1138 = vmul.f32 %v956, %v956
        %v1139 = vmul.f32 %v957, %v957
        %v1140 = vmul.f32 %v958, %v958
        %v1141 = vmul.f32 %v959, %v959
        %v1142 = vmul.f32 %v960, %v960
        %v1143 = vmul.f32 %v961, %v961
        %v1144 = vmul.f32 %v962, %v962
        %v1145 = vmul.f32 %v963, %v963
        %v1146 = vmul.f32 %v964, %v964
        %v1147 = vmul.f32 %v965, %v965
        %v1148 = vmul.f32 %v966, %v966
        %v1149 = vmul.f32 %v967, %v967
        %v1150 = vmul.f32 %v968, %v968
        %v1151 = vmul.f32 %v969, %v969
        %v1152 = vmul.f32 %v970, %v970
        %v1153 = vmul.f32 %v971, %v971
        %v1154 = vmul.f32 %v972, %v972
        %v1155 = vmul.f32 %v973, %v973
        %v1156 = vmul.f32 %v974, %v974
        %v1157 = vmul.f32 %v975, %v975
        %v1158 = vmul.f32 %v976, %v976
        %v1159 = vmul.f32 %v977, %v977
        %v1160 = vmul.f32 %v978, %v978
        %v1161 = vmul.f32 %v979, %v979
        %v1162 = vmul.f32 %v980, %v980
        %v1163 = vmul.f32 %v981, %v981
        %v1164 = vmul.f32 %v982, %v982
        %v1165 = vmul.f32 %v983, %v983
        %v1166 = vmul.f32 %v984, %v984
        %v1167 = vmul.f32 %v985, %v985
        %v1168 = vmul.f32 %v986, %v986
        %v1169 = vmul.f32 %v987, %v987
        %v1170 = vmul.f32 %v988, %v988
        %v1171 = vmul.f32 %v989, %v989
        %v1172 = vmul.f32 %v990, %v990
        %v1173 = vmul.f32 %v991, %v991
        %v1174 = vmul.f32 %v992, %v992
        %v1175 = vmul.f32 %v993, %v993
        %v1176 = vmul.f32 %v994, %v994
        %v1177 = vmul.f32 %v995, %v995
        %v1178 = vmul.f32 %v996, %v996
        %v1179 = vmul.f32 %v997, %v997
        %v1180 = vmul.f32 %v998, %v998
        %v1181 = vmul.f32 %v999, %v999
        %v1182 = vmul.f32 %v1000, %v1000
        %v1183 = vmul.f32 %v1001, %v1001
        %v1184 = vmul.f32 %v1002, %v1002
        %v1185 = vmul.f32 %v1003, %v1003
        %v1186 = vmul.f32 %v1004, %v1004
        %v1187 = vmul.f32 %v1005, %v1005
        %v1188 = vmul.f32 %v1006, %v1006
        %v1189 = vmul.f32 %v1007, %v1007
        %v1190 = vmul.f32 %v1008, %v1008
        %v1191 = vmul.f32 %v1009, %v1009
        %v1192 = vmul.f32 %v1010, %v1010
        %v1193 = vmul.f32 %v1011, %v1011
        %v1194 = vmul.f32 %v1012, %v1012
        %v1195 = vmul.f32 %v1013, %v1013
        %v1196 = vmul.f32 %v1014, %v1014
        %v1197 = vmul.f32 %v1015, %v1015
        %v1198 = vmul.f32 %v1016, %v1016
        %v1199 = vmul.f32 %v1017, %v1017
        %v1200 = vmul.f32 %v1018, %v1018
        %v1201 = vmul.f32 %v1019, %v1019
        %v1202 = vmul.f32 %v1020, %v1020
        %v1203 = vmul.f32 %v1021, %v1021
        %v1204 = vsel %vm384, %v1023, 0.0
        %v1205 = vadd.f32 %v1022, %v1204
        %1206 = vadd.xlane.f32.xlu0 %v1205
        %v1207 = vpop.xlane.xlu0 %1206
        %v1208 = vsel %vm384, %v1025, 0.0
        %v1209 = vadd.f32 %v1024, %v1208
        %1210 = vadd.xlane.f32.xlu0 %v1209
        %v1211 = vpop.xlane.xlu0 %1210
        %v1212 = vsel %vm384, %v1027, 0.0
        %v1213 = vadd.f32 %v1026, %v1212
        %1214 = vadd.xlane.f32.xlu0 %v1213
        %v1215 = vpop.xlane.xlu0 %1214
        %v1216 = vsel %vm384, %v1029, 0.0
        %v1217 = vadd.f32 %v1028, %v1216
        %1218 = vadd.xlane.f32.xlu0 %v1217
        %v1219 = vpop.xlane.xlu0 %1218
        %v1220 = vsel %vm384, %v1031, 0.0
        %v1221 = vadd.f32 %v1030, %v1220
        %1222 = vadd.xlane.f32.xlu0 %v1221
        %v1223 = vpop.xlane.xlu0 %1222
        %v1224 = vsel %vm384, %v1033, 0.0
        %v1225 = vadd.f32 %v1032, %v1224
        %1226 = vadd.xlane.f32.xlu0 %v1225
        %v1227 = vpop.xlane.xlu0 %1226
        %v1228 = vsel %vm384, %v1035, 0.0
        %v1229 = vadd.f32 %v1034, %v1228
        %1230 = vadd.xlane.f32.xlu0 %v1229
        %v1231 = vpop.xlane.xlu0 %1230
        %v1232 = vsel %vm384, %v1037, 0.0
        %v1233 = vadd.f32 %v1036, %v1232
        %1234 = vadd.xlane.f32.xlu0 %v1233
        %v1235 = vpop.xlane.xlu0 %1234
        %v1236 = vsel %vm384, %v1039, 0.0
        %v1237 = vadd.f32 %v1038, %v1236
        %1238 = vadd.xlane.f32.xlu0 %v1237
        %v1239 = vpop.xlane.xlu0 %1238
        %v1240 = vsel %vm384, %v1041, 0.0
        %v1241 = vadd.f32 %v1040, %v1240
        %1242 = vadd.xlane.f32.xlu0 %v1241
        %v1243 = vpop.xlane.xlu0 %1242
        %v1244 = vsel %vm384, %v1043, 0.0
        %v1245 = vadd.f32 %v1042, %v1244
        %1246 = vadd.xlane.f32.xlu0 %v1245
        %v1247 = vpop.xlane.xlu0 %1246
        %v1248 = vsel %vm384, %v1045, 0.0
        %v1249 = vadd.f32 %v1044, %v1248
        %1250 = vadd.xlane.f32.xlu0 %v1249
        %v1251 = vpop.xlane.xlu0 %1250
        %v1252 = vsel %vm384, %v1047, 0.0
        %v1253 = vadd.f32 %v1046, %v1252
        %1254 = vadd.xlane.f32.xlu0 %v1253
        %v1255 = vpop.xlane.xlu0 %1254
        %v1256 = vsel %vm384, %v1049, 0.0
        %v1257 = vadd.f32 %v1048, %v1256
        %1258 = vadd.xlane.f32.xlu0 %v1257
        %v1259 = vpop.xlane.xlu0 %1258
        %v1260 = vsel %vm384, %v1051, 0.0
        %v1261 = vadd.f32 %v1050, %v1260
        %1262 = vadd.xlane.f32.xlu0 %v1261
        %v1263 = vpop.xlane.xlu0 %1262
        %v1264 = vsel %vm384, %v1053, 0.0
        %v1265 = vadd.f32 %v1052, %v1264
        %1266 = vadd.xlane.f32.xlu0 %v1265
        %v1267 = vpop.xlane.xlu0 %1266
        %v1268 = vsel %vm384, %v1055, 0.0
        %v1269 = vadd.f32 %v1054, %v1268
        %1270 = vadd.xlane.f32.xlu0 %v1269
        %v1271 = vpop.xlane.xlu0 %1270
        %v1272 = vsel %vm384, %v1057, 0.0
        %v1273 = vadd.f32 %v1056, %v1272
        %1274 = vadd.xlane.f32.xlu0 %v1273
        %v1275 = vpop.xlane.xlu0 %1274
        %v1276 = vsel %vm384, %v1059, 0.0
        %v1277 = vadd.f32 %v1058, %v1276
        %1278 = vadd.xlane.f32.xlu0 %v1277
        %v1279 = vpop.xlane.xlu0 %1278
        %v1280 = vsel %vm384, %v1061, 0.0
        %v1281 = vadd.f32 %v1060, %v1280
        %1282 = vadd.xlane.f32.xlu0 %v1281
        %v1283 = vpop.xlane.xlu0 %1282
        %v1284 = vsel %vm384, %v1063, 0.0
        %v1285 = vadd.f32 %v1062, %v1284
        %1286 = vadd.xlane.f32.xlu0 %v1285
        %v1287 = vpop.xlane.xlu0 %1286
        %v1288 = vsel %vm384, %v1065, 0.0
        %v1289 = vadd.f32 %v1064, %v1288
        %1290 = vadd.xlane.f32.xlu0 %v1289
        %v1291 = vpop.xlane.xlu0 %1290
        %v1292 = vsel %vm384, %v1067, 0.0
        %v1293 = vadd.f32 %v1066, %v1292
        %1294 = vadd.xlane.f32.xlu0 %v1293
        %v1295 = vpop.xlane.xlu0 %1294
        %v1296 = vsel %vm384, %v1069, 0.0
        %v1297 = vadd.f32 %v1068, %v1296
        %1298 = vadd.xlane.f32.xlu0 %v1297
        %v1299 = vpop.xlane.xlu0 %1298
        %v1300 = vsel %vm384, %v1071, 0.0
        %v1301 = vadd.f32 %v1070, %v1300
        %1302 = vadd.xlane.f32.xlu0 %v1301
        %v1303 = vpop.xlane.xlu0 %1302
        %v1304 = vsel %vm384, %v1073, 0.0
        %v1305 = vadd.f32 %v1072, %v1304
        %1306 = vadd.xlane.f32.xlu0 %v1305
        %v1307 = vpop.xlane.xlu0 %1306
        %v1308 = vsel %vm384, %v1075, 0.0
        %v1309 = vadd.f32 %v1074, %v1308
        %1310 = vadd.xlane.f32.xlu0 %v1309
        %v1311 = vpop.xlane.xlu0 %1310
        %v1312 = vsel %vm384, %v1077, 0.0
        %v1313 = vadd.f32 %v1076, %v1312
        %1314 = vadd.xlane.f32.xlu0 %v1313
        %v1315 = vpop.xlane.xlu0 %1314
        %v1316 = vsel %vm384, %v1079, 0.0
        %v1317 = vadd.f32 %v1078, %v1316
        %1318 = vadd.xlane.f32.xlu0 %v1317
        %v1319 = vpop.xlane.xlu0 %1318
        %v1320 = vsel %vm384, %v1081, 0.0
        %v1321 = vadd.f32 %v1080, %v1320
        %1322 = vadd.xlane.f32.xlu0 %v1321
        %v1323 = vpop.xlane.xlu0 %1322
        %v1324 = vsel %vm384, %v1083, 0.0
        %v1325 = vadd.f32 %v1082, %v1324
        %1326 = vadd.xlane.f32.xlu0 %v1325
        %v1327 = vpop.xlane.xlu0 %1326
        %v1328 = vsel %vm384, %v1085, 0.0
        %v1329 = vadd.f32 %v1084, %v1328
        %1330 = vadd.xlane.f32.xlu0 %v1329
        %v1331 = vpop.xlane.xlu0 %1330
        %v1332 = vsel %vm384, %v1087, 0.0
        %v1333 = vadd.f32 %v1086, %v1332
        %1334 = vadd.xlane.f32.xlu0 %v1333
        %v1335 = vpop.xlane.xlu0 %1334
        %v1336 = vsel %vm384, %v1089, 0.0
        %v1337 = vadd.f32 %v1088, %v1336
        %1338 = vadd.xlane.f32.xlu0 %v1337
        %v1339 = vpop.xlane.xlu0 %1338
        %v1340 = vsel %vm384, %v1091, 0.0
        %v1341 = vadd.f32 %v1090, %v1340
        %1342 = vadd.xlane.f32.xlu0 %v1341
        %v1343 = vpop.xlane.xlu0 %1342
        %v1344 = vsel %vm384, %v1093, 0.0
        %v1345 = vadd.f32 %v1092, %v1344
        %1346 = vadd.xlane.f32.xlu0 %v1345
        %v1347 = vpop.xlane.xlu0 %1346
        %v1348 = vsel %vm384, %v1095, 0.0
        %v1349 = vadd.f32 %v1094, %v1348
        %1350 = vadd.xlane.f32.xlu0 %v1349
        %v1351 = vpop.xlane.xlu0 %1350
        %v1352 = vsel %vm384, %v1097, 0.0
        %v1353 = vadd.f32 %v1096, %v1352
        %1354 = vadd.xlane.f32.xlu0 %v1353
        %v1355 = vpop.xlane.xlu0 %1354
        %v1356 = vsel %vm384, %v1099, 0.0
        %v1357 = vadd.f32 %v1098, %v1356
        %1358 = vadd.xlane.f32.xlu0 %v1357
        %v1359 = vpop.xlane.xlu0 %1358
        %v1360 = vsel %vm384, %v1101, 0.0
        %v1361 = vadd.f32 %v1100, %v1360
        %1362 = vadd.xlane.f32.xlu0 %v1361
        %v1363 = vpop.xlane.xlu0 %1362
        %v1364 = vsel %vm384, %v1103, 0.0
        %v1365 = vadd.f32 %v1102, %v1364
        %1366 = vadd.xlane.f32.xlu0 %v1365
        %v1367 = vpop.xlane.xlu0 %1366
        %v1368 = vsel %vm384, %v1105, 0.0
        %v1369 = vadd.f32 %v1104, %v1368
        %1370 = vadd.xlane.f32.xlu0 %v1369
        %v1371 = vpop.xlane.xlu0 %1370
        %v1372 = vsel %vm384, %v1107, 0.0
        %v1373 = vadd.f32 %v1106, %v1372
        %1374 = vadd.xlane.f32.xlu0 %v1373
        %v1375 = vpop.xlane.xlu0 %1374
        %v1376 = vsel %vm384, %v1109, 0.0
        %v1377 = vadd.f32 %v1108, %v1376
        %1378 = vadd.xlane.f32.xlu0 %v1377
        %v1379 = vpop.xlane.xlu0 %1378
        %v1380 = vsel %vm384, %v1111, 0.0
        %v1381 = vadd.f32 %v1110, %v1380
        %1382 = vadd.xlane.f32.xlu0 %v1381
        %v1383 = vpop.xlane.xlu0 %1382
        %v1384 = vsel %vm384, %v1113, 0.0
        %v1385 = vadd.f32 %v1112, %v1384
        %1386 = vadd.xlane.f32.xlu0 %v1385
        %v1387 = vpop.xlane.xlu0 %1386
        %v1388 = vsel %vm384, %v1115, 0.0
        %v1389 = vadd.f32 %v1114, %v1388
        %1390 = vadd.xlane.f32.xlu0 %v1389
        %v1391 = vpop.xlane.xlu0 %1390
        %v1392 = vsel %vm384, %v1117, 0.0
        %v1393 = vadd.f32 %v1116, %v1392
        %1394 = vadd.xlane.f32.xlu0 %v1393
        %v1395 = vpop.xlane.xlu0 %1394
        %v1396 = vsel %vm384, %v1119, 0.0
        %v1397 = vadd.f32 %v1118, %v1396
        %1398 = vadd.xlane.f32.xlu0 %v1397
        %v1399 = vpop.xlane.xlu0 %1398
        %v1400 = vsel %vm384, %v1121, 0.0
        %v1401 = vadd.f32 %v1120, %v1400
        %1402 = vadd.xlane.f32.xlu0 %v1401
        %v1403 = vpop.xlane.xlu0 %1402
        %v1404 = vsel %vm384, %v1123, 0.0
        %v1405 = vadd.f32 %v1122, %v1404
        %1406 = vadd.xlane.f32.xlu0 %v1405
        %v1407 = vpop.xlane.xlu0 %1406
        %v1408 = vsel %vm384, %v1125, 0.0
        %v1409 = vadd.f32 %v1124, %v1408
        %1410 = vadd.xlane.f32.xlu0 %v1409
        %v1411 = vpop.xlane.xlu0 %1410
        %v1412 = vsel %vm384, %v1127, 0.0
        %v1413 = vadd.f32 %v1126, %v1412
        %1414 = vadd.xlane.f32.xlu0 %v1413
        %v1415 = vpop.xlane.xlu0 %1414
        %v1416 = vsel %vm384, %v1129, 0.0
        %v1417 = vadd.f32 %v1128, %v1416
        %1418 = vadd.xlane.f32.xlu0 %v1417
        %v1419 = vpop.xlane.xlu0 %1418
        %v1420 = vsel %vm384, %v1131, 0.0
        %v1421 = vadd.f32 %v1130, %v1420
        %1422 = vadd.xlane.f32.xlu0 %v1421
        %v1423 = vpop.xlane.xlu0 %1422
        %v1424 = vsel %vm384, %v1133, 0.0
        %v1425 = vadd.f32 %v1132, %v1424
        %1426 = vadd.xlane.f32.xlu0 %v1425
        %v1427 = vpop.xlane.xlu0 %1426
        %v1428 = vsel %vm384, %v1135, 0.0
        %v1429 = vadd.f32 %v1134, %v1428
        %1430 = vadd.xlane.f32.xlu0 %v1429
        %v1431 = vpop.xlane.xlu0 %1430
        %v1432 = vsel %vm384, %v1137, 0.0
        %v1433 = vadd.f32 %v1136, %v1432
        %1434 = vadd.xlane.f32.xlu0 %v1433
        %v1435 = vpop.xlane.xlu0 %1434
        %v1436 = vsel %vm384, %v1139, 0.0
        %v1437 = vadd.f32 %v1138, %v1436
        %1438 = vadd.xlane.f32.xlu0 %v1437
        %v1439 = vpop.xlane.xlu0 %1438
        %v1440 = vsel %vm384, %v1141, 0.0
        %v1441 = vadd.f32 %v1140, %v1440
        %1442 = vadd.xlane.f32.xlu0 %v1441
        %v1443 = vpop.xlane.xlu0 %1442
        %v1444 = vsel %vm384, %v1143, 0.0
        %v1445 = vadd.f32 %v1142, %v1444
        %1446 = vadd.xlane.f32.xlu0 %v1445
        %v1447 = vpop.xlane.xlu0 %1446
        %v1448 = vsel %vm384, %v1145, 0.0
        %v1449 = vadd.f32 %v1144, %v1448
        %1450 = vadd.xlane.f32.xlu0 %v1449
        %v1451 = vpop.xlane.xlu0 %1450
        %v1452 = vsel %vm384, %v1147, 0.0
        %v1453 = vadd.f32 %v1146, %v1452
        %1454 = vadd.xlane.f32.xlu0 %v1453
        %v1455 = vpop.xlane.xlu0 %1454
        %v1456 = vsel %vm384, %v1149, 0.0
        %v1457 = vadd.f32 %v1148, %v1456
        %1458 = vadd.xlane.f32.xlu0 %v1457
        %v1459 = vpop.xlane.xlu0 %1458
        %v1460 = vsel %vm384, %v1151, 0.0
        %v1461 = vadd.f32 %v1150, %v1460
        %1462 = vadd.xlane.f32.xlu0 %v1461
        %v1463 = vpop.xlane.xlu0 %1462
        %v1464 = vsel %vm384, %v1153, 0.0
        %v1465 = vadd.f32 %v1152, %v1464
        %1466 = vadd.xlane.f32.xlu0 %v1465
        %v1467 = vpop.xlane.xlu0 %1466
        %v1468 = vsel %vm384, %v1155, 0.0
        %v1469 = vadd.f32 %v1154, %v1468
        %1470 = vadd.xlane.f32.xlu0 %v1469
        %v1471 = vpop.xlane.xlu0 %1470
        %v1472 = vsel %vm384, %v1157, 0.0
        %v1473 = vadd.f32 %v1156, %v1472
        %1474 = vadd.xlane.f32.xlu0 %v1473
        %v1475 = vpop.xlane.xlu0 %1474
        %v1476 = vsel %vm384, %v1159, 0.0
        %v1477 = vadd.f32 %v1158, %v1476
        %1478 = vadd.xlane.f32.xlu0 %v1477
        %v1479 = vpop.xlane.xlu0 %1478
        %v1480 = vsel %vm384, %v1161, 0.0
        %v1481 = vadd.f32 %v1160, %v1480
        %1482 = vadd.xlane.f32.xlu0 %v1481
        %v1483 = vpop.xlane.xlu0 %1482
        %v1484 = vsel %vm384, %v1163, 0.0
        %v1485 = vadd.f32 %v1162, %v1484
        %1486 = vadd.xlane.f32.xlu0 %v1485
        %v1487 = vpop.xlane.xlu0 %1486
        %v1488 = vsel %vm384, %v1165, 0.0
        %v1489 = vadd.f32 %v1164, %v1488
        %1490 = vadd.xlane.f32.xlu0 %v1489
        %v1491 = vpop.xlane.xlu0 %1490
        %v1492 = vsel %vm384, %v1167, 0.0
        %v1493 = vadd.f32 %v1166, %v1492
        %1494 = vadd.xlane.f32.xlu0 %v1493
        %v1495 = vpop.xlane.xlu0 %1494
        %v1496 = vsel %vm384, %v1169, 0.0
        %v1497 = vadd.f32 %v1168, %v1496
        %1498 = vadd.xlane.f32.xlu0 %v1497
        %v1499 = vpop.xlane.xlu0 %1498
        %v1500 = vsel %vm384, %v1171, 0.0
        %v1501 = vadd.f32 %v1170, %v1500
        %1502 = vadd.xlane.f32.xlu0 %v1501
        %v1503 = vpop.xlane.xlu0 %1502
        %v1504 = vsel %vm384, %v1173, 0.0
        %v1505 = vadd.f32 %v1172, %v1504
        %1506 = vadd.xlane.f32.xlu0 %v1505
        %v1507 = vpop.xlane.xlu0 %1506
        %v1508 = vsel %vm384, %v1175, 0.0
        %v1509 = vadd.f32 %v1174, %v1508
        %1510 = vadd.xlane.f32.xlu0 %v1509
        %v1511 = vpop.xlane.xlu0 %1510
        %v1512 = vsel %vm384, %v1177, 0.0
        %v1513 = vadd.f32 %v1176, %v1512
        %1514 = vadd.xlane.f32.xlu0 %v1513
        %v1515 = vpop.xlane.xlu0 %1514
        %v1516 = vsel %vm384, %v1179, 0.0
        %v1517 = vadd.f32 %v1178, %v1516
        %1518 = vadd.xlane.f32.xlu0 %v1517
        %v1519 = vpop.xlane.xlu0 %1518
        %v1520 = vsel %vm384, %v1181, 0.0
        %v1521 = vadd.f32 %v1180, %v1520
        %1522 = vadd.xlane.f32.xlu0 %v1521
        %v1523 = vpop.xlane.xlu0 %1522
        %v1524 = vsel %vm384, %v1183, 0.0
        %v1525 = vadd.f32 %v1182, %v1524
        %1526 = vadd.xlane.f32.xlu0 %v1525
        %v1527 = vpop.xlane.xlu0 %1526
        %v1528 = vsel %vm384, %v1185, 0.0
        %v1529 = vadd.f32 %v1184, %v1528
        %1530 = vadd.xlane.f32.xlu0 %v1529
        %v1531 = vpop.xlane.xlu0 %1530
        %v1532 = vsel %vm384, %v1187, 0.0
        %v1533 = vadd.f32 %v1186, %v1532
        %1534 = vadd.xlane.f32.xlu0 %v1533
        %v1535 = vpop.xlane.xlu0 %1534
        %v1536 = vsel %vm384, %v1189, 0.0
        %v1537 = vadd.f32 %v1188, %v1536
        %1538 = vadd.xlane.f32.xlu0 %v1537
        %v1539 = vpop.xlane.xlu0 %1538
        %v1540 = vsel %vm384, %v1191, 0.0
        %v1541 = vadd.f32 %v1190, %v1540
        %1542 = vadd.xlane.f32.xlu0 %v1541
        %v1543 = vpop.xlane.xlu0 %1542
        %v1544 = vsel %vm384, %v1193, 0.0
        %v1545 = vadd.f32 %v1192, %v1544
        %1546 = vadd.xlane.f32.xlu0 %v1545
        %v1547 = vpop.xlane.xlu0 %1546
        %v1548 = vsel %vm384, %v1195, 0.0
        %v1549 = vadd.f32 %v1194, %v1548
        %1550 = vadd.xlane.f32.xlu0 %v1549
        %v1551 = vpop.xlane.xlu0 %1550
        %v1552 = vsel %vm384, %v1197, 0.0
        %v1553 = vadd.f32 %v1196, %v1552
        %1554 = vadd.xlane.f32.xlu0 %v1553
        %v1555 = vpop.xlane.xlu0 %1554
        %v1556 = vsel %vm384, %v1199, 0.0
        %v1557 = vadd.f32 %v1198, %v1556
        %1558 = vadd.xlane.f32.xlu0 %v1557
        %v1559 = vpop.xlane.xlu0 %1558
        %v1560 = vsel %vm384, %v1201, 0.0
        %v1561 = vadd.f32 %v1200, %v1560
        %1562 = vadd.xlane.f32.xlu0 %v1561
        %v1563 = vpop.xlane.xlu0 %1562
        %v1564 = vsel %vm384, %v1203, 0.0
        %v1565 = vadd.f32 %v1202, %v1564
        %1566 = vadd.xlane.f32.xlu0 %v1565
        %v1567 = vpop.xlane.xlu0 %1566
        %v1568 = vmul.f32 %v1207, 0.0051020407
        %v1569 = vmul.f32 %v1211, 0.0051020407
        %v1570 = vmul.f32 %v1215, 0.0051020407
        %v1571 = vmul.f32 %v1219, 0.0051020407
        %v1572 = vmul.f32 %v1223, 0.0051020407
        %v1573 = vmul.f32 %v1227, 0.0051020407
        %v1574 = vmul.f32 %v1231, 0.0051020407
        %v1575 = vmul.f32 %v1235, 0.0051020407
        %v1576 = vmul.f32 %v1239, 0.0051020407
        %v1577 = vmul.f32 %v1243, 0.0051020407
        %v1578 = vmul.f32 %v1247, 0.0051020407
        %v1579 = vmul.f32 %v1251, 0.0051020407
        %v1580 = vmul.f32 %v1255, 0.0051020407
        %v1581 = vmul.f32 %v1259, 0.0051020407
        %v1582 = vmul.f32 %v1263, 0.0051020407
        %v1583 = vmul.f32 %v1267, 0.0051020407
        %v1584 = vmul.f32 %v1271, 0.0051020407
        %v1585 = vmul.f32 %v1275, 0.0051020407
        %v1586 = vmul.f32 %v1279, 0.0051020407
        %v1587 = vmul.f32 %v1283, 0.0051020407
        %v1588 = vmul.f32 %v1287, 0.0051020407
        %v1589 = vmul.f32 %v1291, 0.0051020407
        %v1590 = vmul.f32 %v1295, 0.0051020407
        %v1591 = vmul.f32 %v1299, 0.0051020407
        %v1592 = vmul.f32 %v1303, 0.0051020407
        %v1593 = vmul.f32 %v1307, 0.0051020407
        %v1594 = vmul.f32 %v1311, 0.0051020407
        %v1595 = vmul.f32 %v1315, 0.0051020407
        %v1596 = vmul.f32 %v1319, 0.0051020407
        %v1597 = vmul.f32 %v1323, 0.0051020407
        %v1598 = vmul.f32 %v1327, 0.0051020407
        %v1599 = vmul.f32 %v1331, 0.0051020407
        %v1600 = vmul.f32 %v1335, 0.0051020407
        %v1601 = vmul.f32 %v1339, 0.0051020407
        %v1602 = vmul.f32 %v1343, 0.0051020407
        %v1603 = vmul.f32 %v1347, 0.0051020407
        %v1604 = vmul.f32 %v1351, 0.0051020407
        %v1605 = vmul.f32 %v1355, 0.0051020407
        %v1606 = vmul.f32 %v1359, 0.0051020407
        %v1607 = vmul.f32 %v1363, 0.0051020407
        %v1608 = vmul.f32 %v1367, 0.0051020407
        %v1609 = vmul.f32 %v1371, 0.0051020407
        %v1610 = vmul.f32 %v1375, 0.0051020407
        %v1611 = vmul.f32 %v1379, 0.0051020407
        %v1612 = vmul.f32 %v1383, 0.0051020407
        %v1613 = vmul.f32 %v1387, 0.0051020407
        %v1614 = vmul.f32 %v1391, 0.0051020407
        %v1615 = vmul.f32 %v1395, 0.0051020407
        %v1616 = vmul.f32 %v1399, 0.0051020407
        %v1617 = vmul.f32 %v1403, 0.0051020407
        %v1618 = vmul.f32 %v1407, 0.0051020407
        %v1619 = vmul.f32 %v1411, 0.0051020407
        %v1620 = vmul.f32 %v1415, 0.0051020407
        %v1621 = vmul.f32 %v1419, 0.0051020407
        %v1622 = vmul.f32 %v1423, 0.0051020407
        %v1623 = vmul.f32 %v1427, 0.0051020407
        %v1624 = vmul.f32 %v1431, 0.0051020407
        %v1625 = vmul.f32 %v1435, 0.0051020407
        %v1626 = vmul.f32 %v1439, 0.0051020407
        %v1627 = vmul.f32 %v1443, 0.0051020407
        %v1628 = vmul.f32 %v1447, 0.0051020407
        %v1629 = vmul.f32 %v1451, 0.0051020407
        %v1630 = vmul.f32 %v1455, 0.0051020407
        %v1631 = vmul.f32 %v1459, 0.0051020407
        %v1632 = vmul.f32 %v1463, 0.0051020407
        %v1633 = vmul.f32 %v1467, 0.0051020407
        %v1634 = vmul.f32 %v1471, 0.0051020407
        %v1635 = vmul.f32 %v1475, 0.0051020407
        %v1636 = vmul.f32 %v1479, 0.0051020407
        %v1637 = vmul.f32 %v1483, 0.0051020407
        %v1638 = vmul.f32 %v1487, 0.0051020407
        %v1639 = vmul.f32 %v1491, 0.0051020407
        %v1640 = vmul.f32 %v1495, 0.0051020407
        %v1641 = vmul.f32 %v1499, 0.0051020407
        %v1642 = vmul.f32 %v1503, 0.0051020407
        %v1643 = vmul.f32 %v1507, 0.0051020407
        %v1644 = vmul.f32 %v1511, 0.0051020407
        %v1645 = vmul.f32 %v1515, 0.0051020407
        %v1646 = vmul.f32 %v1519, 0.0051020407
        %v1647 = vmul.f32 %v1523, 0.0051020407
        %v1648 = vmul.f32 %v1527, 0.0051020407
        %v1649 = vmul.f32 %v1531, 0.0051020407
        %v1650 = vmul.f32 %v1535, 0.0051020407
        %v1651 = vmul.f32 %v1539, 0.0051020407
        %v1652 = vmul.f32 %v1543, 0.0051020407
        %v1653 = vmul.f32 %v1547, 0.0051020407
        %v1654 = vmul.f32 %v1551, 0.0051020407
        %v1655 = vmul.f32 %v1555, 0.0051020407
        %v1656 = vmul.f32 %v1559, 0.0051020407
        %v1657 = vmul.f32 %v1563, 0.0051020407
        %v1658 = vmul.f32 %v1567, 0.0051020407
        %v1659 = vadd.f32 %v1568, 1e-05
        %v1660 = vadd.f32 %v1569, 1e-05
        %v1661 = vadd.f32 %v1570, 1e-05
        %v1662 = vadd.f32 %v1571, 1e-05
        %v1663 = vadd.f32 %v1572, 1e-05
        %v1664 = vadd.f32 %v1573, 1e-05
        %v1665 = vadd.f32 %v1574, 1e-05
        %v1666 = vadd.f32 %v1575, 1e-05
        %v1667 = vadd.f32 %v1576, 1e-05
        %v1668 = vadd.f32 %v1577, 1e-05
        %v1669 = vadd.f32 %v1578, 1e-05
        %v1670 = vadd.f32 %v1579, 1e-05
        %v1671 = vadd.f32 %v1580, 1e-05
        %v1672 = vadd.f32 %v1581, 1e-05
        %v1673 = vadd.f32 %v1582, 1e-05
        %v1674 = vadd.f32 %v1583, 1e-05
        %v1675 = vadd.f32 %v1584, 1e-05
        %v1676 = vadd.f32 %v1585, 1e-05
        %v1677 = vadd.f32 %v1586, 1e-05
        %v1678 = vadd.f32 %v1587, 1e-05
        %v1679 = vadd.f32 %v1588, 1e-05
        %v1680 = vadd.f32 %v1589, 1e-05
        %v1681 = vadd.f32 %v1590, 1e-05
        %v1682 = vadd.f32 %v1591, 1e-05
        %v1683 = vadd.f32 %v1592, 1e-05
        %v1684 = vadd.f32 %v1593, 1e-05
        %v1685 = vadd.f32 %v1594, 1e-05
        %v1686 = vadd.f32 %v1595, 1e-05
        %v1687 = vadd.f32 %v1596, 1e-05
        %v1688 = vadd.f32 %v1597, 1e-05
        %v1689 = vadd.f32 %v1598, 1e-05
        %v1690 = vadd.f32 %v1599, 1e-05
        %v1691 = vadd.f32 %v1600, 1e-05
        %v1692 = vadd.f32 %v1601, 1e-05
        %v1693 = vadd.f32 %v1602, 1e-05
        %v1694 = vadd.f32 %v1603, 1e-05
        %v1695 = vadd.f32 %v1604, 1e-05
        %v1696 = vadd.f32 %v1605, 1e-05
        %v1697 = vadd.f32 %v1606, 1e-05
        %v1698 = vadd.f32 %v1607, 1e-05
        %v1699 = vadd.f32 %v1608, 1e-05
        %v1700 = vadd.f32 %v1609, 1e-05
        %v1701 = vadd.f32 %v1610, 1e-05
        %v1702 = vadd.f32 %v1611, 1e-05
        %v1703 = vadd.f32 %v1612, 1e-05
        %v1704 = vadd.f32 %v1613, 1e-05
        %v1705 = vadd.f32 %v1614, 1e-05
        %v1706 = vadd.f32 %v1615, 1e-05
        %v1707 = vadd.f32 %v1616, 1e-05
        %v1708 = vadd.f32 %v1617, 1e-05
        %v1709 = vadd.f32 %v1618, 1e-05
        %v1710 = vadd.f32 %v1619, 1e-05
        %v1711 = vadd.f32 %v1620, 1e-05
        %v1712 = vadd.f32 %v1621, 1e-05
        %v1713 = vadd.f32 %v1622, 1e-05
        %v1714 = vadd.f32 %v1623, 1e-05
        %v1715 = vadd.f32 %v1624, 1e-05
        %v1716 = vadd.f32 %v1625, 1e-05
        %v1717 = vadd.f32 %v1626, 1e-05
        %v1718 = vadd.f32 %v1627, 1e-05
        %v1719 = vadd.f32 %v1628, 1e-05
        %v1720 = vadd.f32 %v1629, 1e-05
        %v1721 = vadd.f32 %v1630, 1e-05
        %v1722 = vadd.f32 %v1631, 1e-05
        %v1723 = vadd.f32 %v1632, 1e-05
        %v1724 = vadd.f32 %v1633, 1e-05
        %v1725 = vadd.f32 %v1634, 1e-05
        %v1726 = vadd.f32 %v1635, 1e-05
        %v1727 = vadd.f32 %v1636, 1e-05
        %v1728 = vadd.f32 %v1637, 1e-05
        %v1729 = vadd.f32 %v1638, 1e-05
        %v1730 = vadd.f32 %v1639, 1e-05
        %v1731 = vadd.f32 %v1640, 1e-05
        %v1732 = vadd.f32 %v1641, 1e-05
        %v1733 = vadd.f32 %v1642, 1e-05
        %v1734 = vadd.f32 %v1643, 1e-05
        %v1735 = vadd.f32 %v1644, 1e-05
        %v1736 = vadd.f32 %v1645, 1e-05
        %v1737 = vadd.f32 %v1646, 1e-05
        %v1738 = vadd.f32 %v1647, 1e-05
        %v1739 = vadd.f32 %v1648, 1e-05
        %v1740 = vadd.f32 %v1649, 1e-05
        %v1741 = vadd.f32 %v1650, 1e-05
        %v1742 = vadd.f32 %v1651, 1e-05
        %v1743 = vadd.f32 %v1652, 1e-05
        %v1744 = vadd.f32 %v1653, 1e-05
        %v1745 = vadd.f32 %v1654, 1e-05
        %v1746 = vadd.f32 %v1655, 1e-05
        %v1747 = vadd.f32 %v1656, 1e-05
        %v1748 = vadd.f32 %v1657, 1e-05
        %v1749 = vadd.f32 %v1658, 1e-05
        %v1750 = vrsqrt.pop %v1659
        %v1751 = vrsqrt.pop %v1660
        %v1752 = vrsqrt.pop %v1661
        %v1753 = vrsqrt.pop %v1662
        %v1754 = vrsqrt.pop %v1663
        %v1755 = vrsqrt.pop %v1664
        %v1756 = vrsqrt.pop %v1665
        %v1757 = vrsqrt.pop %v1666
        %v1758 = vrsqrt.pop %v1667
        %v1759 = vrsqrt.pop %v1668
        %v1760 = vrsqrt.pop %v1669
        %v1761 = vrsqrt.pop %v1670
        %v1762 = vrsqrt.pop %v1671
        %v1763 = vrsqrt.pop %v1672
        %v1764 = vrsqrt.pop %v1673
        %v1765 = vrsqrt.pop %v1674
        %v1766 = vrsqrt.pop %v1675
        %v1767 = vrsqrt.pop %v1676
        %v1768 = vrsqrt.pop %v1677
        %v1769 = vrsqrt.pop %v1678
        %v1770 = vrsqrt.pop %v1679
        %v1771 = vrsqrt.pop %v1680
        %v1772 = vrsqrt.pop %v1681
        %v1773 = vrsqrt.pop %v1682
        %v1774 = vrsqrt.pop %v1683
        %v1775 = vrsqrt.pop %v1684
        %v1776 = vrsqrt.pop %v1685
        %v1777 = vrsqrt.pop %v1686
        %v1778 = vrsqrt.pop %v1687
        %v1779 = vrsqrt.pop %v1688
        %v1780 = vrsqrt.pop %v1689
        %v1781 = vrsqrt.pop %v1690
        %v1782 = vrsqrt.pop %v1691
        %v1783 = vrsqrt.pop %v1692
        %v1784 = vrsqrt.pop %v1693
        %v1785 = vrsqrt.pop %v1694
        %v1786 = vrsqrt.pop %v1695
        %v1787 = vrsqrt.pop %v1696
        %v1788 = vrsqrt.pop %v1697
        %v1789 = vrsqrt.pop %v1698
        %v1790 = vrsqrt.pop %v1699
        %v1791 = vrsqrt.pop %v1700
        %v1792 = vrsqrt.pop %v1701
        %v1793 = vrsqrt.pop %v1702
        %v1794 = vrsqrt.pop %v1703
        %v1795 = vrsqrt.pop %v1704
        %v1796 = vrsqrt.pop %v1705
        %v1797 = vrsqrt.pop %v1706
        %v1798 = vrsqrt.pop %v1707
        %v1799 = vrsqrt.pop %v1708
        %v1800 = vrsqrt.pop %v1709
        %v1801 = vrsqrt.pop %v1710
        %v1802 = vrsqrt.pop %v1711
        %v1803 = vrsqrt.pop %v1712
        %v1804 = vrsqrt.pop %v1713
        %v1805 = vrsqrt.pop %v1714
        %v1806 = vrsqrt.pop %v1715
        %v1807 = vrsqrt.pop %v1716
        %v1808 = vrsqrt.pop %v1717
        %v1809 = vrsqrt.pop %v1718
        %v1810 = vrsqrt.pop %v1719
        %v1811 = vrsqrt.pop %v1720
        %v1812 = vrsqrt.pop %v1721
        %v1813 = vrsqrt.pop %v1722
        %v1814 = vrsqrt.pop %v1723
        %v1815 = vrsqrt.pop %v1724
        %v1816 = vrsqrt.pop %v1725
        %v1817 = vrsqrt.pop %v1726
        %v1818 = vrsqrt.pop %v1727
        %v1819 = vrsqrt.pop %v1728
        %v1820 = vrsqrt.pop %v1729
        %v1821 = vrsqrt.pop %v1730
        %v1822 = vrsqrt.pop %v1731
        %v1823 = vrsqrt.pop %v1732
        %v1824 = vrsqrt.pop %v1733
        %v1825 = vrsqrt.pop %v1734
        %v1826 = vrsqrt.pop %v1735
        %v1827 = vrsqrt.pop %v1736
        %v1828 = vrsqrt.pop %v1737
        %v1829 = vrsqrt.pop %v1738
        %v1830 = vrsqrt.pop %v1739
        %v1831 = vrsqrt.pop %v1740
        %v1832 = vrsqrt.pop %v1741
        %v1833 = vrsqrt.pop %v1742
        %v1834 = vrsqrt.pop %v1743
        %v1835 = vrsqrt.pop %v1744
        %v1836 = vrsqrt.pop %v1745
        %v1837 = vrsqrt.pop %v1746
        %v1838 = vrsqrt.pop %v1747
        %v1839 = vrsqrt.pop %v1748
        %v1840 = vrsqrt.pop %v1749
        %s1841 = scalar_lea.vmem %s1, %s201
        %v1842 = vld [vmem:[%s1841] sm:$0xff]
        %v1843 = vld [vmem:[%s1841 + $0x8] sm:$0xff]
        %v1844 = vld [vmem:[%s1841 + $0x10] sm:$0xff]
        %v1845 = vld [vmem:[%s1841 + $0x18] sm:$0xff]
        %v1846 = vld [vmem:[%s1841 + $0x20] sm:$0xff]
        %v1847 = vld [vmem:[%s1841 + $0x28] sm:$0xff]
        %v1848 = vld [vmem:[%s1841 + $0x30] sm:$0xff]
        %v1849 = vld [vmem:[%s1841 + $0x38] sm:$0xff]
        %v1850 = vld [vmem:[%s1841 + $0x40] sm:$0xff]
        %v1851 = vld [vmem:[%s1841 + $0x48] sm:$0xff]
        %v1852 = vld [vmem:[%s1841 + $0x50] sm:$0xff]
        %v1853 = vld [vmem:[%s1841 + $0x58] sm:$0xff]
        %v1854 = vld [vmem:[%s1841 + $0x60] sm:$0xff]
        %v1855 = vld [vmem:[%s1841 + $0x68] sm:$0xff]
        %v1856 = vld [vmem:[%s1841 + $0x70] sm:$0xff]
        %v1857 = vld [vmem:[%s1841 + $0x78] sm:$0xff]
        %v1858 = vld [vmem:[%s1841 + $0x80] sm:$0xff]
        %v1859 = vld [vmem:[%s1841 + $0x88] sm:$0xff]
        %v1860 = vld [vmem:[%s1841 + $0x90] sm:$0xff]
        %v1861 = vld [vmem:[%s1841 + $0x98] sm:$0xff]
        %v1862 = vld [vmem:[%s1841 + $0xa0] sm:$0xff]
        %v1863 = vld [vmem:[%s1841 + $0xa8] sm:$0xff]
        %v1864 = vld [vmem:[%s1841 + $0xb0] sm:$0xff]
        %v1865 = vld [vmem:[%s1841 + $0xb8] sm:$0xff]
        %v1866 = vld [vmem:[%s1841 + $0xc0] sm:$0xff]
        %v1867 = vld [vmem:[%s1841 + $0xc8] sm:$0xff]
        %v1868 = vld [vmem:[%s1841 + $0xd0] sm:$0xff]
        %v1869 = vld [vmem:[%s1841 + $0xd8] sm:$0xff]
        %v1870 = vld [vmem:[%s1841 + $0xe0] sm:$0xff]
        %v1871 = vld [vmem:[%s1841 + $0xe8] sm:$0xff]
        %v1872 = vld [vmem:[%s1841 + $0xf0] sm:$0xff]
        %v1873 = vld [vmem:[%s1841 + $0xf8] sm:$0xff]
        %v1874 = vld [vmem:[%s1841 + $0x100] sm:$0xff]
        %v1875 = vld [vmem:[%s1841 + $0x108] sm:$0xff]
        %v1876 = vld [vmem:[%s1841 + $0x110] sm:$0xff]
        %v1877 = vld [vmem:[%s1841 + $0x118] sm:$0xff]
        %v1878 = vld [vmem:[%s1841 + $0x120] sm:$0xff]
        %v1879 = vld [vmem:[%s1841 + $0x128] sm:$0xff]
        %v1880 = vld [vmem:[%s1841 + $0x130] sm:$0xff]
        %v1881 = vld [vmem:[%s1841 + $0x138] sm:$0xff]
        %v1882 = vld [vmem:[%s1841 + $0x140] sm:$0xff]
        %v1883 = vld [vmem:[%s1841 + $0x148] sm:$0xff]
        %v1884 = vld [vmem:[%s1841 + $0x150] sm:$0xff]
        %v1885 = vld [vmem:[%s1841 + $0x158] sm:$0xff]
        %v1886 = vld [vmem:[%s1841 + $0x160] sm:$0xff]
        %v1887 = vld [vmem:[%s1841 + $0x168] sm:$0xff]
        %v1888 = vld [vmem:[%s1841 + $0x170] sm:$0xff]
        %v1889 = vld [vmem:[%s1841 + $0x178] sm:$0xff]
        %v1890 = vld [vmem:[%s1841 + $0x180] sm:$0xff]
        %v1891 = vld [vmem:[%s1841 + $0x188] sm:$0xff]
        %v1892 = vld [vmem:[%s1841 + $0x190] sm:$0xff]
        %v1893 = vld [vmem:[%s1841 + $0x198] sm:$0xff]
        %v1894 = vld [vmem:[%s1841 + $0x1a0] sm:$0xff]
        %v1895 = vld [vmem:[%s1841 + $0x1a8] sm:$0xff]
        %v1896 = vld [vmem:[%s1841 + $0x1b0] sm:$0xff]
        %v1897 = vld [vmem:[%s1841 + $0x1b8] sm:$0xff]
        %v1898 = vld [vmem:[%s1841 + $0x1c0] sm:$0xff]
        %v1899 = vld [vmem:[%s1841 + $0x1c8] sm:$0xff]
        %v1900 = vld [vmem:[%s1841 + $0x1d0] sm:$0xff]
        %v1901 = vld [vmem:[%s1841 + $0x1d8] sm:$0xff]
        %v1902 = vld [vmem:[%s1841 + $0x1e0] sm:$0xff]
        %v1903 = vld [vmem:[%s1841 + $0x1e8] sm:$0xff]
        %v1904 = vld [vmem:[%s1841 + $0x1f0] sm:$0xff]
        %v1905 = vld [vmem:[%s1841 + $0x1f8] sm:$0xff]
        %v1906 = vld [vmem:[%s1841 + $0x200] sm:$0xff]
        %v1907 = vld [vmem:[%s1841 + $0x208] sm:$0xff]
        %v1908 = vld [vmem:[%s1841 + $0x210] sm:$0xff]
        %v1909 = vld [vmem:[%s1841 + $0x218] sm:$0xff]
        %v1910 = vld [vmem:[%s1841 + $0x220] sm:$0xff]
        %v1911 = vld [vmem:[%s1841 + $0x228] sm:$0xff]
        %v1912 = vld [vmem:[%s1841 + $0x230] sm:$0xff]
        %v1913 = vld [vmem:[%s1841 + $0x238] sm:$0xff]
        %v1914 = vld [vmem:[%s1841 + $0x240] sm:$0xff]
        %v1915 = vld [vmem:[%s1841 + $0x248] sm:$0xff]
        %v1916 = vld [vmem:[%s1841 + $0x250] sm:$0xff]
        %v1917 = vld [vmem:[%s1841 + $0x258] sm:$0xff]
        %v1918 = vld [vmem:[%s1841 + $0x260] sm:$0xff]
        %v1919 = vld [vmem:[%s1841 + $0x268] sm:$0xff]
        %v1920 = vld [vmem:[%s1841 + $0x270] sm:$0xff]
        %v1921 = vld [vmem:[%s1841 + $0x278] sm:$0xff]
        %v1922 = vld [vmem:[%s1841 + $0x280] sm:$0xff]
        %v1923 = vld [vmem:[%s1841 + $0x288] sm:$0xff]
        %v1924 = vld [vmem:[%s1841 + $0x290] sm:$0xff]
        %v1925 = vld [vmem:[%s1841 + $0x298] sm:$0xff]
        %v1926 = vld [vmem:[%s1841 + $0x2a0] sm:$0xff]
        %v1927 = vld [vmem:[%s1841 + $0x2a8] sm:$0xff]
        %v1928 = vld [vmem:[%s1841 + $0x2b0] sm:$0xff]
        %v1929 = vld [vmem:[%s1841 + $0x2b8] sm:$0xff]
        %v1930 = vld [vmem:[%s1841 + $0x2c0] sm:$0xff]
        %v1931 = vld [vmem:[%s1841 + $0x2c8] sm:$0xff]
        %v1932 = vld [vmem:[%s1841 + $0x2d0] sm:$0xff]
        %s1933 = scalar_lea.vmem %s2, %s201
        %v1934 = vld [vmem:[%s1933] sm:$0xff]
        %v1935 = vld [vmem:[%s1933 + $0x8] sm:$0xff]
        %v1936 = vld [vmem:[%s1933 + $0x10] sm:$0xff]
        %v1937 = vld [vmem:[%s1933 + $0x18] sm:$0xff]
        %v1938 = vld [vmem:[%s1933 + $0x20] sm:$0xff]
        %v1939 = vld [vmem:[%s1933 + $0x28] sm:$0xff]
        %v1940 = vld [vmem:[%s1933 + $0x30] sm:$0xff]
        %v1941 = vld [vmem:[%s1933 + $0x38] sm:$0xff]
        %v1942 = vld [vmem:[%s1933 + $0x40] sm:$0xff]
        %v1943 = vld [vmem:[%s1933 + $0x48] sm:$0xff]
        %v1944 = vld [vmem:[%s1933 + $0x50] sm:$0xff]
        %v1945 = vld [vmem:[%s1933 + $0x58] sm:$0xff]
        %v1946 = vld [vmem:[%s1933 + $0x60] sm:$0xff]
        %v1947 = vld [vmem:[%s1933 + $0x68] sm:$0xff]
        %v1948 = vld [vmem:[%s1933 + $0x70] sm:$0xff]
        %v1949 = vld [vmem:[%s1933 + $0x78] sm:$0xff]
        %v1950 = vld [vmem:[%s1933 + $0x80] sm:$0xff]
        %v1951 = vld [vmem:[%s1933 + $0x88] sm:$0xff]
        %v1952 = vld [vmem:[%s1933 + $0x90] sm:$0xff]
        %v1953 = vld [vmem:[%s1933 + $0x98] sm:$0xff]
        %v1954 = vld [vmem:[%s1933 + $0xa0] sm:$0xff]
        %v1955 = vld [vmem:[%s1933 + $0xa8] sm:$0xff]
        %v1956 = vld [vmem:[%s1933 + $0xb0] sm:$0xff]
        %v1957 = vld [vmem:[%s1933 + $0xb8] sm:$0xff]
        %v1958 = vld [vmem:[%s1933 + $0xc0] sm:$0xff]
        %v1959 = vld [vmem:[%s1933 + $0xc8] sm:$0xff]
        %v1960 = vld [vmem:[%s1933 + $0xd0] sm:$0xff]
        %v1961 = vld [vmem:[%s1933 + $0xd8] sm:$0xff]
        %v1962 = vld [vmem:[%s1933 + $0xe0] sm:$0xff]
        %v1963 = vld [vmem:[%s1933 + $0xe8] sm:$0xff]
        %v1964 = vld [vmem:[%s1933 + $0xf0] sm:$0xff]
        %v1965 = vld [vmem:[%s1933 + $0xf8] sm:$0xff]
        %v1966 = vld [vmem:[%s1933 + $0x100] sm:$0xff]
        %v1967 = vld [vmem:[%s1933 + $0x108] sm:$0xff]
        %v1968 = vld [vmem:[%s1933 + $0x110] sm:$0xff]
        %v1969 = vld [vmem:[%s1933 + $0x118] sm:$0xff]
        %v1970 = vld [vmem:[%s1933 + $0x120] sm:$0xff]
        %v1971 = vld [vmem:[%s1933 + $0x128] sm:$0xff]
        %v1972 = vld [vmem:[%s1933 + $0x130] sm:$0xff]
        %v1973 = vld [vmem:[%s1933 + $0x138] sm:$0xff]
        %v1974 = vld [vmem:[%s1933 + $0x140] sm:$0xff]
        %v1975 = vld [vmem:[%s1933 + $0x148] sm:$0xff]
        %v1976 = vld [vmem:[%s1933 + $0x150] sm:$0xff]
        %v1977 = vld [vmem:[%s1933 + $0x158] sm:$0xff]
        %v1978 = vld [vmem:[%s1933 + $0x160] sm:$0xff]
        %v1979 = vld [vmem:[%s1933 + $0x168] sm:$0xff]
        %v1980 = vld [vmem:[%s1933 + $0x170] sm:$0xff]
        %v1981 = vld [vmem:[%s1933 + $0x178] sm:$0xff]
        %v1982 = vld [vmem:[%s1933 + $0x180] sm:$0xff]
        %v1983 = vld [vmem:[%s1933 + $0x188] sm:$0xff]
        %v1984 = vld [vmem:[%s1933 + $0x190] sm:$0xff]
        %v1985 = vld [vmem:[%s1933 + $0x198] sm:$0xff]
        %v1986 = vld [vmem:[%s1933 + $0x1a0] sm:$0xff]
        %v1987 = vld [vmem:[%s1933 + $0x1a8] sm:$0xff]
        %v1988 = vld [vmem:[%s1933 + $0x1b0] sm:$0xff]
        %v1989 = vld [vmem:[%s1933 + $0x1b8] sm:$0xff]
        %v1990 = vld [vmem:[%s1933 + $0x1c0] sm:$0xff]
        %v1991 = vld [vmem:[%s1933 + $0x1c8] sm:$0xff]
        %v1992 = vld [vmem:[%s1933 + $0x1d0] sm:$0xff]
        %v1993 = vld [vmem:[%s1933 + $0x1d8] sm:$0xff]
        %v1994 = vld [vmem:[%s1933 + $0x1e0] sm:$0xff]
        %v1995 = vld [vmem:[%s1933 + $0x1e8] sm:$0xff]
        %v1996 = vld [vmem:[%s1933 + $0x1f0] sm:$0xff]
        %v1997 = vld [vmem:[%s1933 + $0x1f8] sm:$0xff]
        %v1998 = vld [vmem:[%s1933 + $0x200] sm:$0xff]
        %v1999 = vld [vmem:[%s1933 + $0x208] sm:$0xff]
        %v2000 = vld [vmem:[%s1933 + $0x210] sm:$0xff]
        %v2001 = vld [vmem:[%s1933 + $0x218] sm:$0xff]
        %v2002 = vld [vmem:[%s1933 + $0x220] sm:$0xff]
        %v2003 = vld [vmem:[%s1933 + $0x228] sm:$0xff]
        %v2004 = vld [vmem:[%s1933 + $0x230] sm:$0xff]
        %v2005 = vld [vmem:[%s1933 + $0x238] sm:$0xff]
        %v2006 = vld [vmem:[%s1933 + $0x240] sm:$0xff]
        %v2007 = vld [vmem:[%s1933 + $0x248] sm:$0xff]
        %v2008 = vld [vmem:[%s1933 + $0x250] sm:$0xff]
        %v2009 = vld [vmem:[%s1933 + $0x258] sm:$0xff]
        %v2010 = vld [vmem:[%s1933 + $0x260] sm:$0xff]
        %v2011 = vld [vmem:[%s1933 + $0x268] sm:$0xff]
        %v2012 = vld [vmem:[%s1933 + $0x270] sm:$0xff]
        %v2013 = vld [vmem:[%s1933 + $0x278] sm:$0xff]
        %v2014 = vld [vmem:[%s1933 + $0x280] sm:$0xff]
        %v2015 = vld [vmem:[%s1933 + $0x288] sm:$0xff]
        %v2016 = vld [vmem:[%s1933 + $0x290] sm:$0xff]
        %v2017 = vld [vmem:[%s1933 + $0x298] sm:$0xff]
        %v2018 = vld [vmem:[%s1933 + $0x2a0] sm:$0xff]
        %v2019 = vld [vmem:[%s1933 + $0x2a8] sm:$0xff]
        %v2020 = vld [vmem:[%s1933 + $0x2b0] sm:$0xff]
        %v2021 = vld [vmem:[%s1933 + $0x2b8] sm:$0xff]
        %v2022 = vld [vmem:[%s1933 + $0x2c0] sm:$0xff]
        %v2023 = vld [vmem:[%s1933 + $0x2c8] sm:$0xff]
        %v2024 = vld [vmem:[%s1933 + $0x2d0] sm:$0xff]
        %v2025 = vmul.f32 %v1842, %v1750
        %v2026 = vmul.f32 %v1843, %v1751
        %v2027 = vmul.f32 %v1844, %v1752
        %v2028 = vmul.f32 %v1845, %v1753
        %v2029 = vmul.f32 %v1846, %v1754
        %v2030 = vmul.f32 %v1847, %v1755
        %v2031 = vmul.f32 %v1848, %v1756
        %v2032 = vmul.f32 %v1849, %v1757
        %v2033 = vmul.f32 %v1850, %v1758
        %v2034 = vmul.f32 %v1851, %v1759
        %v2035 = vmul.f32 %v1852, %v1760
        %v2036 = vmul.f32 %v1853, %v1761
        %v2037 = vmul.f32 %v1854, %v1762
        %v2038 = vmul.f32 %v1855, %v1763
        %v2039 = vmul.f32 %v1856, %v1764
        %v2040 = vmul.f32 %v1857, %v1765
        %v2041 = vmul.f32 %v1858, %v1766
        %v2042 = vmul.f32 %v1859, %v1767
        %v2043 = vmul.f32 %v1860, %v1768
        %v2044 = vmul.f32 %v1861, %v1769
        %v2045 = vmul.f32 %v1862, %v1770
        %v2046 = vmul.f32 %v1863, %v1771
        %v2047 = vmul.f32 %v1864, %v1772
        %v2048 = vmul.f32 %v1865, %v1773
        %v2049 = vmul.f32 %v1866, %v1774
        %v2050 = vmul.f32 %v1867, %v1775
        %v2051 = vmul.f32 %v1868, %v1776
        %v2052 = vmul.f32 %v1869, %v1777
        %v2053 = vmul.f32 %v1870, %v1778
        %v2054 = vmul.f32 %v1871, %v1779
        %v2055 = vmul.f32 %v1872, %v1780
        %v2056 = vmul.f32 %v1873, %v1781
        %v2057 = vmul.f32 %v1874, %v1782
        %v2058 = vmul.f32 %v1875, %v1783
        %v2059 = vmul.f32 %v1876, %v1784
        %v2060 = vmul.f32 %v1877, %v1785
        %v2061 = vmul.f32 %v1878, %v1786
        %v2062 = vmul.f32 %v1879, %v1787
        %v2063 = vmul.f32 %v1880, %v1788
        %v2064 = vmul.f32 %v1881, %v1789
        %v2065 = vmul.f32 %v1882, %v1790
        %v2066 = vmul.f32 %v1883, %v1791
        %v2067 = vmul.f32 %v1884, %v1792
        %v2068 = vmul.f32 %v1885, %v1793
        %v2069 = vmul.f32 %v1886, %v1794
        %v2070 = vmul.f32 %v1887, %v1795
        %v2071 = vmul.f32 %v1888, %v1796
        %v2072 = vmul.f32 %v1889, %v1797
        %v2073 = vmul.f32 %v1890, %v1798
        %v2074 = vmul.f32 %v1891, %v1799
        %v2075 = vmul.f32 %v1892, %v1800
        %v2076 = vmul.f32 %v1893, %v1801
        %v2077 = vmul.f32 %v1894, %v1802
        %v2078 = vmul.f32 %v1895, %v1803
        %v2079 = vmul.f32 %v1896, %v1804
        %v2080 = vmul.f32 %v1897, %v1805
        %v2081 = vmul.f32 %v1898, %v1806
        %v2082 = vmul.f32 %v1899, %v1807
        %v2083 = vmul.f32 %v1900, %v1808
        %v2084 = vmul.f32 %v1901, %v1809
        %v2085 = vmul.f32 %v1902, %v1810
        %v2086 = vmul.f32 %v1903, %v1811
        %v2087 = vmul.f32 %v1904, %v1812
        %v2088 = vmul.f32 %v1905, %v1813
        %v2089 = vmul.f32 %v1906, %v1814
        %v2090 = vmul.f32 %v1907, %v1815
        %v2091 = vmul.f32 %v1908, %v1816
        %v2092 = vmul.f32 %v1909, %v1817
        %v2093 = vmul.f32 %v1910, %v1818
        %v2094 = vmul.f32 %v1911, %v1819
        %v2095 = vmul.f32 %v1912, %v1820
        %v2096 = vmul.f32 %v1913, %v1821
        %v2097 = vmul.f32 %v1914, %v1822
        %v2098 = vmul.f32 %v1915, %v1823
        %v2099 = vmul.f32 %v1916, %v1824
        %v2100 = vmul.f32 %v1917, %v1825
        %v2101 = vmul.f32 %v1918, %v1826
        %v2102 = vmul.f32 %v1919, %v1827
        %v2103 = vmul.f32 %v1920, %v1828
        %v2104 = vmul.f32 %v1921, %v1829
        %v2105 = vmul.f32 %v1922, %v1830
        %v2106 = vmul.f32 %v1923, %v1831
        %v2107 = vmul.f32 %v1924, %v1832
        %v2108 = vmul.f32 %v1925, %v1833
        %v2109 = vmul.f32 %v1926, %v1834
        %v2110 = vmul.f32 %v1927, %v1835
        %v2111 = vmul.f32 %v1928, %v1836
        %v2112 = vmul.f32 %v1929, %v1837
        %v2113 = vmul.f32 %v1930, %v1838
        %v2114 = vmul.f32 %v1931, %v1839
        %v2115 = vmul.f32 %v1932, %v1840
        %2117 = vset.pattern.permute.xlu0 0
        %2118 = vperm.xlu0 %2117, %v2025
        %v2119 = vpop.permute.xlu0 %2118
        %2122 = vset.pattern.permute.xlu0 0
        %2123 = vperm.xlu0 %2122, %v2026
        %v2124 = vpop.permute.xlu0 %2123
        %2127 = vset.pattern.permute.xlu0 0
        %2128 = vperm.xlu0 %2127, %v2027
        %v2129 = vpop.permute.xlu0 %2128
        %2132 = vset.pattern.permute.xlu0 0
        %2133 = vperm.xlu0 %2132, %v2028
        %v2134 = vpop.permute.xlu0 %2133
        %2137 = vset.pattern.permute.xlu0 0
        %2138 = vperm.xlu0 %2137, %v2029
        %v2139 = vpop.permute.xlu0 %2138
        %2142 = vset.pattern.permute.xlu0 0
        %2143 = vperm.xlu0 %2142, %v2030
        %v2144 = vpop.permute.xlu0 %2143
        %2147 = vset.pattern.permute.xlu0 0
        %2148 = vperm.xlu0 %2147, %v2031
        %v2149 = vpop.permute.xlu0 %2148
        %2152 = vset.pattern.permute.xlu0 0
        %2153 = vperm.xlu0 %2152, %v2032
        %v2154 = vpop.permute.xlu0 %2153
        %2157 = vset.pattern.permute.xlu0 0
        %2158 = vperm.xlu0 %2157, %v2033
        %v2159 = vpop.permute.xlu0 %2158
        %2162 = vset.pattern.permute.xlu0 0
        %2163 = vperm.xlu0 %2162, %v2034
        %v2164 = vpop.permute.xlu0 %2163
        %2167 = vset.pattern.permute.xlu0 0
        %2168 = vperm.xlu0 %2167, %v2035
        %v2169 = vpop.permute.xlu0 %2168
        %2172 = vset.pattern.permute.xlu0 0
        %2173 = vperm.xlu0 %2172, %v2036
        %v2174 = vpop.permute.xlu0 %2173
        %2177 = vset.pattern.permute.xlu0 0
        %2178 = vperm.xlu0 %2177, %v2037
        %v2179 = vpop.permute.xlu0 %2178
        %2182 = vset.pattern.permute.xlu0 0
        %2183 = vperm.xlu0 %2182, %v2038
        %v2184 = vpop.permute.xlu0 %2183
        %2187 = vset.pattern.permute.xlu0 0
        %2188 = vperm.xlu0 %2187, %v2039
        %v2189 = vpop.permute.xlu0 %2188
        %2192 = vset.pattern.permute.xlu0 0
        %2193 = vperm.xlu0 %2192, %v2040
        %v2194 = vpop.permute.xlu0 %2193
        %2197 = vset.pattern.permute.xlu0 0
        %2198 = vperm.xlu0 %2197, %v2041
        %v2199 = vpop.permute.xlu0 %2198
        %2202 = vset.pattern.permute.xlu0 0
        %2203 = vperm.xlu0 %2202, %v2042
        %v2204 = vpop.permute.xlu0 %2203
        %2207 = vset.pattern.permute.xlu0 0
        %2208 = vperm.xlu0 %2207, %v2043
        %v2209 = vpop.permute.xlu0 %2208
        %2212 = vset.pattern.permute.xlu0 0
        %2213 = vperm.xlu0 %2212, %v2044
        %v2214 = vpop.permute.xlu0 %2213
        %2217 = vset.pattern.permute.xlu0 0
        %2218 = vperm.xlu0 %2217, %v2045
        %v2219 = vpop.permute.xlu0 %2218
        %2222 = vset.pattern.permute.xlu0 0
        %2223 = vperm.xlu0 %2222, %v2046
        %v2224 = vpop.permute.xlu0 %2223
        %2227 = vset.pattern.permute.xlu0 0
        %2228 = vperm.xlu0 %2227, %v2047
        %v2229 = vpop.permute.xlu0 %2228
        %2232 = vset.pattern.permute.xlu0 0
        %2233 = vperm.xlu0 %2232, %v2048
        %v2234 = vpop.permute.xlu0 %2233
        %2237 = vset.pattern.permute.xlu0 0
        %2238 = vperm.xlu0 %2237, %v2049
        %v2239 = vpop.permute.xlu0 %2238
        %2242 = vset.pattern.permute.xlu0 0
        %2243 = vperm.xlu0 %2242, %v2050
        %v2244 = vpop.permute.xlu0 %2243
        %2247 = vset.pattern.permute.xlu0 0
        %2248 = vperm.xlu0 %2247, %v2051
        %v2249 = vpop.permute.xlu0 %2248
        %2252 = vset.pattern.permute.xlu0 0
        %2253 = vperm.xlu0 %2252, %v2052
        %v2254 = vpop.permute.xlu0 %2253
        %2257 = vset.pattern.permute.xlu0 0
        %2258 = vperm.xlu0 %2257, %v2053
        %v2259 = vpop.permute.xlu0 %2258
        %2262 = vset.pattern.permute.xlu0 0
        %2263 = vperm.xlu0 %2262, %v2054
        %v2264 = vpop.permute.xlu0 %2263
        %2267 = vset.pattern.permute.xlu0 0
        %2268 = vperm.xlu0 %2267, %v2055
        %v2269 = vpop.permute.xlu0 %2268
        %2272 = vset.pattern.permute.xlu0 0
        %2273 = vperm.xlu0 %2272, %v2056
        %v2274 = vpop.permute.xlu0 %2273
        %2277 = vset.pattern.permute.xlu0 0
        %2278 = vperm.xlu0 %2277, %v2057
        %v2279 = vpop.permute.xlu0 %2278
        %2282 = vset.pattern.permute.xlu0 0
        %2283 = vperm.xlu0 %2282, %v2058
        %v2284 = vpop.permute.xlu0 %2283
        %2287 = vset.pattern.permute.xlu0 0
        %2288 = vperm.xlu0 %2287, %v2059
        %v2289 = vpop.permute.xlu0 %2288
        %2292 = vset.pattern.permute.xlu0 0
        %2293 = vperm.xlu0 %2292, %v2060
        %v2294 = vpop.permute.xlu0 %2293
        %2297 = vset.pattern.permute.xlu0 0
        %2298 = vperm.xlu0 %2297, %v2061
        %v2299 = vpop.permute.xlu0 %2298
        %2302 = vset.pattern.permute.xlu0 0
        %2303 = vperm.xlu0 %2302, %v2062
        %v2304 = vpop.permute.xlu0 %2303
        %2307 = vset.pattern.permute.xlu0 0
        %2308 = vperm.xlu0 %2307, %v2063
        %v2309 = vpop.permute.xlu0 %2308
        %2312 = vset.pattern.permute.xlu0 0
        %2313 = vperm.xlu0 %2312, %v2064
        %v2314 = vpop.permute.xlu0 %2313
        %2317 = vset.pattern.permute.xlu0 0
        %2318 = vperm.xlu0 %2317, %v2065
        %v2319 = vpop.permute.xlu0 %2318
        %2322 = vset.pattern.permute.xlu0 0
        %2323 = vperm.xlu0 %2322, %v2066
        %v2324 = vpop.permute.xlu0 %2323
        %2327 = vset.pattern.permute.xlu0 0
        %2328 = vperm.xlu0 %2327, %v2067
        %v2329 = vpop.permute.xlu0 %2328
        %2332 = vset.pattern.permute.xlu0 0
        %2333 = vperm.xlu0 %2332, %v2068
        %v2334 = vpop.permute.xlu0 %2333
        %2337 = vset.pattern.permute.xlu0 0
        %2338 = vperm.xlu0 %2337, %v2069
        %v2339 = vpop.permute.xlu0 %2338
        %2342 = vset.pattern.permute.xlu0 0
        %2343 = vperm.xlu0 %2342, %v2070
        %v2344 = vpop.permute.xlu0 %2343
        %2347 = vset.pattern.permute.xlu0 0
        %2348 = vperm.xlu0 %2347, %v2071
        %v2349 = vpop.permute.xlu0 %2348
        %2352 = vset.pattern.permute.xlu0 0
        %2353 = vperm.xlu0 %2352, %v2072
        %v2354 = vpop.permute.xlu0 %2353
        %2357 = vset.pattern.permute.xlu0 0
        %2358 = vperm.xlu0 %2357, %v2073
        %v2359 = vpop.permute.xlu0 %2358
        %2362 = vset.pattern.permute.xlu0 0
        %2363 = vperm.xlu0 %2362, %v2074
        %v2364 = vpop.permute.xlu0 %2363
        %2367 = vset.pattern.permute.xlu0 0
        %2368 = vperm.xlu0 %2367, %v2075
        %v2369 = vpop.permute.xlu0 %2368
        %2372 = vset.pattern.permute.xlu0 0
        %2373 = vperm.xlu0 %2372, %v2076
        %v2374 = vpop.permute.xlu0 %2373
        %2377 = vset.pattern.permute.xlu0 0
        %2378 = vperm.xlu0 %2377, %v2077
        %v2379 = vpop.permute.xlu0 %2378
        %2382 = vset.pattern.permute.xlu0 0
        %2383 = vperm.xlu0 %2382, %v2078
        %v2384 = vpop.permute.xlu0 %2383
        %2387 = vset.pattern.permute.xlu0 0
        %2388 = vperm.xlu0 %2387, %v2079
        %v2389 = vpop.permute.xlu0 %2388
        %2392 = vset.pattern.permute.xlu0 0
        %2393 = vperm.xlu0 %2392, %v2080
        %v2394 = vpop.permute.xlu0 %2393
        %2397 = vset.pattern.permute.xlu0 0
        %2398 = vperm.xlu0 %2397, %v2081
        %v2399 = vpop.permute.xlu0 %2398
        %2402 = vset.pattern.permute.xlu0 0
        %2403 = vperm.xlu0 %2402, %v2082
        %v2404 = vpop.permute.xlu0 %2403
        %2407 = vset.pattern.permute.xlu0 0
        %2408 = vperm.xlu0 %2407, %v2083
        %v2409 = vpop.permute.xlu0 %2408
        %2412 = vset.pattern.permute.xlu0 0
        %2413 = vperm.xlu0 %2412, %v2084
        %v2414 = vpop.permute.xlu0 %2413
        %2417 = vset.pattern.permute.xlu0 0
        %2418 = vperm.xlu0 %2417, %v2085
        %v2419 = vpop.permute.xlu0 %2418
        %2422 = vset.pattern.permute.xlu0 0
        %2423 = vperm.xlu0 %2422, %v2086
        %v2424 = vpop.permute.xlu0 %2423
        %2427 = vset.pattern.permute.xlu0 0
        %2428 = vperm.xlu0 %2427, %v2087
        %v2429 = vpop.permute.xlu0 %2428
        %2432 = vset.pattern.permute.xlu0 0
        %2433 = vperm.xlu0 %2432, %v2088
        %v2434 = vpop.permute.xlu0 %2433
        %2437 = vset.pattern.permute.xlu0 0
        %2438 = vperm.xlu0 %2437, %v2089
        %v2439 = vpop.permute.xlu0 %2438
        %2442 = vset.pattern.permute.xlu0 0
        %2443 = vperm.xlu0 %2442, %v2090
        %v2444 = vpop.permute.xlu0 %2443
        %2447 = vset.pattern.permute.xlu0 0
        %2448 = vperm.xlu0 %2447, %v2091
        %v2449 = vpop.permute.xlu0 %2448
        %2452 = vset.pattern.permute.xlu0 0
        %2453 = vperm.xlu0 %2452, %v2092
        %v2454 = vpop.permute.xlu0 %2453
        %2457 = vset.pattern.permute.xlu0 0
        %2458 = vperm.xlu0 %2457, %v2093
        %v2459 = vpop.permute.xlu0 %2458
        %2462 = vset.pattern.permute.xlu0 0
        %2463 = vperm.xlu0 %2462, %v2094
        %v2464 = vpop.permute.xlu0 %2463
        %2467 = vset.pattern.permute.xlu0 0
        %2468 = vperm.xlu0 %2467, %v2095
        %v2469 = vpop.permute.xlu0 %2468
        %2472 = vset.pattern.permute.xlu0 0
        %2473 = vperm.xlu0 %2472, %v2096
        %v2474 = vpop.permute.xlu0 %2473
        %2477 = vset.pattern.permute.xlu0 0
        %2478 = vperm.xlu0 %2477, %v2097
        %v2479 = vpop.permute.xlu0 %2478
        %2482 = vset.pattern.permute.xlu0 0
        %2483 = vperm.xlu0 %2482, %v2098
        %v2484 = vpop.permute.xlu0 %2483
        %2487 = vset.pattern.permute.xlu0 0
        %2488 = vperm.xlu0 %2487, %v2099
        %v2489 = vpop.permute.xlu0 %2488
        %2492 = vset.pattern.permute.xlu0 0
        %2493 = vperm.xlu0 %2492, %v2100
        %v2494 = vpop.permute.xlu0 %2493
        %2497 = vset.pattern.permute.xlu0 0
        %2498 = vperm.xlu0 %2497, %v2101
        %v2499 = vpop.permute.xlu0 %2498
        %2502 = vset.pattern.permute.xlu0 0
        %2503 = vperm.xlu0 %2502, %v2102
        %v2504 = vpop.permute.xlu0 %2503
        %2507 = vset.pattern.permute.xlu0 0
        %2508 = vperm.xlu0 %2507, %v2103
        %v2509 = vpop.permute.xlu0 %2508
        %2512 = vset.pattern.permute.xlu0 0
        %2513 = vperm.xlu0 %2512, %v2104
        %v2514 = vpop.permute.xlu0 %2513
        %2517 = vset.pattern.permute.xlu0 0
        %2518 = vperm.xlu0 %2517, %v2105
        %v2519 = vpop.permute.xlu0 %2518
        %2522 = vset.pattern.permute.xlu0 0
        %2523 = vperm.xlu0 %2522, %v2106
        %v2524 = vpop.permute.xlu0 %2523
        %2527 = vset.pattern.permute.xlu0 0
        %2528 = vperm.xlu0 %2527, %v2107
        %v2529 = vpop.permute.xlu0 %2528
        %2532 = vset.pattern.permute.xlu0 0
        %2533 = vperm.xlu0 %2532, %v2108
        %v2534 = vpop.permute.xlu0 %2533
        %2537 = vset.pattern.permute.xlu0 0
        %2538 = vperm.xlu0 %2537, %v2109
        %v2539 = vpop.permute.xlu0 %2538
        %2542 = vset.pattern.permute.xlu0 0
        %2543 = vperm.xlu0 %2542, %v2110
        %v2544 = vpop.permute.xlu0 %2543
        %2547 = vset.pattern.permute.xlu0 0
        %2548 = vperm.xlu0 %2547, %v2111
        %v2549 = vpop.permute.xlu0 %2548
        %2552 = vset.pattern.permute.xlu0 0
        %2553 = vperm.xlu0 %2552, %v2112
        %v2554 = vpop.permute.xlu0 %2553
        %2557 = vset.pattern.permute.xlu0 0
        %2558 = vperm.xlu0 %2557, %v2113
        %v2559 = vpop.permute.xlu0 %2558
        %2562 = vset.pattern.permute.xlu0 0
        %2563 = vperm.xlu0 %2562, %v2114
        %v2564 = vpop.permute.xlu0 %2563
        %2567 = vset.pattern.permute.xlu0 0
        %2568 = vperm.xlu0 %2567, %v2115
        %v2569 = vpop.permute.xlu0 %2568
        %v2571 = vmul.f32 %v840, %v2119
        %v2572 = vmul.f32 %v841, %v2119
        %v2573 = vmul.f32 %v842, %v2124
        %v2574 = vmul.f32 %v843, %v2124
        %v2575 = vmul.f32 %v844, %v2129
        %v2576 = vmul.f32 %v845, %v2129
        %v2577 = vmul.f32 %v846, %v2134
        %v2578 = vmul.f32 %v847, %v2134
        %v2579 = vmul.f32 %v848, %v2139
        %v2580 = vmul.f32 %v849, %v2139
        %v2581 = vmul.f32 %v850, %v2144
        %v2582 = vmul.f32 %v851, %v2144
        %v2583 = vmul.f32 %v852, %v2149
        %v2584 = vmul.f32 %v853, %v2149
        %v2585 = vmul.f32 %v854, %v2154
        %v2586 = vmul.f32 %v855, %v2154
        %v2587 = vmul.f32 %v856, %v2159
        %v2588 = vmul.f32 %v857, %v2159
        %v2589 = vmul.f32 %v858, %v2164
        %v2590 = vmul.f32 %v859, %v2164
        %v2591 = vmul.f32 %v860, %v2169
        %v2592 = vmul.f32 %v861, %v2169
        %v2593 = vmul.f32 %v862, %v2174
        %v2594 = vmul.f32 %v863, %v2174
        %v2595 = vmul.f32 %v864, %v2179
        %v2596 = vmul.f32 %v865, %v2179
        %v2597 = vmul.f32 %v866, %v2184
        %v2598 = vmul.f32 %v867, %v2184
        %v2599 = vmul.f32 %v868, %v2189
        %v2600 = vmul.f32 %v869, %v2189
        %v2601 = vmul.f32 %v870, %v2194
        %v2602 = vmul.f32 %v871, %v2194
        %v2603 = vmul.f32 %v872, %v2199
        %v2604 = vmul.f32 %v873, %v2199
        %v2605 = vmul.f32 %v874, %v2204
        %v2606 = vmul.f32 %v875, %v2204
        %v2607 = vmul.f32 %v876, %v2209
        %v2608 = vmul.f32 %v877, %v2209
        %v2609 = vmul.f32 %v878, %v2214
        %v2610 = vmul.f32 %v879, %v2214
        %v2611 = vmul.f32 %v880, %v2219
        %v2612 = vmul.f32 %v881, %v2219
        %v2613 = vmul.f32 %v882, %v2224
        %v2614 = vmul.f32 %v883, %v2224
        %v2615 = vmul.f32 %v884, %v2229
        %v2616 = vmul.f32 %v885, %v2229
        %v2617 = vmul.f32 %v886, %v2234
        %v2618 = vmul.f32 %v887, %v2234
        %v2619 = vmul.f32 %v888, %v2239
        %v2620 = vmul.f32 %v889, %v2239
        %v2621 = vmul.f32 %v890, %v2244
        %v2622 = vmul.f32 %v891, %v2244
        %v2623 = vmul.f32 %v892, %v2249
        %v2624 = vmul.f32 %v893, %v2249
        %v2625 = vmul.f32 %v894, %v2254
        %v2626 = vmul.f32 %v895, %v2254
        %v2627 = vmul.f32 %v896, %v2259
        %v2628 = vmul.f32 %v897, %v2259
        %v2629 = vmul.f32 %v898, %v2264
        %v2630 = vmul.f32 %v899, %v2264
        %v2631 = vmul.f32 %v900, %v2269
        %v2632 = vmul.f32 %v901, %v2269
        %v2633 = vmul.f32 %v902, %v2274
        %v2634 = vmul.f32 %v903, %v2274
        %v2635 = vmul.f32 %v904, %v2279
        %v2636 = vmul.f32 %v905, %v2279
        %v2637 = vmul.f32 %v906, %v2284
        %v2638 = vmul.f32 %v907, %v2284
        %v2639 = vmul.f32 %v908, %v2289
        %v2640 = vmul.f32 %v909, %v2289
        %v2641 = vmul.f32 %v910, %v2294
        %v2642 = vmul.f32 %v911, %v2294
        %v2643 = vmul.f32 %v912, %v2299
        %v2644 = vmul.f32 %v913, %v2299
        %v2645 = vmul.f32 %v914, %v2304
        %v2646 = vmul.f32 %v915, %v2304
        %v2647 = vmul.f32 %v916, %v2309
        %v2648 = vmul.f32 %v917, %v2309
        %v2649 = vmul.f32 %v918, %v2314
        %v2650 = vmul.f32 %v919, %v2314
        %v2651 = vmul.f32 %v920, %v2319
        %v2652 = vmul.f32 %v921, %v2319
        %v2653 = vmul.f32 %v922, %v2324
        %v2654 = vmul.f32 %v923, %v2324
        %v2655 = vmul.f32 %v924, %v2329
        %v2656 = vmul.f32 %v925, %v2329
        %v2657 = vmul.f32 %v926, %v2334
        %v2658 = vmul.f32 %v927, %v2334
        %v2659 = vmul.f32 %v928, %v2339
        %v2660 = vmul.f32 %v929, %v2339
        %v2661 = vmul.f32 %v930, %v2344
        %v2662 = vmul.f32 %v931, %v2344
        %v2663 = vmul.f32 %v932, %v2349
        %v2664 = vmul.f32 %v933, %v2349
        %v2665 = vmul.f32 %v934, %v2354
        %v2666 = vmul.f32 %v935, %v2354
        %v2667 = vmul.f32 %v936, %v2359
        %v2668 = vmul.f32 %v937, %v2359
        %v2669 = vmul.f32 %v938, %v2364
        %v2670 = vmul.f32 %v939, %v2364
        %v2671 = vmul.f32 %v940, %v2369
        %v2672 = vmul.f32 %v941, %v2369
        %v2673 = vmul.f32 %v942, %v2374
        %v2674 = vmul.f32 %v943, %v2374
        %v2675 = vmul.f32 %v944, %v2379
        %v2676 = vmul.f32 %v945, %v2379
        %v2677 = vmul.f32 %v946, %v2384
        %v2678 = vmul.f32 %v947, %v2384
        %v2679 = vmul.f32 %v948, %v2389
        %v2680 = vmul.f32 %v949, %v2389
        %v2681 = vmul.f32 %v950, %v2394
        %v2682 = vmul.f32 %v951, %v2394
        %v2683 = vmul.f32 %v952, %v2399
        %v2684 = vmul.f32 %v953, %v2399
        %v2685 = vmul.f32 %v954, %v2404
        %v2686 = vmul.f32 %v955, %v2404
        %v2687 = vmul.f32 %v956, %v2409
        %v2688 = vmul.f32 %v957, %v2409
        %v2689 = vmul.f32 %v958, %v2414
        %v2690 = vmul.f32 %v959, %v2414
        %v2691 = vmul.f32 %v960, %v2419
        %v2692 = vmul.f32 %v961, %v2419
        %v2693 = vmul.f32 %v962, %v2424
        %v2694 = vmul.f32 %v963, %v2424
        %v2695 = vmul.f32 %v964, %v2429
        %v2696 = vmul.f32 %v965, %v2429
        %v2697 = vmul.f32 %v966, %v2434
        %v2698 = vmul.f32 %v967, %v2434
        %v2699 = vmul.f32 %v968, %v2439
        %v2700 = vmul.f32 %v969, %v2439
        %v2701 = vmul.f32 %v970, %v2444
        %v2702 = vmul.f32 %v971, %v2444
        %v2703 = vmul.f32 %v972, %v2449
        %v2704 = vmul.f32 %v973, %v2449
        %v2705 = vmul.f32 %v974, %v2454
        %v2706 = vmul.f32 %v975, %v2454
        %v2707 = vmul.f32 %v976, %v2459
        %v2708 = vmul.f32 %v977, %v2459
        %v2709 = vmul.f32 %v978, %v2464
        %v2710 = vmul.f32 %v979, %v2464
        %v2711 = vmul.f32 %v980, %v2469
        %v2712 = vmul.f32 %v981, %v2469
        %v2713 = vmul.f32 %v982, %v2474
        %v2714 = vmul.f32 %v983, %v2474
        %v2715 = vmul.f32 %v984, %v2479
        %v2716 = vmul.f32 %v985, %v2479
        %v2717 = vmul.f32 %v986, %v2484
        %v2718 = vmul.f32 %v987, %v2484
        %v2719 = vmul.f32 %v988, %v2489
        %v2720 = vmul.f32 %v989, %v2489
        %v2721 = vmul.f32 %v990, %v2494
        %v2722 = vmul.f32 %v991, %v2494
        %v2723 = vmul.f32 %v992, %v2499
        %v2724 = vmul.f32 %v993, %v2499
        %v2725 = vmul.f32 %v994, %v2504
        %v2726 = vmul.f32 %v995, %v2504
        %v2727 = vmul.f32 %v996, %v2509
        %v2728 = vmul.f32 %v997, %v2509
        %v2729 = vmul.f32 %v998, %v2514
        %v2730 = vmul.f32 %v999, %v2514
        %v2731 = vmul.f32 %v1000, %v2519
        %v2732 = vmul.f32 %v1001, %v2519
        %v2733 = vmul.f32 %v1002, %v2524
        %v2734 = vmul.f32 %v1003, %v2524
        %v2735 = vmul.f32 %v1004, %v2529
        %v2736 = vmul.f32 %v1005, %v2529
        %v2737 = vmul.f32 %v1006, %v2534
        %v2738 = vmul.f32 %v1007, %v2534
        %v2739 = vmul.f32 %v1008, %v2539
        %v2740 = vmul.f32 %v1009, %v2539
        %v2741 = vmul.f32 %v1010, %v2544
        %v2742 = vmul.f32 %v1011, %v2544
        %v2743 = vmul.f32 %v1012, %v2549
        %v2744 = vmul.f32 %v1013, %v2549
        %v2745 = vmul.f32 %v1014, %v2554
        %v2746 = vmul.f32 %v1015, %v2554
        %v2747 = vmul.f32 %v1016, %v2559
        %v2748 = vmul.f32 %v1017, %v2559
        %v2749 = vmul.f32 %v1018, %v2564
        %v2750 = vmul.f32 %v1019, %v2564
        %v2751 = vmul.f32 %v1020, %v2569
        %v2752 = vmul.f32 %v1021, %v2569
        %2754 = vset.pattern.permute.xlu0 0
        %2755 = vperm.xlu0 %2754, %v1934
        %v2756 = vpop.permute.xlu0 %2755
        %2759 = vset.pattern.permute.xlu0 0
        %2760 = vperm.xlu0 %2759, %v1935
        %v2761 = vpop.permute.xlu0 %2760
        %2764 = vset.pattern.permute.xlu0 0
        %2765 = vperm.xlu0 %2764, %v1936
        %v2766 = vpop.permute.xlu0 %2765
        %2769 = vset.pattern.permute.xlu0 0
        %2770 = vperm.xlu0 %2769, %v1937
        %v2771 = vpop.permute.xlu0 %2770
        %2774 = vset.pattern.permute.xlu0 0
        %2775 = vperm.xlu0 %2774, %v1938
        %v2776 = vpop.permute.xlu0 %2775
        %2779 = vset.pattern.permute.xlu0 0
        %2780 = vperm.xlu0 %2779, %v1939
        %v2781 = vpop.permute.xlu0 %2780
        %2784 = vset.pattern.permute.xlu0 0
        %2785 = vperm.xlu0 %2784, %v1940
        %v2786 = vpop.permute.xlu0 %2785
        %2789 = vset.pattern.permute.xlu0 0
        %2790 = vperm.xlu0 %2789, %v1941
        %v2791 = vpop.permute.xlu0 %2790
        %2794 = vset.pattern.permute.xlu0 0
        %2795 = vperm.xlu0 %2794, %v1942
        %v2796 = vpop.permute.xlu0 %2795
        %2799 = vset.pattern.permute.xlu0 0
        %2800 = vperm.xlu0 %2799, %v1943
        %v2801 = vpop.permute.xlu0 %2800
        %2804 = vset.pattern.permute.xlu0 0
        %2805 = vperm.xlu0 %2804, %v1944
        %v2806 = vpop.permute.xlu0 %2805
        %2809 = vset.pattern.permute.xlu0 0
        %2810 = vperm.xlu0 %2809, %v1945
        %v2811 = vpop.permute.xlu0 %2810
        %2814 = vset.pattern.permute.xlu0 0
        %2815 = vperm.xlu0 %2814, %v1946
        %v2816 = vpop.permute.xlu0 %2815
        %2819 = vset.pattern.permute.xlu0 0
        %2820 = vperm.xlu0 %2819, %v1947
        %v2821 = vpop.permute.xlu0 %2820
        %2824 = vset.pattern.permute.xlu0 0
        %2825 = vperm.xlu0 %2824, %v1948
        %v2826 = vpop.permute.xlu0 %2825
        %2829 = vset.pattern.permute.xlu0 0
        %2830 = vperm.xlu0 %2829, %v1949
        %v2831 = vpop.permute.xlu0 %2830
        %2834 = vset.pattern.permute.xlu0 0
        %2835 = vperm.xlu0 %2834, %v1950
        %v2836 = vpop.permute.xlu0 %2835
        %2839 = vset.pattern.permute.xlu0 0
        %2840 = vperm.xlu0 %2839, %v1951
        %v2841 = vpop.permute.xlu0 %2840
        %2844 = vset.pattern.permute.xlu0 0
        %2845 = vperm.xlu0 %2844, %v1952
        %v2846 = vpop.permute.xlu0 %2845
        %2849 = vset.pattern.permute.xlu0 0
        %2850 = vperm.xlu0 %2849, %v1953
        %v2851 = vpop.permute.xlu0 %2850
        %2854 = vset.pattern.permute.xlu0 0
        %2855 = vperm.xlu0 %2854, %v1954
        %v2856 = vpop.permute.xlu0 %2855
        %2859 = vset.pattern.permute.xlu0 0
        %2860 = vperm.xlu0 %2859, %v1955
        %v2861 = vpop.permute.xlu0 %2860
        %2864 = vset.pattern.permute.xlu0 0
        %2865 = vperm.xlu0 %2864, %v1956
        %v2866 = vpop.permute.xlu0 %2865
        %2869 = vset.pattern.permute.xlu0 0
        %2870 = vperm.xlu0 %2869, %v1957
        %v2871 = vpop.permute.xlu0 %2870
        %2874 = vset.pattern.permute.xlu0 0
        %2875 = vperm.xlu0 %2874, %v1958
        %v2876 = vpop.permute.xlu0 %2875
        %2879 = vset.pattern.permute.xlu0 0
        %2880 = vperm.xlu0 %2879, %v1959
        %v2881 = vpop.permute.xlu0 %2880
        %2884 = vset.pattern.permute.xlu0 0
        %2885 = vperm.xlu0 %2884, %v1960
        %v2886 = vpop.permute.xlu0 %2885
        %2889 = vset.pattern.permute.xlu0 0
        %2890 = vperm.xlu0 %2889, %v1961
        %v2891 = vpop.permute.xlu0 %2890
        %2894 = vset.pattern.permute.xlu0 0
        %2895 = vperm.xlu0 %2894, %v1962
        %v2896 = vpop.permute.xlu0 %2895
        %2899 = vset.pattern.permute.xlu0 0
        %2900 = vperm.xlu0 %2899, %v1963
        %v2901 = vpop.permute.xlu0 %2900
        %2904 = vset.pattern.permute.xlu0 0
        %2905 = vperm.xlu0 %2904, %v1964
        %v2906 = vpop.permute.xlu0 %2905
        %2909 = vset.pattern.permute.xlu0 0
        %2910 = vperm.xlu0 %2909, %v1965
        %v2911 = vpop.permute.xlu0 %2910
        %2914 = vset.pattern.permute.xlu0 0
        %2915 = vperm.xlu0 %2914, %v1966
        %v2916 = vpop.permute.xlu0 %2915
        %2919 = vset.pattern.permute.xlu0 0
        %2920 = vperm.xlu0 %2919, %v1967
        %v2921 = vpop.permute.xlu0 %2920
        %2924 = vset.pattern.permute.xlu0 0
        %2925 = vperm.xlu0 %2924, %v1968
        %v2926 = vpop.permute.xlu0 %2925
        %2929 = vset.pattern.permute.xlu0 0
        %2930 = vperm.xlu0 %2929, %v1969
        %v2931 = vpop.permute.xlu0 %2930
        %2934 = vset.pattern.permute.xlu0 0
        %2935 = vperm.xlu0 %2934, %v1970
        %v2936 = vpop.permute.xlu0 %2935
        %2939 = vset.pattern.permute.xlu0 0
        %2940 = vperm.xlu0 %2939, %v1971
        %v2941 = vpop.permute.xlu0 %2940
        %2944 = vset.pattern.permute.xlu0 0
        %2945 = vperm.xlu0 %2944, %v1972
        %v2946 = vpop.permute.xlu0 %2945
        %2949 = vset.pattern.permute.xlu0 0
        %2950 = vperm.xlu0 %2949, %v1973
        %v2951 = vpop.permute.xlu0 %2950
        %2954 = vset.pattern.permute.xlu0 0
        %2955 = vperm.xlu0 %2954, %v1974
        %v2956 = vpop.permute.xlu0 %2955
        %2959 = vset.pattern.permute.xlu0 0
        %2960 = vperm.xlu0 %2959, %v1975
        %v2961 = vpop.permute.xlu0 %2960
        %2964 = vset.pattern.permute.xlu0 0
        %2965 = vperm.xlu0 %2964, %v1976
        %v2966 = vpop.permute.xlu0 %2965
        %2969 = vset.pattern.permute.xlu0 0
        %2970 = vperm.xlu0 %2969, %v1977
        %v2971 = vpop.permute.xlu0 %2970
        %2974 = vset.pattern.permute.xlu0 0
        %2975 = vperm.xlu0 %2974, %v1978
        %v2976 = vpop.permute.xlu0 %2975
        %2979 = vset.pattern.permute.xlu0 0
        %2980 = vperm.xlu0 %2979, %v1979
        %v2981 = vpop.permute.xlu0 %2980
        %2984 = vset.pattern.permute.xlu0 0
        %2985 = vperm.xlu0 %2984, %v1980
        %v2986 = vpop.permute.xlu0 %2985
        %2989 = vset.pattern.permute.xlu0 0
        %2990 = vperm.xlu0 %2989, %v1981
        %v2991 = vpop.permute.xlu0 %2990
        %2994 = vset.pattern.permute.xlu0 0
        %2995 = vperm.xlu0 %2994, %v1982
        %v2996 = vpop.permute.xlu0 %2995
        %2999 = vset.pattern.permute.xlu0 0
        %3000 = vperm.xlu0 %2999, %v1983
        %v3001 = vpop.permute.xlu0 %3000
        %3004 = vset.pattern.permute.xlu0 0
        %3005 = vperm.xlu0 %3004, %v1984
        %v3006 = vpop.permute.xlu0 %3005
        %3009 = vset.pattern.permute.xlu0 0
        %3010 = vperm.xlu0 %3009, %v1985
        %v3011 = vpop.permute.xlu0 %3010
        %3014 = vset.pattern.permute.xlu0 0
        %3015 = vperm.xlu0 %3014, %v1986
        %v3016 = vpop.permute.xlu0 %3015
        %3019 = vset.pattern.permute.xlu0 0
        %3020 = vperm.xlu0 %3019, %v1987
        %v3021 = vpop.permute.xlu0 %3020
        %3024 = vset.pattern.permute.xlu0 0
        %3025 = vperm.xlu0 %3024, %v1988
        %v3026 = vpop.permute.xlu0 %3025
        %3029 = vset.pattern.permute.xlu0 0
        %3030 = vperm.xlu0 %3029, %v1989
        %v3031 = vpop.permute.xlu0 %3030
        %3034 = vset.pattern.permute.xlu0 0
        %3035 = vperm.xlu0 %3034, %v1990
        %v3036 = vpop.permute.xlu0 %3035
        %3039 = vset.pattern.permute.xlu0 0
        %3040 = vperm.xlu0 %3039, %v1991
        %v3041 = vpop.permute.xlu0 %3040
        %3044 = vset.pattern.permute.xlu0 0
        %3045 = vperm.xlu0 %3044, %v1992
        %v3046 = vpop.permute.xlu0 %3045
        %3049 = vset.pattern.permute.xlu0 0
        %3050 = vperm.xlu0 %3049, %v1993
        %v3051 = vpop.permute.xlu0 %3050
        %3054 = vset.pattern.permute.xlu0 0
        %3055 = vperm.xlu0 %3054, %v1994
        %v3056 = vpop.permute.xlu0 %3055
        %3059 = vset.pattern.permute.xlu0 0
        %3060 = vperm.xlu0 %3059, %v1995
        %v3061 = vpop.permute.xlu0 %3060
        %3064 = vset.pattern.permute.xlu0 0
        %3065 = vperm.xlu0 %3064, %v1996
        %v3066 = vpop.permute.xlu0 %3065
        %3069 = vset.pattern.permute.xlu0 0
        %3070 = vperm.xlu0 %3069, %v1997
        %v3071 = vpop.permute.xlu0 %3070
        %3074 = vset.pattern.permute.xlu0 0
        %3075 = vperm.xlu0 %3074, %v1998
        %v3076 = vpop.permute.xlu0 %3075
        %3079 = vset.pattern.permute.xlu0 0
        %3080 = vperm.xlu0 %3079, %v1999
        %v3081 = vpop.permute.xlu0 %3080
        %3084 = vset.pattern.permute.xlu0 0
        %3085 = vperm.xlu0 %3084, %v2000
        %v3086 = vpop.permute.xlu0 %3085
        %3089 = vset.pattern.permute.xlu0 0
        %3090 = vperm.xlu0 %3089, %v2001
        %v3091 = vpop.permute.xlu0 %3090
        %3094 = vset.pattern.permute.xlu0 0
        %3095 = vperm.xlu0 %3094, %v2002
        %v3096 = vpop.permute.xlu0 %3095
        %3099 = vset.pattern.permute.xlu0 0
        %3100 = vperm.xlu0 %3099, %v2003
        %v3101 = vpop.permute.xlu0 %3100
        %3104 = vset.pattern.permute.xlu0 0
        %3105 = vperm.xlu0 %3104, %v2004
        %v3106 = vpop.permute.xlu0 %3105
        %3109 = vset.pattern.permute.xlu0 0
        %3110 = vperm.xlu0 %3109, %v2005
        %v3111 = vpop.permute.xlu0 %3110
        %3114 = vset.pattern.permute.xlu0 0
        %3115 = vperm.xlu0 %3114, %v2006
        %v3116 = vpop.permute.xlu0 %3115
        %3119 = vset.pattern.permute.xlu0 0
        %3120 = vperm.xlu0 %3119, %v2007
        %v3121 = vpop.permute.xlu0 %3120
        %3124 = vset.pattern.permute.xlu0 0
        %3125 = vperm.xlu0 %3124, %v2008
        %v3126 = vpop.permute.xlu0 %3125
        %3129 = vset.pattern.permute.xlu0 0
        %3130 = vperm.xlu0 %3129, %v2009
        %v3131 = vpop.permute.xlu0 %3130
        %3134 = vset.pattern.permute.xlu0 0
        %3135 = vperm.xlu0 %3134, %v2010
        %v3136 = vpop.permute.xlu0 %3135
        %3139 = vset.pattern.permute.xlu0 0
        %3140 = vperm.xlu0 %3139, %v2011
        %v3141 = vpop.permute.xlu0 %3140
        %3144 = vset.pattern.permute.xlu0 0
        %3145 = vperm.xlu0 %3144, %v2012
        %v3146 = vpop.permute.xlu0 %3145
        %3149 = vset.pattern.permute.xlu0 0
        %3150 = vperm.xlu0 %3149, %v2013
        %v3151 = vpop.permute.xlu0 %3150
        %3154 = vset.pattern.permute.xlu0 0
        %3155 = vperm.xlu0 %3154, %v2014
        %v3156 = vpop.permute.xlu0 %3155
        %3159 = vset.pattern.permute.xlu0 0
        %3160 = vperm.xlu0 %3159, %v2015
        %v3161 = vpop.permute.xlu0 %3160
        %3164 = vset.pattern.permute.xlu0 0
        %3165 = vperm.xlu0 %3164, %v2016
        %v3166 = vpop.permute.xlu0 %3165
        %3169 = vset.pattern.permute.xlu0 0
        %3170 = vperm.xlu0 %3169, %v2017
        %v3171 = vpop.permute.xlu0 %3170
        %3174 = vset.pattern.permute.xlu0 0
        %3175 = vperm.xlu0 %3174, %v2018
        %v3176 = vpop.permute.xlu0 %3175
        %3179 = vset.pattern.permute.xlu0 0
        %3180 = vperm.xlu0 %3179, %v2019
        %v3181 = vpop.permute.xlu0 %3180
        %3184 = vset.pattern.permute.xlu0 0
        %3185 = vperm.xlu0 %3184, %v2020
        %v3186 = vpop.permute.xlu0 %3185
        %3189 = vset.pattern.permute.xlu0 0
        %3190 = vperm.xlu0 %3189, %v2021
        %v3191 = vpop.permute.xlu0 %3190
        %3194 = vset.pattern.permute.xlu0 0
        %3195 = vperm.xlu0 %3194, %v2022
        %v3196 = vpop.permute.xlu0 %3195
        %3199 = vset.pattern.permute.xlu0 0
        %3200 = vperm.xlu0 %3199, %v2023
        %v3201 = vpop.permute.xlu0 %3200
        %3204 = vset.pattern.permute.xlu0 0
        %3205 = vperm.xlu0 %3204, %v2024
        %v3206 = vpop.permute.xlu0 %3205
        %v3208 = vadd.f32 %v2571, %v2756
        %v3209 = vadd.f32 %v2572, %v2756
        %v3210 = vadd.f32 %v2573, %v2761
        %v3211 = vadd.f32 %v2574, %v2761
        %v3212 = vadd.f32 %v2575, %v2766
        %v3213 = vadd.f32 %v2576, %v2766
        %v3214 = vadd.f32 %v2577, %v2771
        %v3215 = vadd.f32 %v2578, %v2771
        %v3216 = vadd.f32 %v2579, %v2776
        %v3217 = vadd.f32 %v2580, %v2776
        %v3218 = vadd.f32 %v2581, %v2781
        %v3219 = vadd.f32 %v2582, %v2781
        %v3220 = vadd.f32 %v2583, %v2786
        %v3221 = vadd.f32 %v2584, %v2786
        %v3222 = vadd.f32 %v2585, %v2791
        %v3223 = vadd.f32 %v2586, %v2791
        %v3224 = vadd.f32 %v2587, %v2796
        %v3225 = vadd.f32 %v2588, %v2796
        %v3226 = vadd.f32 %v2589, %v2801
        %v3227 = vadd.f32 %v2590, %v2801
        %v3228 = vadd.f32 %v2591, %v2806
        %v3229 = vadd.f32 %v2592, %v2806
        %v3230 = vadd.f32 %v2593, %v2811
        %v3231 = vadd.f32 %v2594, %v2811
        %v3232 = vadd.f32 %v2595, %v2816
        %v3233 = vadd.f32 %v2596, %v2816
        %v3234 = vadd.f32 %v2597, %v2821
        %v3235 = vadd.f32 %v2598, %v2821
        %v3236 = vadd.f32 %v2599, %v2826
        %v3237 = vadd.f32 %v2600, %v2826
        %v3238 = vadd.f32 %v2601, %v2831
        %v3239 = vadd.f32 %v2602, %v2831
        %v3240 = vadd.f32 %v2603, %v2836
        %v3241 = vadd.f32 %v2604, %v2836
        %v3242 = vadd.f32 %v2605, %v2841
        %v3243 = vadd.f32 %v2606, %v2841
        %v3244 = vadd.f32 %v2607, %v2846
        %v3245 = vadd.f32 %v2608, %v2846
        %v3246 = vadd.f32 %v2609, %v2851
        %v3247 = vadd.f32 %v2610, %v2851
        %v3248 = vadd.f32 %v2611, %v2856
        %v3249 = vadd.f32 %v2612, %v2856
        %v3250 = vadd.f32 %v2613, %v2861
        %v3251 = vadd.f32 %v2614, %v2861
        %v3252 = vadd.f32 %v2615, %v2866
        %v3253 = vadd.f32 %v2616, %v2866
        %v3254 = vadd.f32 %v2617, %v2871
        %v3255 = vadd.f32 %v2618, %v2871
        %v3256 = vadd.f32 %v2619, %v2876
        %v3257 = vadd.f32 %v2620, %v2876
        %v3258 = vadd.f32 %v2621, %v2881
        %v3259 = vadd.f32 %v2622, %v2881
        %v3260 = vadd.f32 %v2623, %v2886
        %v3261 = vadd.f32 %v2624, %v2886
        %v3262 = vadd.f32 %v2625, %v2891
        %v3263 = vadd.f32 %v2626, %v2891
        %v3264 = vadd.f32 %v2627, %v2896
        %v3265 = vadd.f32 %v2628, %v2896
        %v3266 = vadd.f32 %v2629, %v2901
        %v3267 = vadd.f32 %v2630, %v2901
        %v3268 = vadd.f32 %v2631, %v2906
        %v3269 = vadd.f32 %v2632, %v2906
        %v3270 = vadd.f32 %v2633, %v2911
        %v3271 = vadd.f32 %v2634, %v2911
        %v3272 = vadd.f32 %v2635, %v2916
        %v3273 = vadd.f32 %v2636, %v2916
        %v3274 = vadd.f32 %v2637, %v2921
        %v3275 = vadd.f32 %v2638, %v2921
        %v3276 = vadd.f32 %v2639, %v2926
        %v3277 = vadd.f32 %v2640, %v2926
        %v3278 = vadd.f32 %v2641, %v2931
        %v3279 = vadd.f32 %v2642, %v2931
        %v3280 = vadd.f32 %v2643, %v2936
        %v3281 = vadd.f32 %v2644, %v2936
        %v3282 = vadd.f32 %v2645, %v2941
        %v3283 = vadd.f32 %v2646, %v2941
        %v3284 = vadd.f32 %v2647, %v2946
        %v3285 = vadd.f32 %v2648, %v2946
        %v3286 = vadd.f32 %v2649, %v2951
        %v3287 = vadd.f32 %v2650, %v2951
        %v3288 = vadd.f32 %v2651, %v2956
        %v3289 = vadd.f32 %v2652, %v2956
        %v3290 = vadd.f32 %v2653, %v2961
        %v3291 = vadd.f32 %v2654, %v2961
        %v3292 = vadd.f32 %v2655, %v2966
        %v3293 = vadd.f32 %v2656, %v2966
        %v3294 = vadd.f32 %v2657, %v2971
        %v3295 = vadd.f32 %v2658, %v2971
        %v3296 = vadd.f32 %v2659, %v2976
        %v3297 = vadd.f32 %v2660, %v2976
        %v3298 = vadd.f32 %v2661, %v2981
        %v3299 = vadd.f32 %v2662, %v2981
        %v3300 = vadd.f32 %v2663, %v2986
        %v3301 = vadd.f32 %v2664, %v2986
        %v3302 = vadd.f32 %v2665, %v2991
        %v3303 = vadd.f32 %v2666, %v2991
        %v3304 = vadd.f32 %v2667, %v2996
        %v3305 = vadd.f32 %v2668, %v2996
        %v3306 = vadd.f32 %v2669, %v3001
        %v3307 = vadd.f32 %v2670, %v3001
        %v3308 = vadd.f32 %v2671, %v3006
        %v3309 = vadd.f32 %v2672, %v3006
        %v3310 = vadd.f32 %v2673, %v3011
        %v3311 = vadd.f32 %v2674, %v3011
        %v3312 = vadd.f32 %v2675, %v3016
        %v3313 = vadd.f32 %v2676, %v3016
        %v3314 = vadd.f32 %v2677, %v3021
        %v3315 = vadd.f32 %v2678, %v3021
        %v3316 = vadd.f32 %v2679, %v3026
        %v3317 = vadd.f32 %v2680, %v3026
        %v3318 = vadd.f32 %v2681, %v3031
        %v3319 = vadd.f32 %v2682, %v3031
        %v3320 = vadd.f32 %v2683, %v3036
        %v3321 = vadd.f32 %v2684, %v3036
        %v3322 = vadd.f32 %v2685, %v3041
        %v3323 = vadd.f32 %v2686, %v3041
        %v3324 = vadd.f32 %v2687, %v3046
        %v3325 = vadd.f32 %v2688, %v3046
        %v3326 = vadd.f32 %v2689, %v3051
        %v3327 = vadd.f32 %v2690, %v3051
        %v3328 = vadd.f32 %v2691, %v3056
        %v3329 = vadd.f32 %v2692, %v3056
        %v3330 = vadd.f32 %v2693, %v3061
        %v3331 = vadd.f32 %v2694, %v3061
        %v3332 = vadd.f32 %v2695, %v3066
        %v3333 = vadd.f32 %v2696, %v3066
        %v3334 = vadd.f32 %v2697, %v3071
        %v3335 = vadd.f32 %v2698, %v3071
        %v3336 = vadd.f32 %v2699, %v3076
        %v3337 = vadd.f32 %v2700, %v3076
        %v3338 = vadd.f32 %v2701, %v3081
        %v3339 = vadd.f32 %v2702, %v3081
        %v3340 = vadd.f32 %v2703, %v3086
        %v3341 = vadd.f32 %v2704, %v3086
        %v3342 = vadd.f32 %v2705, %v3091
        %v3343 = vadd.f32 %v2706, %v3091
        %v3344 = vadd.f32 %v2707, %v3096
        %v3345 = vadd.f32 %v2708, %v3096
        %v3346 = vadd.f32 %v2709, %v3101
        %v3347 = vadd.f32 %v2710, %v3101
        %v3348 = vadd.f32 %v2711, %v3106
        %v3349 = vadd.f32 %v2712, %v3106
        %v3350 = vadd.f32 %v2713, %v3111
        %v3351 = vadd.f32 %v2714, %v3111
        %v3352 = vadd.f32 %v2715, %v3116
        %v3353 = vadd.f32 %v2716, %v3116
        %v3354 = vadd.f32 %v2717, %v3121
        %v3355 = vadd.f32 %v2718, %v3121
        %v3356 = vadd.f32 %v2719, %v3126
        %v3357 = vadd.f32 %v2720, %v3126
        %v3358 = vadd.f32 %v2721, %v3131
        %v3359 = vadd.f32 %v2722, %v3131
        %v3360 = vadd.f32 %v2723, %v3136
        %v3361 = vadd.f32 %v2724, %v3136
        %v3362 = vadd.f32 %v2725, %v3141
        %v3363 = vadd.f32 %v2726, %v3141
        %v3364 = vadd.f32 %v2727, %v3146
        %v3365 = vadd.f32 %v2728, %v3146
        %v3366 = vadd.f32 %v2729, %v3151
        %v3367 = vadd.f32 %v2730, %v3151
        %v3368 = vadd.f32 %v2731, %v3156
        %v3369 = vadd.f32 %v2732, %v3156
        %v3370 = vadd.f32 %v2733, %v3161
        %v3371 = vadd.f32 %v2734, %v3161
        %v3372 = vadd.f32 %v2735, %v3166
        %v3373 = vadd.f32 %v2736, %v3166
        %v3374 = vadd.f32 %v2737, %v3171
        %v3375 = vadd.f32 %v2738, %v3171
        %v3376 = vadd.f32 %v2739, %v3176
        %v3377 = vadd.f32 %v2740, %v3176
        %v3378 = vadd.f32 %v2741, %v3181
        %v3379 = vadd.f32 %v2742, %v3181
        %v3380 = vadd.f32 %v2743, %v3186
        %v3381 = vadd.f32 %v2744, %v3186
        %v3382 = vadd.f32 %v2745, %v3191
        %v3383 = vadd.f32 %v2746, %v3191
        %v3384 = vadd.f32 %v2747, %v3196
        %v3385 = vadd.f32 %v2748, %v3196
        %v3386 = vadd.f32 %v2749, %v3201
        %v3387 = vadd.f32 %v2750, %v3201
        %v3388 = vadd.f32 %v2751, %v3206
        %v3389 = vadd.f32 %v2752, %v3206
        %3390 = vst [vmem:[%s177] sm:$0xff] %v3208
        %3391 = vst.msk [vmem:[%s177 + $0x8] sm:$0xff] %vm384, %v3209
        %3392 = vst [vmem:[%s177 + $0x10] sm:$0xff] %v3210
        %3393 = vst.msk [vmem:[%s177 + $0x18] sm:$0xff] %vm384, %v3211
        %3394 = vst [vmem:[%s177 + $0x20] sm:$0xff] %v3212
        %3395 = vst.msk [vmem:[%s177 + $0x28] sm:$0xff] %vm384, %v3213
        %3396 = vst [vmem:[%s177 + $0x30] sm:$0xff] %v3214
        %3397 = vst.msk [vmem:[%s177 + $0x38] sm:$0xff] %vm384, %v3215
        %3398 = vst [vmem:[%s177 + $0x40] sm:$0xff] %v3216
        %3399 = vst.msk [vmem:[%s177 + $0x48] sm:$0xff] %vm384, %v3217
        %3400 = vst [vmem:[%s177 + $0x50] sm:$0xff] %v3218
        %3401 = vst.msk [vmem:[%s177 + $0x58] sm:$0xff] %vm384, %v3219
        %3402 = vst [vmem:[%s177 + $0x60] sm:$0xff] %v3220
        %3403 = vst.msk [vmem:[%s177 + $0x68] sm:$0xff] %vm384, %v3221
        %3404 = vst [vmem:[%s177 + $0x70] sm:$0xff] %v3222
        %3405 = vst.msk [vmem:[%s177 + $0x78] sm:$0xff] %vm384, %v3223
        %3406 = vst [vmem:[%s177 + $0x80] sm:$0xff] %v3224
        %3407 = vst.msk [vmem:[%s177 + $0x88] sm:$0xff] %vm384, %v3225
        %3408 = vst [vmem:[%s177 + $0x90] sm:$0xff] %v3226
        %3409 = vst.msk [vmem:[%s177 + $0x98] sm:$0xff] %vm384, %v3227
        %3410 = vst [vmem:[%s177 + $0xa0] sm:$0xff] %v3228
        %3411 = vst.msk [vmem:[%s177 + $0xa8] sm:$0xff] %vm384, %v3229
        %3412 = vst [vmem:[%s177 + $0xb0] sm:$0xff] %v3230
        %3413 = vst.msk [vmem:[%s177 + $0xb8] sm:$0xff] %vm384, %v3231
        %3414 = vst [vmem:[%s177 + $0xc0] sm:$0xff] %v3232
        %3415 = vst.msk [vmem:[%s177 + $0xc8] sm:$0xff] %vm384, %v3233
        %3416 = vst [vmem:[%s177 + $0xd0] sm:$0xff] %v3234
        %3417 = vst.msk [vmem:[%s177 + $0xd8] sm:$0xff] %vm384, %v3235
        %3418 = vst [vmem:[%s177 + $0xe0] sm:$0xff] %v3236
        %3419 = vst.msk [vmem:[%s177 + $0xe8] sm:$0xff] %vm384, %v3237
        %3420 = vst [vmem:[%s177 + $0xf0] sm:$0xff] %v3238
        %3421 = vst.msk [vmem:[%s177 + $0xf8] sm:$0xff] %vm384, %v3239
        %3422 = vst [vmem:[%s177 + $0x100] sm:$0xff] %v3240
        %3423 = vst.msk [vmem:[%s177 + $0x108] sm:$0xff] %vm384, %v3241
        %3424 = vst [vmem:[%s177 + $0x110] sm:$0xff] %v3242
        %3425 = vst.msk [vmem:[%s177 + $0x118] sm:$0xff] %vm384, %v3243
        %3426 = vst [vmem:[%s177 + $0x120] sm:$0xff] %v3244
        %3427 = vst.msk [vmem:[%s177 + $0x128] sm:$0xff] %vm384, %v3245
        %3428 = vst [vmem:[%s177 + $0x130] sm:$0xff] %v3246
        %3429 = vst.msk [vmem:[%s177 + $0x138] sm:$0xff] %vm384, %v3247
        %3430 = vst [vmem:[%s177 + $0x140] sm:$0xff] %v3248
        %3431 = vst.msk [vmem:[%s177 + $0x148] sm:$0xff] %vm384, %v3249
        %3432 = vst [vmem:[%s177 + $0x150] sm:$0xff] %v3250
        %3433 = vst.msk [vmem:[%s177 + $0x158] sm:$0xff] %vm384, %v3251
        %3434 = vst [vmem:[%s177 + $0x160] sm:$0xff] %v3252
        %3435 = vst.msk [vmem:[%s177 + $0x168] sm:$0xff] %vm384, %v3253
        %3436 = vst [vmem:[%s177 + $0x170] sm:$0xff] %v3254
        %3437 = vst.msk [vmem:[%s177 + $0x178] sm:$0xff] %vm384, %v3255
        %3438 = vst [vmem:[%s177 + $0x180] sm:$0xff] %v3256
        %3439 = vst.msk [vmem:[%s177 + $0x188] sm:$0xff] %vm384, %v3257
        %3440 = vst [vmem:[%s177 + $0x190] sm:$0xff] %v3258
        %3441 = vst.msk [vmem:[%s177 + $0x198] sm:$0xff] %vm384, %v3259
        %3442 = vst [vmem:[%s177 + $0x1a0] sm:$0xff] %v3260
        %3443 = vst.msk [vmem:[%s177 + $0x1a8] sm:$0xff] %vm384, %v3261
        %3444 = vst [vmem:[%s177 + $0x1b0] sm:$0xff] %v3262
        %3445 = vst.msk [vmem:[%s177 + $0x1b8] sm:$0xff] %vm384, %v3263
        %3446 = vst [vmem:[%s177 + $0x1c0] sm:$0xff] %v3264
        %3447 = vst.msk [vmem:[%s177 + $0x1c8] sm:$0xff] %vm384, %v3265
        %3448 = vst [vmem:[%s177 + $0x1d0] sm:$0xff] %v3266
        %3449 = vst.msk [vmem:[%s177 + $0x1d8] sm:$0xff] %vm384, %v3267
        %3450 = vst [vmem:[%s177 + $0x1e0] sm:$0xff] %v3268
        %3451 = vst.msk [vmem:[%s177 + $0x1e8] sm:$0xff] %vm384, %v3269
        %3452 = vst [vmem:[%s177 + $0x1f0] sm:$0xff] %v3270
        %3453 = vst.msk [vmem:[%s177 + $0x1f8] sm:$0xff] %vm384, %v3271
        %3454 = vst [vmem:[%s177 + $0x200] sm:$0xff] %v3272
        %3455 = vst.msk [vmem:[%s177 + $0x208] sm:$0xff] %vm384, %v3273
        %3456 = vst [vmem:[%s177 + $0x210] sm:$0xff] %v3274
        %3457 = vst.msk [vmem:[%s177 + $0x218] sm:$0xff] %vm384, %v3275
        %3458 = vst [vmem:[%s177 + $0x220] sm:$0xff] %v3276
        %3459 = vst.msk [vmem:[%s177 + $0x228] sm:$0xff] %vm384, %v3277
        %3460 = vst [vmem:[%s177 + $0x230] sm:$0xff] %v3278
        %3461 = vst.msk [vmem:[%s177 + $0x238] sm:$0xff] %vm384, %v3279
        %3462 = vst [vmem:[%s177 + $0x240] sm:$0xff] %v3280
        %3463 = vst.msk [vmem:[%s177 + $0x248] sm:$0xff] %vm384, %v3281
        %3464 = vst [vmem:[%s177 + $0x250] sm:$0xff] %v3282
        %3465 = vst.msk [vmem:[%s177 + $0x258] sm:$0xff] %vm384, %v3283
        %3466 = vst [vmem:[%s177 + $0x260] sm:$0xff] %v3284
        %3467 = vst.msk [vmem:[%s177 + $0x268] sm:$0xff] %vm384, %v3285
        %3468 = vst [vmem:[%s177 + $0x270] sm:$0xff] %v3286
        %3469 = vst.msk [vmem:[%s177 + $0x278] sm:$0xff] %vm384, %v3287
        %3470 = vst [vmem:[%s177 + $0x280] sm:$0xff] %v3288
        %3471 = vst.msk [vmem:[%s177 + $0x288] sm:$0xff] %vm384, %v3289
        %3472 = vst [vmem:[%s177 + $0x290] sm:$0xff] %v3290
        %3473 = vst.msk [vmem:[%s177 + $0x298] sm:$0xff] %vm384, %v3291
        %3474 = vst [vmem:[%s177 + $0x2a0] sm:$0xff] %v3292
        %3475 = vst.msk [vmem:[%s177 + $0x2a8] sm:$0xff] %vm384, %v3293
        %3476 = vst [vmem:[%s177 + $0x2b0] sm:$0xff] %v3294
        %3477 = vst.msk [vmem:[%s177 + $0x2b8] sm:$0xff] %vm384, %v3295
        %3478 = vst [vmem:[%s177 + $0x2c0] sm:$0xff] %v3296
        %3479 = vst.msk [vmem:[%s177 + $0x2c8] sm:$0xff] %vm384, %v3297
        %3480 = vst [vmem:[%s177 + $0x2d0] sm:$0xff] %v3298
        %3481 = vst.msk [vmem:[%s177 + $0x2d8] sm:$0xff] %vm384, %v3299
        %3482 = vst [vmem:[%s177 + $0x2e0] sm:$0xff] %v3300
        %3483 = vst.msk [vmem:[%s177 + $0x2e8] sm:$0xff] %vm384, %v3301
        %3484 = vst [vmem:[%s177 + $0x2f0] sm:$0xff] %v3302
        %3485 = vst.msk [vmem:[%s177 + $0x2f8] sm:$0xff] %vm384, %v3303
        %3486 = vst [vmem:[%s177 + $0x300] sm:$0xff] %v3304
        %3487 = vst.msk [vmem:[%s177 + $0x308] sm:$0xff] %vm384, %v3305
        %3488 = vst [vmem:[%s177 + $0x310] sm:$0xff] %v3306
        %3489 = vst.msk [vmem:[%s177 + $0x318] sm:$0xff] %vm384, %v3307
        %3490 = vst [vmem:[%s177 + $0x320] sm:$0xff] %v3308
        %3491 = vst.msk [vmem:[%s177 + $0x328] sm:$0xff] %vm384, %v3309
        %3492 = vst [vmem:[%s177 + $0x330] sm:$0xff] %v3310
        %3493 = vst.msk [vmem:[%s177 + $0x338] sm:$0xff] %vm384, %v3311
        %3494 = vst [vmem:[%s177 + $0x340] sm:$0xff] %v3312
        %3495 = vst.msk [vmem:[%s177 + $0x348] sm:$0xff] %vm384, %v3313
        %3496 = vst [vmem:[%s177 + $0x350] sm:$0xff] %v3314
        %3497 = vst.msk [vmem:[%s177 + $0x358] sm:$0xff] %vm384, %v3315
        %3498 = vst [vmem:[%s177 + $0x360] sm:$0xff] %v3316
        %3499 = vst.msk [vmem:[%s177 + $0x368] sm:$0xff] %vm384, %v3317
        %3500 = vst [vmem:[%s177 + $0x370] sm:$0xff] %v3318
        %3501 = vst.msk [vmem:[%s177 + $0x378] sm:$0xff] %vm384, %v3319
        %3502 = vst [vmem:[%s177 + $0x380] sm:$0xff] %v3320
        %3503 = vst.msk [vmem:[%s177 + $0x388] sm:$0xff] %vm384, %v3321
        %3504 = vst [vmem:[%s177 + $0x390] sm:$0xff] %v3322
        %3505 = vst.msk [vmem:[%s177 + $0x398] sm:$0xff] %vm384, %v3323
        %3506 = vst [vmem:[%s177 + $0x3a0] sm:$0xff] %v3324
        %3507 = vst.msk [vmem:[%s177 + $0x3a8] sm:$0xff] %vm384, %v3325
        %3508 = vst [vmem:[%s177 + $0x3b0] sm:$0xff] %v3326
        %3509 = vst.msk [vmem:[%s177 + $0x3b8] sm:$0xff] %vm384, %v3327
        %3510 = vst [vmem:[%s177 + $0x3c0] sm:$0xff] %v3328
        %3511 = vst.msk [vmem:[%s177 + $0x3c8] sm:$0xff] %vm384, %v3329
        %3512 = vst [vmem:[%s177 + $0x3d0] sm:$0xff] %v3330
        %3513 = vst.msk [vmem:[%s177 + $0x3d8] sm:$0xff] %vm384, %v3331
        %3514 = vst [vmem:[%s177 + $0x3e0] sm:$0xff] %v3332
        %3515 = vst.msk [vmem:[%s177 + $0x3e8] sm:$0xff] %vm384, %v3333
        %3516 = vst [vmem:[%s177 + $0x3f0] sm:$0xff] %v3334
        %3517 = vst.msk [vmem:[%s177 + $0x3f8] sm:$0xff] %vm384, %v3335
        %3518 = vst [vmem:[%s177 + $0x400] sm:$0xff] %v3336
        %3519 = vst.msk [vmem:[%s177 + $0x408] sm:$0xff] %vm384, %v3337
        %3520 = vst [vmem:[%s177 + $0x410] sm:$0xff] %v3338
        %3521 = vst.msk [vmem:[%s177 + $0x418] sm:$0xff] %vm384, %v3339
        %3522 = vst [vmem:[%s177 + $0x420] sm:$0xff] %v3340
        %3523 = vst.msk [vmem:[%s177 + $0x428] sm:$0xff] %vm384, %v3341
        %3524 = vst [vmem:[%s177 + $0x430] sm:$0xff] %v3342
        %3525 = vst.msk [vmem:[%s177 + $0x438] sm:$0xff] %vm384, %v3343
        %3526 = vst [vmem:[%s177 + $0x440] sm:$0xff] %v3344
        %3527 = vst.msk [vmem:[%s177 + $0x448] sm:$0xff] %vm384, %v3345
        %3528 = vst [vmem:[%s177 + $0x450] sm:$0xff] %v3346
        %3529 = vst.msk [vmem:[%s177 + $0x458] sm:$0xff] %vm384, %v3347
        %3530 = vst [vmem:[%s177 + $0x460] sm:$0xff] %v3348
        %3531 = vst.msk [vmem:[%s177 + $0x468] sm:$0xff] %vm384, %v3349
        %3532 = vst [vmem:[%s177 + $0x470] sm:$0xff] %v3350
        %3533 = vst.msk [vmem:[%s177 + $0x478] sm:$0xff] %vm384, %v3351
        %3534 = vst [vmem:[%s177 + $0x480] sm:$0xff] %v3352
        %3535 = vst.msk [vmem:[%s177 + $0x488] sm:$0xff] %vm384, %v3353
        %3536 = vst [vmem:[%s177 + $0x490] sm:$0xff] %v3354
        %3537 = vst.msk [vmem:[%s177 + $0x498] sm:$0xff] %vm384, %v3355
        %3538 = vst [vmem:[%s177 + $0x4a0] sm:$0xff] %v3356
        %3539 = vst.msk [vmem:[%s177 + $0x4a8] sm:$0xff] %vm384, %v3357
        %3540 = vst [vmem:[%s177 + $0x4b0] sm:$0xff] %v3358
        %3541 = vst.msk [vmem:[%s177 + $0x4b8] sm:$0xff] %vm384, %v3359
        %3542 = vst [vmem:[%s177 + $0x4c0] sm:$0xff] %v3360
        %3543 = vst.msk [vmem:[%s177 + $0x4c8] sm:$0xff] %vm384, %v3361
        %3544 = vst [vmem:[%s177 + $0x4d0] sm:$0xff] %v3362
        %3545 = vst.msk [vmem:[%s177 + $0x4d8] sm:$0xff] %vm384, %v3363
        %3546 = vst [vmem:[%s177 + $0x4e0] sm:$0xff] %v3364
        %3547 = vst.msk [vmem:[%s177 + $0x4e8] sm:$0xff] %vm384, %v3365
        %3548 = vst [vmem:[%s177 + $0x4f0] sm:$0xff] %v3366
        %3549 = vst.msk [vmem:[%s177 + $0x4f8] sm:$0xff] %vm384, %v3367
        %3550 = vst [vmem:[%s177 + $0x500] sm:$0xff] %v3368
        %3551 = vst.msk [vmem:[%s177 + $0x508] sm:$0xff] %vm384, %v3369
        %3552 = vst [vmem:[%s177 + $0x510] sm:$0xff] %v3370
        %3553 = vst.msk [vmem:[%s177 + $0x518] sm:$0xff] %vm384, %v3371
        %3554 = vst [vmem:[%s177 + $0x520] sm:$0xff] %v3372
        %3555 = vst.msk [vmem:[%s177 + $0x528] sm:$0xff] %vm384, %v3373
        %3556 = vst [vmem:[%s177 + $0x530] sm:$0xff] %v3374
        %3557 = vst.msk [vmem:[%s177 + $0x538] sm:$0xff] %vm384, %v3375
        %3558 = vst [vmem:[%s177 + $0x540] sm:$0xff] %v3376
        %3559 = vst.msk [vmem:[%s177 + $0x548] sm:$0xff] %vm384, %v3377
        %3560 = vst [vmem:[%s177 + $0x550] sm:$0xff] %v3378
        %3561 = vst.msk [vmem:[%s177 + $0x558] sm:$0xff] %vm384, %v3379
        %3562 = vst [vmem:[%s177 + $0x560] sm:$0xff] %v3380
        %3563 = vst.msk [vmem:[%s177 + $0x568] sm:$0xff] %vm384, %v3381
        %3564 = vst [vmem:[%s177 + $0x570] sm:$0xff] %v3382
        %3565 = vst.msk [vmem:[%s177 + $0x578] sm:$0xff] %vm384, %v3383
        %3566 = vst [vmem:[%s177 + $0x580] sm:$0xff] %v3384
        %3567 = vst.msk [vmem:[%s177 + $0x588] sm:$0xff] %vm384, %v3385
        %3568 = vst [vmem:[%s177 + $0x590] sm:$0xff] %v3386
        %3569 = vst.msk [vmem:[%s177 + $0x598] sm:$0xff] %vm384, %v3387
        %3570 = vst [vmem:[%s177 + $0x5a0] sm:$0xff] %v3388
        %3571 = vst.msk [vmem:[%s177 + $0x5a8] sm:$0xff] %vm384, %v3389
        %s3572 = sand.u32 %s90, 1
        %s3573 = sand.u32 %s90, 1
        %s3574 = smul.addr %s3573, 1456
        %s3575 = scalar_lea.vmem [#allocation2], %s3574
        // Predicated region
        $region33: #{tpu_custom_call.1} parent=31 // pred_check
          %p3576 = pneg %p100
        $region34: #{tpu_custom_call.1} parent=31 // pred_check_branch
          %3578 = sbr.rel (%p3576) target = $region36
        $region35: #{tpu_custom_call.1} parent=31 // pred_region
          %s3579 = smul.u32 91, %s14
          %s3580 = ssub.s32 363, %s3579
          %p3581 = scmp.lt.s32.totalorder %s3580, 91
          %s3582 = scalar_select %p3581, %s3580, 91
          %s3583 = smul.u32 128, %s3582
          %s3584 = smul.u32 %s3583, 2
          %p3585 = scmp.ne.s32.totalorder 0, %s3584
          %s3586 = smul.addr %s3579, 2
          %s3587 = smul.addr %s3586, 8
          %s3588 = scalar_lea.vmem %s3, %s3587
          // Predicated region
          $region37: #{tpu_custom_call.1} parent=35 // pred_check
            %p3589 = pneg %p3585
          $region38: #{tpu_custom_call.1} parent=35 // pred_check_branch
            %3591 = sbr.rel (%p3589) target = $region40
          $region39: #{tpu_custom_call.1} parent=35 // pred_region
            // Predicated region
            $region41: #{tpu_custom_call.1} parent=39 // pred_check
              _
            $region42: #{tpu_custom_call.1} parent=39 // pred_check_branch
              %3593 = sbr.rel (0) target = $region44
            $region43: #{tpu_custom_call.1} parent=39 // pred_region
              %s3594 = sshrl.u32 %s3582, 5
              // While loop
              $region45: #{tpu_custom_call.1} parent=43 // loop_pre_header
                _
              $region46: #{tpu_custom_call.1} parent=43 // loop_header
                %s3596 = sphi 0, %s3598
                %p3597 = scmp.ge.s32.totalorder %s3596, %s3594
                %s3601 = sphi 0, %s3734
                %s3602 = sphi %s3575, %s3737
                %s3603 = sphi %s3588, %s3738
              $region47: #{tpu_custom_call.1} parent=43 // loop_header_branch
                %3600 = sbr.rel (%p3597) target = $region51
              $region48: #{tpu_custom_call.1} parent=43 // loop_body
                %v3604 = vld [vmem:[%s3602] sm:$0xff]
                %3605 = vst [vmem:[%s3603] sm:$0xff] %v3604
                %v3606 = vld [vmem:[%s3602 + $0x10] sm:$0xff]
                %3607 = vst [vmem:[%s3603 + $0x10] sm:$0xff] %v3606
                %v3608 = vld [vmem:[%s3602 + $0x20] sm:$0xff]
                %3609 = vst [vmem:[%s3603 + $0x20] sm:$0xff] %v3608
                %v3610 = vld [vmem:[%s3602 + $0x30] sm:$0xff]
                %3611 = vst [vmem:[%s3603 + $0x30] sm:$0xff] %v3610
                %v3612 = vld [vmem:[%s3602 + $0x40] sm:$0xff]
                %3613 = vst [vmem:[%s3603 + $0x40] sm:$0xff] %v3612
                %v3614 = vld [vmem:[%s3602 + $0x50] sm:$0xff]
                %3615 = vst [vmem:[%s3603 + $0x50] sm:$0xff] %v3614
                %v3616 = vld [vmem:[%s3602 + $0x60] sm:$0xff]
                %3617 = vst [vmem:[%s3603 + $0x60] sm:$0xff] %v3616
                %v3618 = vld [vmem:[%s3602 + $0x70] sm:$0xff]
                %3619 = vst [vmem:[%s3603 + $0x70] sm:$0xff] %v3618
                %v3620 = vld [vmem:[%s3602 + $0x80] sm:$0xff]
                %3621 = vst [vmem:[%s3603 + $0x80] sm:$0xff] %v3620
                %v3622 = vld [vmem:[%s3602 + $0x90] sm:$0xff]
                %3623 = vst [vmem:[%s3603 + $0x90] sm:$0xff] %v3622
                %v3624 = vld [vmem:[%s3602 + $0xa0] sm:$0xff]
                %3625 = vst [vmem:[%s3603 + $0xa0] sm:$0xff] %v3624
                %v3626 = vld [vmem:[%s3602 + $0xb0] sm:$0xff]
                %3627 = vst [vmem:[%s3603 + $0xb0] sm:$0xff] %v3626
                %v3628 = vld [vmem:[%s3602 + $0xc0] sm:$0xff]
                %3629 = vst [vmem:[%s3603 + $0xc0] sm:$0xff] %v3628
                %v3630 = vld [vmem:[%s3602 + $0xd0] sm:$0xff]
                %3631 = vst [vmem:[%s3603 + $0xd0] sm:$0xff] %v3630
                %v3632 = vld [vmem:[%s3602 + $0xe0] sm:$0xff]
                %3633 = vst [vmem:[%s3603 + $0xe0] sm:$0xff] %v3632
                %v3634 = vld [vmem:[%s3602 + $0xf0] sm:$0xff]
                %3635 = vst [vmem:[%s3603 + $0xf0] sm:$0xff] %v3634
                %v3636 = vld [vmem:[%s3602 + $0x100] sm:$0xff]
                %3637 = vst [vmem:[%s3603 + $0x100] sm:$0xff] %v3636
                %v3638 = vld [vmem:[%s3602 + $0x110] sm:$0xff]
                %3639 = vst [vmem:[%s3603 + $0x110] sm:$0xff] %v3638
                %v3640 = vld [vmem:[%s3602 + $0x120] sm:$0xff]
                %3641 = vst [vmem:[%s3603 + $0x120] sm:$0xff] %v3640
                %v3642 = vld [vmem:[%s3602 + $0x130] sm:$0xff]
                %3643 = vst [vmem:[%s3603 + $0x130] sm:$0xff] %v3642
                %v3644 = vld [vmem:[%s3602 + $0x140] sm:$0xff]
                %3645 = vst [vmem:[%s3603 + $0x140] sm:$0xff] %v3644
                %v3646 = vld [vmem:[%s3602 + $0x150] sm:$0xff]
                %3647 = vst [vmem:[%s3603 + $0x150] sm:$0xff] %v3646
                %v3648 = vld [vmem:[%s3602 + $0x160] sm:$0xff]
                %3649 = vst [vmem:[%s3603 + $0x160] sm:$0xff] %v3648
                %v3650 = vld [vmem:[%s3602 + $0x170] sm:$0xff]
                %3651 = vst [vmem:[%s3603 + $0x170] sm:$0xff] %v3650
                %v3652 = vld [vmem:[%s3602 + $0x180] sm:$0xff]
                %3653 = vst [vmem:[%s3603 + $0x180] sm:$0xff] %v3652
                %v3654 = vld [vmem:[%s3602 + $0x190] sm:$0xff]
                %3655 = vst [vmem:[%s3603 + $0x190] sm:$0xff] %v3654
                %v3656 = vld [vmem:[%s3602 + $0x1a0] sm:$0xff]
                %3657 = vst [vmem:[%s3603 + $0x1a0] sm:$0xff] %v3656
                %v3658 = vld [vmem:[%s3602 + $0x1b0] sm:$0xff]
                %3659 = vst [vmem:[%s3603 + $0x1b0] sm:$0xff] %v3658
                %v3660 = vld [vmem:[%s3602 + $0x1c0] sm:$0xff]
                %3661 = vst [vmem:[%s3603 + $0x1c0] sm:$0xff] %v3660
                %v3662 = vld [vmem:[%s3602 + $0x1d0] sm:$0xff]
                %3663 = vst [vmem:[%s3603 + $0x1d0] sm:$0xff] %v3662
                %v3664 = vld [vmem:[%s3602 + $0x1e0] sm:$0xff]
                %3665 = vst [vmem:[%s3603 + $0x1e0] sm:$0xff] %v3664
                %v3666 = vld [vmem:[%s3602 + $0x1f0] sm:$0xff]
                %3667 = vst [vmem:[%s3603 + $0x1f0] sm:$0xff] %v3666
                %v3668 = vld [vmem:[%s3602 + $0x8] sm:$0xff]
                %3669 = vst [vmem:[%s3603 + $0x8] sm:$0xff] %v3668
                %v3670 = vld [vmem:[%s3602 + $0x18] sm:$0xff]
                %3671 = vst [vmem:[%s3603 + $0x18] sm:$0xff] %v3670
                %v3672 = vld [vmem:[%s3602 + $0x28] sm:$0xff]
                %3673 = vst [vmem:[%s3603 + $0x28] sm:$0xff] %v3672
                %v3674 = vld [vmem:[%s3602 + $0x38] sm:$0xff]
                %3675 = vst [vmem:[%s3603 + $0x38] sm:$0xff] %v3674
                %v3676 = vld [vmem:[%s3602 + $0x48] sm:$0xff]
                %3677 = vst [vmem:[%s3603 + $0x48] sm:$0xff] %v3676
                %v3678 = vld [vmem:[%s3602 + $0x58] sm:$0xff]
                %3679 = vst [vmem:[%s3603 + $0x58] sm:$0xff] %v3678
                %v3680 = vld [vmem:[%s3602 + $0x68] sm:$0xff]
                %3681 = vst [vmem:[%s3603 + $0x68] sm:$0xff] %v3680
                %v3682 = vld [vmem:[%s3602 + $0x78] sm:$0xff]
                %3683 = vst [vmem:[%s3603 + $0x78] sm:$0xff] %v3682
                %v3684 = vld [vmem:[%s3602 + $0x88] sm:$0xff]
                %3685 = vst [vmem:[%s3603 + $0x88] sm:$0xff] %v3684
                %v3686 = vld [vmem:[%s3602 + $0x98] sm:$0xff]
                %3687 = vst [vmem:[%s3603 + $0x98] sm:$0xff] %v3686
                %v3688 = vld [vmem:[%s3602 + $0xa8] sm:$0xff]
                %3689 = vst [vmem:[%s3603 + $0xa8] sm:$0xff] %v3688
                %v3690 = vld [vmem:[%s3602 + $0xb8] sm:$0xff]
                %3691 = vst [vmem:[%s3603 + $0xb8] sm:$0xff] %v3690
                %v3692 = vld [vmem:[%s3602 + $0xc8] sm:$0xff]
                %3693 = vst [vmem:[%s3603 + $0xc8] sm:$0xff] %v3692
                %v3694 = vld [vmem:[%s3602 + $0xd8] sm:$0xff]
                %3695 = vst [vmem:[%s3603 + $0xd8] sm:$0xff] %v3694
                %v3696 = vld [vmem:[%s3602 + $0xe8] sm:$0xff]
                %3697 = vst [vmem:[%s3603 + $0xe8] sm:$0xff] %v3696
                %v3698 = vld [vmem:[%s3602 + $0xf8] sm:$0xff]
                %3699 = vst [vmem:[%s3603 + $0xf8] sm:$0xff] %v3698
                %v3700 = vld [vmem:[%s3602 + $0x108] sm:$0xff]
                %3701 = vst [vmem:[%s3603 + $0x108] sm:$0xff] %v3700
                %v3702 = vld [vmem:[%s3602 + $0x118] sm:$0xff]
                %3703 = vst [vmem:[%s3603 + $0x118] sm:$0xff] %v3702
                %v3704 = vld [vmem:[%s3602 + $0x128] sm:$0xff]
                %3705 = vst [vmem:[%s3603 + $0x128] sm:$0xff] %v3704
                %v3706 = vld [vmem:[%s3602 + $0x138] sm:$0xff]
                %3707 = vst [vmem:[%s3603 + $0x138] sm:$0xff] %v3706
                %v3708 = vld [vmem:[%s3602 + $0x148] sm:$0xff]
                %3709 = vst [vmem:[%s3603 + $0x148] sm:$0xff] %v3708
                %v3710 = vld [vmem:[%s3602 + $0x158] sm:$0xff]
                %3711 = vst [vmem:[%s3603 + $0x158] sm:$0xff] %v3710
                %v3712 = vld [vmem:[%s3602 + $0x168] sm:$0xff]
                %3713 = vst [vmem:[%s3603 + $0x168] sm:$0xff] %v3712
                %v3714 = vld [vmem:[%s3602 + $0x178] sm:$0xff]
                %3715 = vst [vmem:[%s3603 + $0x178] sm:$0xff] %v3714
                %v3716 = vld [vmem:[%s3602 + $0x188] sm:$0xff]
                %3717 = vst [vmem:[%s3603 + $0x188] sm:$0xff] %v3716
                %v3718 = vld [vmem:[%s3602 + $0x198] sm:$0xff]
                %3719 = vst [vmem:[%s3603 + $0x198] sm:$0xff] %v3718
                %v3720 = vld [vmem:[%s3602 + $0x1a8] sm:$0xff]
                %3721 = vst [vmem:[%s3603 + $0x1a8] sm:$0xff] %v3720
                %v3722 = vld [vmem:[%s3602 + $0x1b8] sm:$0xff]
                %3723 = vst [vmem:[%s3603 + $0x1b8] sm:$0xff] %v3722
                %v3724 = vld [vmem:[%s3602 + $0x1c8] sm:$0xff]
                %3725 = vst [vmem:[%s3603 + $0x1c8] sm:$0xff] %v3724
                %v3726 = vld [vmem:[%s3602 + $0x1d8] sm:$0xff]
                %3727 = vst [vmem:[%s3603 + $0x1d8] sm:$0xff] %v3726
                %v3728 = vld [vmem:[%s3602 + $0x1e8] sm:$0xff]
                %3729 = vst [vmem:[%s3603 + $0x1e8] sm:$0xff] %v3728
                %v3730 = vld [vmem:[%s3602 + $0x1f8] sm:$0xff]
                %3731 = vst [vmem:[%s3603 + $0x1f8] sm:$0xff] %v3730
                %s3732 = sadd.s32 1, %s3601
                %p3733 = scmp.ge.s32.totalorder %s3732, %s3594
                %s3734 = scalar_select %p3733, 0, %s3732
                %s3735 = smul.u32 %s3734, 512
                %s3736 = smul.u32 %s3734, 512
                %s3737 = scalar_lea.vmem %s3575, %s3735 [#allocation2]
                %s3738 = scalar_lea.vmem %s3588, %s3736
              $region49: #{tpu_custom_call.1} parent=43 // loop_footer
                %s3598 = sadd.s32 %s3596, 1
              $region50: #{tpu_custom_call.1} parent=43 // loop_footer_branch
                %3595 = sbr.rel target = $region46
              $region51: #{tpu_custom_call.1} parent=43 // loop_exit
                _
              %s3739 = sshrl.u32 %s3582, 5
              %s3740 = sand.u32 %s3582, 31
              %s3741 = smul.u32 %s3739, 32
              %s3742 = smul.u32 16, %s3741
              %s3743 = scalar_lea.vmem %s3575, %s3742 [#allocation2]
              %s3744 = smul.u32 16, %s3741
              %s3745 = scalar_lea.vmem %s3588, %s3744
              // While loop
              $region52: #{tpu_custom_call.1} parent=43 // loop_pre_header
                _
              $region53: #{tpu_custom_call.1} parent=43 // loop_header
                %s3747 = sphi 0, %s3749
                %p3748 = scmp.ge.s32.totalorder %s3747, %s3740
                %s3752 = sphi 0, %s3761
                %s3753 = sphi %s3743, %s3764
                %s3754 = sphi %s3745, %s3765
              $region54: #{tpu_custom_call.1} parent=43 // loop_header_branch
                %3751 = sbr.rel (%p3748) target = $region58
              $region55: #{tpu_custom_call.1} parent=43 // loop_body
                %v3755 = vld [vmem:[%s3753] sm:$0xff]
                %3756 = vst [vmem:[%s3754] sm:$0xff] %v3755
                %v3757 = vld [vmem:[%s3753 + $0x8] sm:$0xff]
                %3758 = vst [vmem:[%s3754 + $0x8] sm:$0xff] %v3757
                %s3759 = sadd.s32 1, %s3752
                %p3760 = scmp.ge.s32.totalorder %s3759, %s3740
                %s3761 = scalar_select %p3760, 0, %s3759
                %s3762 = smul.u32 %s3761, 16
                %s3763 = smul.u32 %s3761, 16
                %s3764 = scalar_lea.vmem %s3743, %s3762 [#allocation2]
                %s3765 = scalar_lea.vmem %s3745, %s3763
              $region56: #{tpu_custom_call.1} parent=43 // loop_footer
                %s3749 = sadd.s32 %s3747, 1
              $region57: #{tpu_custom_call.1} parent=43 // loop_footer_branch
                %3746 = sbr.rel target = $region53
              $region58: #{tpu_custom_call.1} parent=43 // loop_exit
                _
            $region44: #{tpu_custom_call.1} parent=39 // pred_fallthru
              _
            // Predicated region
            $region59: #{tpu_custom_call.1} parent=39 // pred_check
              _
            $region60: #{tpu_custom_call.1} parent=39 // pred_check_branch
              %3767 = sbr.rel target = $region62
            $region61: #{tpu_custom_call.1} parent=39 // pred_region
              _
            $region62: #{tpu_custom_call.1} parent=39 // pred_fallthru
              _
          $region40: #{tpu_custom_call.1} parent=35 // pred_fallthru
            _
          %3768 = vnop
        $region36: #{tpu_custom_call.1} parent=31 // pred_fallthru
          _
      $region32: #{tpu_custom_call.1} parent=5 // pred_fallthru
        _
      %p3769 = scmp.le.s32.totalorder 2, %s9
      // Predicated region
      $region63: #{tpu_custom_call.1} parent=5 // pred_check
        %p3770 = pneg %p3769
      $region64: #{tpu_custom_call.1} parent=5 // pred_check_branch
        %3772 = sbr.rel (%p3770) target = $region66
      $region65: #{tpu_custom_call.1} parent=5 // pred_region
        %s3773 = ssub.s32 %s9, 2
        // Predicated region
        $region67: #{tpu_custom_call.1} parent=65 // pred_check
          %p3774 = pneg %p106
        $region68: #{tpu_custom_call.1} parent=65 // pred_check_branch
          %3776 = sbr.rel (%p3774) target = $region70
        $region69: #{tpu_custom_call.1} parent=65 // pred_region
          %s3777 = sand.u32 %s91, 1
          %s3778 = sand.u32 %s91, 1
          %s3779 = smul.addr %s3778, 1456
          %s3780 = scalar_lea.vmem [#allocation2], %s3779
        $region70: #{tpu_custom_call.1} parent=65 // pred_fallthru
          _
      $region66: #{tpu_custom_call.1} parent=5 // pred_fallthru
        _
    $region6: #{tpu_custom_call.1} parent=1 // loop_footer
      %s13 = sadd.s32 1, %s9
    $region7: #{tpu_custom_call.1} parent=1 // loop_footer_branch
      %8 = sbr.rel target = $region3
    $region8: #{tpu_custom_call.1} parent=1 // loop_exit
      _

</llo_original>
